<compile_context>
chip_gen: v7x
topology: tpu7x:2x2x1
jax: 0.10.0
libtpu: 0.0.40
codegen_flags: <defaults>
</compile_context>

<pallas_src>
from functools import partial

import jax
import jax.numpy as jnp
import numpy as np
from jax.experimental import pallas as pl
from jax.experimental.pallas import tpu as pltpu

BIGNET_DIM = 64      # small synthetic width (divisible by group_size); semantics unchanged
LORA_DIM = 32        # custom_lora_dim default
GROUP_SIZE = 16
N_BLOCKS = 6         # CustomBlock count in the Sequential
N_LAYERS = 3         # CustomQLoRALinear per CustomBlock
LN_EPS = 1e-5        # torch.nn.LayerNorm default
WEIGHT_DTYPE = jnp.bfloat16   # bf16 weight storage (native MXU path, half the HBM bytes)


def quant_dequant_4bit(w, group_size=GROUP_SIZE):
    """Mimic CustomLinear4Bit's group-wise 4-bit quantization of the frozen fp32
    weight (codes in [0, 15] vs the per-group absmax, fp16 scale), then dequantize.
    Guards the all-zero group (0/0 -> NaN) case."""
    shape = w.shape
    flat = w.reshape(-1, group_size)
    norm = jnp.max(jnp.abs(flat), axis=-1, keepdims=True)
    denom = jnp.where(norm > 0, 2.0 * norm, 1.0)                    # NaN guard
    q = jnp.round((flat + norm) / denom * 15.0).astype(jnp.int8)    # 4-bit codes 0..15
    norm16 = norm.astype(jnp.float16).astype(jnp.float32)
    deq = (q.astype(jnp.float32) / 15.0) * 2.0 * norm16 - norm16
    return deq.reshape(shape)


def init_params(key):
    """Deterministic parameter construction matching the module's __init__ shapes.
    Weights are kept in the original torch (out, in) layout."""
    d, r = BIGNET_DIM, LORA_DIM
    w = np.zeros((N_BLOCKS, N_LAYERS, d, d), np.float32)    # dequantized base W (out, in)
    bias = np.zeros((N_BLOCKS, N_LAYERS, d), np.float32)    # base bias
    a = np.zeros((N_BLOCKS, N_LAYERS, r, d), np.float32)    # qlora_a weight (lora, in)
    b = np.zeros((N_BLOCKS, N_LAYERS, d, r), np.float32)    # qlora_b weight (out, lora) = zeros
    for blk in range(N_BLOCKS):
        for j in range(N_LAYERS):
            key, k1, k2, k3 = jax.random.split(key, 4)
            bound = 1.0 / np.sqrt(d)                          # torch.nn.Linear default init bound
            w0 = jax.random.uniform(k1, (d, d), jnp.float32, -bound, bound)
            w[blk, j] = np.asarray(quant_dequant_4bit(w0))
            bias[blk, j] = np.asarray(jax.random.uniform(k2, (d,), jnp.float32, -bound, bound))
            a_bound = np.sqrt(6.0 / d)                        # kaiming_uniform_ (a=0) bound
            a[blk, j] = np.asarray(jax.random.uniform(k3, (r, d), jnp.float32, -a_bound, a_bound))
            # custom_qlora_b initialised to zeros -> b stays 0
    ln_w = np.ones((N_BLOCKS - 1, d), np.float32)             # 5 LayerNorms between the 6 blocks
    ln_b = np.zeros((N_BLOCKS - 1, d), np.float32)
    return tuple(jnp.asarray(v) for v in (w, bias, a, b, ln_w, ln_b))


def prepare_params(w, bias, a, b, ln_w, ln_b):
    """One-time parameter prep (outside the per-call jit):
    fold LoRA into the base weight (W_eff = W + B @ A, cast to bf16) and reshape
    bias / LayerNorm params to (.., d, 1) columns for the lane-dense kernel layout."""
    w_eff = (w + jnp.matmul(b, a)).astype(WEIGHT_DTYPE)       # (B, L, out, in) bf16
    bias_col = bias[..., None].astype(jnp.float32)            # (B, L, d, 1)
    lnw_col = ln_w[..., None].astype(jnp.float32)             # (B-1, d, 1)
    lnb_col = ln_b[..., None].astype(jnp.float32)             # (B-1, d, 1)
    return w_eff, bias_col, lnw_col, lnb_col


def _num_row_tiles():
    """One grid step per TensorCore: 2 on v7x (2 TCs/chip), else 1."""
    try:
        kind = jax.devices()[0].device_kind.lower()
    except Exception:
        return 1
    return 2 if "v7" in kind else 1


def bignet_kernel(x_ref, w_ref, b_ref, lnw_ref, lnb_ref, o_ref):
    """One (D, TM) column-slab of the whole network.  All 6 blocks x 3 layers are
    unrolled; folded bf16 weights and LN params stay VMEM-resident across the
    (parallel) row grid.  Activations / elementwise math are fp32; matmuls run
    bf16 x bf16 -> fp32 accumulation.  Batch lives on the 128-wide lane axis."""
    inv_d = 1.0 / BIGNET_DIM
    h = x_ref[...]                                            # (D, TM) fp32
    for blk in range(N_BLOCKS):
        x0 = h
        for j in range(N_LAYERS):
            y = jnp.dot(w_ref[blk, j], h.astype(w_ref.dtype),
                        preferred_element_type=jnp.float32)   # (D, TM) fp32 accum
            y = y + b_ref[blk, j]                             # (D, 1) lane-broadcast bias
            h = jnp.maximum(y, 0.0) if j < N_LAYERS - 1 else y
        h = h + x0                                            # CustomBlock residual add
        if blk < N_BLOCKS - 1:                                # LayerNorm between blocks (5 total)
            # one-pass statistics: two independent XLU reductions over the feature axis
            s1 = jnp.sum(h, axis=0, keepdims=True)            # (1, TM)
            s2 = jnp.sum(h * h, axis=0, keepdims=True)        # (1, TM)
            mean = s1 * inv_d
            var = s2 * inv_d - mean * mean
            inv_std = jax.lax.rsqrt(var + LN_EPS)
            h = (h - mean) * inv_std * lnw_ref[blk] + lnb_ref[blk]
    o_ref[...] = h


@partial(jax.jit, static_argnames=("num_tiles",))
def bignet_forward(x, w_eff, bias_col, lnw_col, lnb_col, *, num_tiles=1):
    n, d = x.shape
    xt = x.astype(jnp.float32).T                              # (D, N): batch on lane axis
    align = num_tiles * 128                                   # lane-dense, tile-aligned rows
    n_pad = pl.cdiv(n, align) * align
    if n_pad != n:
        xt = jnp.pad(xt, ((0, 0), (0, n_pad - n)))
    tm = n_pad // num_tiles                                   # grow tile, not grid steps

    grid_spec = pltpu.PrefetchScalarGridSpec(
        num_scalar_prefetch=0,
        grid=(num_tiles,),                                    # 1 step (v5e/v6e) or 2 (v7x)
        in_specs=[
            pl.BlockSpec((d, tm), lambda i: (0, i)),                      # activation slab
            pl.BlockSpec(w_eff.shape, lambda i: (0, 0, 0, 0)),            # folded weights, resident
            pl.BlockSpec(bias_col.shape, lambda i: (0, 0, 0, 0)),         # biases, resident
            pl.BlockSpec(lnw_col.shape, lambda i: (0, 0, 0)),             # LayerNorm gammas
            pl.BlockSpec(lnb_col.shape, lambda i: (0, 0, 0)),             # LayerNorm betas
        ],
        out_specs=pl.BlockSpec((d, tm), lambda i: (0, i)),
    )
    out_t = pl.pallas_call(
        bignet_kernel,
        out_shape=jax.ShapeDtypeStruct((d, n_pad), jnp.float32),
        grid_spec=grid_spec,
        compiler_params=pltpu.CompilerParams(dimension_semantics=("parallel",)),
    )(xt, w_eff, bias_col, lnw_col, lnb_col)
    return out_t[:, :n].T


def reference_forward(x, w_eff, bias_col, lnw_col, lnb_col):
    """Pure-JAX reference of the forward semantics, precision-matched to the kernel
    (same pre-folded bf16 weights; fp32 elementwise; two-pass LayerNorm)."""
    bias = bias_col[..., 0]
    ln_w = lnw_col[..., 0]
    ln_b = lnb_col[..., 0]
    h = x.astype(jnp.float32)
    for blk in range(N_BLOCKS):
        x0 = h
        for j in range(N_LAYERS):
            y = jnp.dot(h.astype(w_eff.dtype), w_eff[blk, j].T,
                        preferred_element_type=jnp.float32) + bias[blk, j]
            h = jnp.maximum(y, 0.0) if j < N_LAYERS - 1 else y
        h = h + x0
        if blk < N_BLOCKS - 1:
            mean = h.mean(-1, keepdims=True)
            var = jnp.square(h - mean).mean(-1, keepdims=True)
            h = (h - mean) * jax.lax.rsqrt(var + LN_EPS) * ln_w[blk] + ln_b[blk]
    return h


if __name__ == "__main__":
    key = jax.random.PRNGKey(0)
    key, kx = jax.random.split(key)
    N = 256   # two 128-row lane tiles on v7x, one 256-wide tile on v5e/v6e
    x = jax.random.normal(kx, (N, BIGNET_DIM), jnp.float32)

    raw_params = init_params(key)
    params = prepare_params(*raw_params)        # one-time: LoRA fold + layout reshapes
    params = jax.block_until_ready(params)

    num_tiles = _num_row_tiles()
    out = jax.block_until_ready(bignet_forward(x, *params, num_tiles=num_tiles))
    ref = reference_forward(x, *params)
    np.testing.assert_allclose(np.asarray(out), np.asarray(ref), rtol=1e-3, atol=1e-3)
    print("KERNEL_OK")
</pallas_src>

<mosaic_0001>
module attributes {stable_mosaic.version = 11 : i64} {
  func.func @bignet_kernel(%arg0: i32, %arg1: memref<64x256xf32, #tpu.memory_space<vmem>>, %arg2: memref<6x3x64x64xbf16, #tpu.memory_space<vmem>>, %arg3: memref<6x3x64x1xf32, #tpu.memory_space<vmem>>, %arg4: memref<5x64x1xf32, #tpu.memory_space<vmem>>, %arg5: memref<5x64x1xf32, #tpu.memory_space<vmem>>, %arg6: memref<64x256xf32, #tpu.memory_space<vmem>>) attributes {dimension_semantics = [#tpu.dimension_semantics<parallel>], iteration_bounds = array<i64: 1>, scalar_prefetch = 0 : i64, scratch_operands = 0 : i64, tpu.core_type = #tpu.core_type<tc>, window_params = [{transform_indices = @transform_0, window_bounds = array<i64: 64, 256>}, {pipeline_mode = #tpu.pipeline_mode<synchronous>, transform_indices = @transform_1, window_bounds = array<i64: 6, 3, 64, 64>}, {pipeline_mode = #tpu.pipeline_mode<synchronous>, transform_indices = @transform_2, window_bounds = array<i64: 6, 3, 64, 1>}, {pipeline_mode = #tpu.pipeline_mode<synchronous>, transform_indices = @transform_3, window_bounds = array<i64: 5, 64, 1>}, {pipeline_mode = #tpu.pipeline_mode<synchronous>, transform_indices = @transform_4, window_bounds = array<i64: 5, 64, 1>}, {transform_indices = @transform_5, window_bounds = array<i64: 64, 256>}]} {
    %c0 = arith.constant 0 : index
    %c0_0 = arith.constant 0 : index
    %0 = vector.load %arg1[%c0, %c0_0] : memref<64x256xf32, #tpu.memory_space<vmem>>, vector<64x256xf32>
    %c0_1 = arith.constant 0 : index
    %c0_2 = arith.constant 0 : index
    %c0_3 = arith.constant 0 : index
    %c0_4 = arith.constant 0 : index
    %1 = vector.load %arg2[%c0_1, %c0_2, %c0_3, %c0_4] : memref<6x3x64x64xbf16, #tpu.memory_space<vmem>>, vector<1x1x64x64xbf16>
    %2 = vector.shape_cast %1 : vector<1x1x64x64xbf16> to vector<64x64xbf16>
    %3 = arith.truncf %0 : vector<64x256xf32> to vector<64x256xbf16>
    %cst = arith.constant dense<0.000000e+00> : vector<64x256xf32>
    %4 = tpu.matmul %2, %3, %cst {dimension_numbers = #tpu.dot_dimension_numbers<[1], [0], [0], [1], [0, 0, 1, 1], [], []>} : vector<64x64xbf16>, vector<64x256xbf16>, vector<64x256xf32> -> vector<64x256xf32>
    %c0_5 = arith.constant 0 : index
    %c0_6 = arith.constant 0 : index
    %c0_7 = arith.constant 0 : index
    %c0_8 = arith.constant 0 : index
    %5 = vector.load %arg3[%c0_5, %c0_6, %c0_7, %c0_8] : memref<6x3x64x1xf32, #tpu.memory_space<vmem>>, vector<1x1x64x1xf32>
    %6 = vector.shape_cast %5 : vector<1x1x64x1xf32> to vector<64x1xf32>
    %7 = vector.broadcast %6 : vector<64x1xf32> to vector<64x256xf32>
    %8 = arith.addf %4, %7 : vector<64x256xf32>
    %cst_9 = arith.constant 0.000000e+00 : f32
    %9 = vector.broadcast %cst_9 : f32 to vector<64x256xf32>
    %10 = arith.maximumf %8, %9 : vector<64x256xf32>
    %c0_10 = arith.constant 0 : index
    %c1 = arith.constant 1 : index
    %c0_11 = arith.constant 0 : index
    %c0_12 = arith.constant 0 : index
    %11 = vector.load %arg2[%c0_10, %c1, %c0_11, %c0_12] : memref<6x3x64x64xbf16, #tpu.memory_space<vmem>>, vector<1x1x64x64xbf16>
    %12 = vector.shape_cast %11 : vector<1x1x64x64xbf16> to vector<64x64xbf16>
    %13 = arith.truncf %10 : vector<64x256xf32> to vector<64x256xbf16>
    %cst_13 = arith.constant dense<0.000000e+00> : vector<64x256xf32>
    %14 = tpu.matmul %12, %13, %cst_13 {dimension_numbers = #tpu.dot_dimension_numbers<[1], [0], [0], [1], [0, 0, 1, 1], [], []>} : vector<64x64xbf16>, vector<64x256xbf16>, vector<64x256xf32> -> vector<64x256xf32>
    %c0_14 = arith.constant 0 : index
    %c1_15 = arith.constant 1 : index
    %c0_16 = arith.constant 0 : index
    %c0_17 = arith.constant 0 : index
    %15 = vector.load %arg3[%c0_14, %c1_15, %c0_16, %c0_17] : memref<6x3x64x1xf32, #tpu.memory_space<vmem>>, vector<1x1x64x1xf32>
    %16 = vector.shape_cast %15 : vector<1x1x64x1xf32> to vector<64x1xf32>
    %17 = vector.broadcast %16 : vector<64x1xf32> to vector<64x256xf32>
    %18 = arith.addf %14, %17 : vector<64x256xf32>
    %cst_18 = arith.constant 0.000000e+00 : f32
    %19 = vector.broadcast %cst_18 : f32 to vector<64x256xf32>
    %20 = arith.maximumf %18, %19 : vector<64x256xf32>
    %c0_19 = arith.constant 0 : index
    %c2 = arith.constant 2 : index
    %c0_20 = arith.constant 0 : index
    %c0_21 = arith.constant 0 : index
    %21 = vector.load %arg2[%c0_19, %c2, %c0_20, %c0_21] : memref<6x3x64x64xbf16, #tpu.memory_space<vmem>>, vector<1x1x64x64xbf16>
    %22 = vector.shape_cast %21 : vector<1x1x64x64xbf16> to vector<64x64xbf16>
    %23 = arith.truncf %20 : vector<64x256xf32> to vector<64x256xbf16>
    %cst_22 = arith.constant dense<0.000000e+00> : vector<64x256xf32>
    %24 = tpu.matmul %22, %23, %cst_22 {dimension_numbers = #tpu.dot_dimension_numbers<[1], [0], [0], [1], [0, 0, 1, 1], [], []>} : vector<64x64xbf16>, vector<64x256xbf16>, vector<64x256xf32> -> vector<64x256xf32>
    %c0_23 = arith.constant 0 : index
    %c2_24 = arith.constant 2 : index
    %c0_25 = arith.constant 0 : index
    %c0_26 = arith.constant 0 : index
    %25 = vector.load %arg3[%c0_23, %c2_24, %c0_25, %c0_26] : memref<6x3x64x1xf32, #tpu.memory_space<vmem>>, vector<1x1x64x1xf32>
    %26 = vector.shape_cast %25 : vector<1x1x64x1xf32> to vector<64x1xf32>
    %27 = vector.broadcast %26 : vector<64x1xf32> to vector<64x256xf32>
    %28 = arith.addf %24, %27 : vector<64x256xf32>
    %29 = arith.addf %28, %0 : vector<64x256xf32>
    %cst_27 = arith.constant dense<0.000000e+00> : vector<256xf32>
    %30 = vector.multi_reduction <add>, %29, %cst_27 [0] : vector<64x256xf32> to vector<256xf32>
    %31 = vector.shape_cast %30 : vector<256xf32> to vector<1x256xf32>
    %32 = arith.mulf %29, %29 : vector<64x256xf32>
    %cst_28 = arith.constant dense<0.000000e+00> : vector<256xf32>
    %33 = vector.multi_reduction <add>, %32, %cst_28 [0] : vector<64x256xf32> to vector<256xf32>
    %34 = vector.shape_cast %33 : vector<256xf32> to vector<1x256xf32>
    %cst_29 = arith.constant 1.562500e-02 : f32
    %35 = vector.broadcast %cst_29 : f32 to vector<1x256xf32>
    %36 = arith.mulf %31, %35 : vector<1x256xf32>
    %cst_30 = arith.constant 1.562500e-02 : f32
    %37 = vector.broadcast %cst_30 : f32 to vector<1x256xf32>
    %38 = arith.mulf %34, %37 : vector<1x256xf32>
    %39 = arith.mulf %36, %36 : vector<1x256xf32>
    %40 = arith.subf %38, %39 : vector<1x256xf32>
    %cst_31 = arith.constant 9.99999974E-6 : f32
    %41 = vector.broadcast %cst_31 : f32 to vector<1x256xf32>
    %42 = arith.addf %40, %41 : vector<1x256xf32>
    %43 = math.rsqrt %42 : vector<1x256xf32>
    %44 = vector.broadcast %36 : vector<1x256xf32> to vector<64x256xf32>
    %45 = arith.subf %29, %44 : vector<64x256xf32>
    %46 = vector.broadcast %43 : vector<1x256xf32> to vector<64x256xf32>
    %47 = arith.mulf %45, %46 : vector<64x256xf32>
    %c0_32 = arith.constant 0 : index
    %c0_33 = arith.constant 0 : index
    %c0_34 = arith.constant 0 : index
    %48 = vector.load %arg4[%c0_32, %c0_33, %c0_34] : memref<5x64x1xf32, #tpu.memory_space<vmem>>, vector<1x64x1xf32>
    %49 = vector.shape_cast %48 : vector<1x64x1xf32> to vector<64x1xf32>
    %50 = vector.broadcast %49 : vector<64x1xf32> to vector<64x256xf32>
    %51 = arith.mulf %47, %50 : vector<64x256xf32>
    %c0_35 = arith.constant 0 : index
    %c0_36 = arith.constant 0 : index
    %c0_37 = arith.constant 0 : index
    %52 = vector.load %arg5[%c0_35, %c0_36, %c0_37] : memref<5x64x1xf32, #tpu.memory_space<vmem>>, vector<1x64x1xf32>
    %53 = vector.shape_cast %52 : vector<1x64x1xf32> to vector<64x1xf32>
    %54 = vector.broadcast %53 : vector<64x1xf32> to vector<64x256xf32>
    %55 = arith.addf %51, %54 : vector<64x256xf32>
    %c1_38 = arith.constant 1 : index
    %c0_39 = arith.constant 0 : index
    %c0_40 = arith.constant 0 : index
    %c0_41 = arith.constant 0 : index
    %56 = vector.load %arg2[%c1_38, %c0_39, %c0_40, %c0_41] : memref<6x3x64x64xbf16, #tpu.memory_space<vmem>>, vector<1x1x64x64xbf16>
    %57 = vector.shape_cast %56 : vector<1x1x64x64xbf16> to vector<64x64xbf16>
    %58 = arith.truncf %55 : vector<64x256xf32> to vector<64x256xbf16>
    %cst_42 = arith.constant dense<0.000000e+00> : vector<64x256xf32>
    %59 = tpu.matmul %57, %58, %cst_42 {dimension_numbers = #tpu.dot_dimension_numbers<[1], [0], [0], [1], [0, 0, 1, 1], [], []>} : vector<64x64xbf16>, vector<64x256xbf16>, vector<64x256xf32> -> vector<64x256xf32>
    %c1_43 = arith.constant 1 : index
    %c0_44 = arith.constant 0 : index
    %c0_45 = arith.constant 0 : index
    %c0_46 = arith.constant 0 : index
    %60 = vector.load %arg3[%c1_43, %c0_44, %c0_45, %c0_46] : memref<6x3x64x1xf32, #tpu.memory_space<vmem>>, vector<1x1x64x1xf32>
    %61 = vector.shape_cast %60 : vector<1x1x64x1xf32> to vector<64x1xf32>
    %62 = vector.broadcast %61 : vector<64x1xf32> to vector<64x256xf32>
    %63 = arith.addf %59, %62 : vector<64x256xf32>
    %cst_47 = arith.constant 0.000000e+00 : f32
    %64 = vector.broadcast %cst_47 : f32 to vector<64x256xf32>
    %65 = arith.maximumf %63, %64 : vector<64x256xf32>
    %c1_48 = arith.constant 1 : index
    %c1_49 = arith.constant 1 : index
    %c0_50 = arith.constant 0 : index
    %c0_51 = arith.constant 0 : index
    %66 = vector.load %arg2[%c1_48, %c1_49, %c0_50, %c0_51] : memref<6x3x64x64xbf16, #tpu.memory_space<vmem>>, vector<1x1x64x64xbf16>
    %67 = vector.shape_cast %66 : vector<1x1x64x64xbf16> to vector<64x64xbf16>
    %68 = arith.truncf %65 : vector<64x256xf32> to vector<64x256xbf16>
    %cst_52 = arith.constant dense<0.000000e+00> : vector<64x256xf32>
    %69 = tpu.matmul %67, %68, %cst_52 {dimension_numbers = #tpu.dot_dimension_numbers<[1], [0], [0], [1], [0, 0, 1, 1], [], []>} : vector<64x64xbf16>, vector<64x256xbf16>, vector<64x256xf32> -> vector<64x256xf32>
    %c1_53 = arith.constant 1 : index
    %c1_54 = arith.constant 1 : index
    %c0_55 = arith.constant 0 : index
    %c0_56 = arith.constant 0 : index
    %70 = vector.load %arg3[%c1_53, %c1_54, %c0_55, %c0_56] : memref<6x3x64x1xf32, #tpu.memory_space<vmem>>, vector<1x1x64x1xf32>
    %71 = vector.shape_cast %70 : vector<1x1x64x1xf32> to vector<64x1xf32>
    %72 = vector.broadcast %71 : vector<64x1xf32> to vector<64x256xf32>
    %73 = arith.addf %69, %72 : vector<64x256xf32>
    %cst_57 = arith.constant 0.000000e+00 : f32
    %74 = vector.broadcast %cst_57 : f32 to vector<64x256xf32>
    %75 = arith.maximumf %73, %74 : vector<64x256xf32>
    %c1_58 = arith.constant 1 : index
    %c2_59 = arith.constant 2 : index
    %c0_60 = arith.constant 0 : index
    %c0_61 = arith.constant 0 : index
    %76 = vector.load %arg2[%c1_58, %c2_59, %c0_60, %c0_61] : memref<6x3x64x64xbf16, #tpu.memory_space<vmem>>, vector<1x1x64x64xbf16>
    %77 = vector.shape_cast %76 : vector<1x1x64x64xbf16> to vector<64x64xbf16>
    %78 = arith.truncf %75 : vector<64x256xf32> to vector<64x256xbf16>
    %cst_62 = arith.constant dense<0.000000e+00> : vector<64x256xf32>
    %79 = tpu.matmul %77, %78, %cst_62 {dimension_numbers = #tpu.dot_dimension_numbers<[1], [0], [0], [1], [0, 0, 1, 1], [], []>} : vector<64x64xbf16>, vector<64x256xbf16>, vector<64x256xf32> -> vector<64x256xf32>
    %c1_63 = arith.constant 1 : index
    %c2_64 = arith.constant 2 : index
    %c0_65 = arith.constant 0 : index
    %c0_66 = arith.constant 0 : index
    %80 = vector.load %arg3[%c1_63, %c2_64, %c0_65, %c0_66] : memref<6x3x64x1xf32, #tpu.memory_space<vmem>>, vector<1x1x64x1xf32>
    %81 = vector.shape_cast %80 : vector<1x1x64x1xf32> to vector<64x1xf32>
    %82 = vector.broadcast %81 : vector<64x1xf32> to vector<64x256xf32>
    %83 = arith.addf %79, %82 : vector<64x256xf32>
    %84 = arith.addf %83, %55 : vector<64x256xf32>
    %cst_67 = arith.constant dense<0.000000e+00> : vector<256xf32>
    %85 = vector.multi_reduction <add>, %84, %cst_67 [0] : vector<64x256xf32> to vector<256xf32>
    %86 = vector.shape_cast %85 : vector<256xf32> to vector<1x256xf32>
    %87 = arith.mulf %84, %84 : vector<64x256xf32>
    %cst_68 = arith.constant dense<0.000000e+00> : vector<256xf32>
    %88 = vector.multi_reduction <add>, %87, %cst_68 [0] : vector<64x256xf32> to vector<256xf32>
    %89 = vector.shape_cast %88 : vector<256xf32> to vector<1x256xf32>
    %cst_69 = arith.constant 1.562500e-02 : f32
    %90 = vector.broadcast %cst_69 : f32 to vector<1x256xf32>
    %91 = arith.mulf %86, %90 : vector<1x256xf32>
    %cst_70 = arith.constant 1.562500e-02 : f32
    %92 = vector.broadcast %cst_70 : f32 to vector<1x256xf32>
    %93 = arith.mulf %89, %92 : vector<1x256xf32>
    %94 = arith.mulf %91, %91 : vector<1x256xf32>
    %95 = arith.subf %93, %94 : vector<1x256xf32>
    %cst_71 = arith.constant 9.99999974E-6 : f32
    %96 = vector.broadcast %cst_71 : f32 to vector<1x256xf32>
    %97 = arith.addf %95, %96 : vector<1x256xf32>
    %98 = math.rsqrt %97 : vector<1x256xf32>
    %99 = vector.broadcast %91 : vector<1x256xf32> to vector<64x256xf32>
    %100 = arith.subf %84, %99 : vector<64x256xf32>
    %101 = vector.broadcast %98 : vector<1x256xf32> to vector<64x256xf32>
    %102 = arith.mulf %100, %101 : vector<64x256xf32>
    %c1_72 = arith.constant 1 : index
    %c0_73 = arith.constant 0 : index
    %c0_74 = arith.constant 0 : index
    %103 = vector.load %arg4[%c1_72, %c0_73, %c0_74] : memref<5x64x1xf32, #tpu.memory_space<vmem>>, vector<1x64x1xf32>
    %104 = vector.shape_cast %103 : vector<1x64x1xf32> to vector<64x1xf32>
    %105 = vector.broadcast %104 : vector<64x1xf32> to vector<64x256xf32>
    %106 = arith.mulf %102, %105 : vector<64x256xf32>
    %c1_75 = arith.constant 1 : index
    %c0_76 = arith.constant 0 : index
    %c0_77 = arith.constant 0 : index
    %107 = vector.load %arg5[%c1_75, %c0_76, %c0_77] : memref<5x64x1xf32, #tpu.memory_space<vmem>>, vector<1x64x1xf32>
    %108 = vector.shape_cast %107 : vector<1x64x1xf32> to vector<64x1xf32>
    %109 = vector.broadcast %108 : vector<64x1xf32> to vector<64x256xf32>
    %110 = arith.addf %106, %109 : vector<64x256xf32>
    %c2_78 = arith.constant 2 : index
    %c0_79 = arith.constant 0 : index
    %c0_80 = arith.constant 0 : index
    %c0_81 = arith.constant 0 : index
    %111 = vector.load %arg2[%c2_78, %c0_79, %c0_80, %c0_81] : memref<6x3x64x64xbf16, #tpu.memory_space<vmem>>, vector<1x1x64x64xbf16>
    %112 = vector.shape_cast %111 : vector<1x1x64x64xbf16> to vector<64x64xbf16>
    %113 = arith.truncf %110 : vector<64x256xf32> to vector<64x256xbf16>
    %cst_82 = arith.constant dense<0.000000e+00> : vector<64x256xf32>
    %114 = tpu.matmul %112, %113, %cst_82 {dimension_numbers = #tpu.dot_dimension_numbers<[1], [0], [0], [1], [0, 0, 1, 1], [], []>} : vector<64x64xbf16>, vector<64x256xbf16>, vector<64x256xf32> -> vector<64x256xf32>
    %c2_83 = arith.constant 2 : index
    %c0_84 = arith.constant 0 : index
    %c0_85 = arith.constant 0 : index
    %c0_86 = arith.constant 0 : index
    %115 = vector.load %arg3[%c2_83, %c0_84, %c0_85, %c0_86] : memref<6x3x64x1xf32, #tpu.memory_space<vmem>>, vector<1x1x64x1xf32>
    %116 = vector.shape_cast %115 : vector<1x1x64x1xf32> to vector<64x1xf32>
    %117 = vector.broadcast %116 : vector<64x1xf32> to vector<64x256xf32>
    %118 = arith.addf %114, %117 : vector<64x256xf32>
    %cst_87 = arith.constant 0.000000e+00 : f32
    %119 = vector.broadcast %cst_87 : f32 to vector<64x256xf32>
    %120 = arith.maximumf %118, %119 : vector<64x256xf32>
    %c2_88 = arith.constant 2 : index
    %c1_89 = arith.constant 1 : index
    %c0_90 = arith.constant 0 : index
    %c0_91 = arith.constant 0 : index
    %121 = vector.load %arg2[%c2_88, %c1_89, %c0_90, %c0_91] : memref<6x3x64x64xbf16, #tpu.memory_space<vmem>>, vector<1x1x64x64xbf16>
    %122 = vector.shape_cast %121 : vector<1x1x64x64xbf16> to vector<64x64xbf16>
    %123 = arith.truncf %120 : vector<64x256xf32> to vector<64x256xbf16>
    %cst_92 = arith.constant dense<0.000000e+00> : vector<64x256xf32>
    %124 = tpu.matmul %122, %123, %cst_92 {dimension_numbers = #tpu.dot_dimension_numbers<[1], [0], [0], [1], [0, 0, 1, 1], [], []>} : vector<64x64xbf16>, vector<64x256xbf16>, vector<64x256xf32> -> vector<64x256xf32>
    %c2_93 = arith.constant 2 : index
    %c1_94 = arith.constant 1 : index
    %c0_95 = arith.constant 0 : index
    %c0_96 = arith.constant 0 : index
    %125 = vector.load %arg3[%c2_93, %c1_94, %c0_95, %c0_96] : memref<6x3x64x1xf32, #tpu.memory_space<vmem>>, vector<1x1x64x1xf32>
    %126 = vector.shape_cast %125 : vector<1x1x64x1xf32> to vector<64x1xf32>
    %127 = vector.broadcast %126 : vector<64x1xf32> to vector<64x256xf32>
    %128 = arith.addf %124, %127 : vector<64x256xf32>
    %cst_97 = arith.constant 0.000000e+00 : f32
    %129 = vector.broadcast %cst_97 : f32 to vector<64x256xf32>
    %130 = arith.maximumf %128, %129 : vector<64x256xf32>
    %c2_98 = arith.constant 2 : index
    %c2_99 = arith.constant 2 : index
    %c0_100 = arith.constant 0 : index
    %c0_101 = arith.constant 0 : index
    %131 = vector.load %arg2[%c2_98, %c2_99, %c0_100, %c0_101] : memref<6x3x64x64xbf16, #tpu.memory_space<vmem>>, vector<1x1x64x64xbf16>
    %132 = vector.shape_cast %131 : vector<1x1x64x64xbf16> to vector<64x64xbf16>
    %133 = arith.truncf %130 : vector<64x256xf32> to vector<64x256xbf16>
    %cst_102 = arith.constant dense<0.000000e+00> : vector<64x256xf32>
    %134 = tpu.matmul %132, %133, %cst_102 {dimension_numbers = #tpu.dot_dimension_numbers<[1], [0], [0], [1], [0, 0, 1, 1], [], []>} : vector<64x64xbf16>, vector<64x256xbf16>, vector<64x256xf32> -> vector<64x256xf32>
    %c2_103 = arith.constant 2 : index
    %c2_104 = arith.constant 2 : index
    %c0_105 = arith.constant 0 : index
    %c0_106 = arith.constant 0 : index
    %135 = vector.load %arg3[%c2_103, %c2_104, %c0_105, %c0_106] : memref<6x3x64x1xf32, #tpu.memory_space<vmem>>, vector<1x1x64x1xf32>
    %136 = vector.shape_cast %135 : vector<1x1x64x1xf32> to vector<64x1xf32>
    %137 = vector.broadcast %136 : vector<64x1xf32> to vector<64x256xf32>
    %138 = arith.addf %134, %137 : vector<64x256xf32>
    %139 = arith.addf %138, %110 : vector<64x256xf32>
    %cst_107 = arith.constant dense<0.000000e+00> : vector<256xf32>
    %140 = vector.multi_reduction <add>, %139, %cst_107 [0] : vector<64x256xf32> to vector<256xf32>
    %141 = vector.shape_cast %140 : vector<256xf32> to vector<1x256xf32>
    %142 = arith.mulf %139, %139 : vector<64x256xf32>
    %cst_108 = arith.constant dense<0.000000e+00> : vector<256xf32>
    %143 = vector.multi_reduction <add>, %142, %cst_108 [0] : vector<64x256xf32> to vector<256xf32>
    %144 = vector.shape_cast %143 : vector<256xf32> to vector<1x256xf32>
    %cst_109 = arith.constant 1.562500e-02 : f32
    %145 = vector.broadcast %cst_109 : f32 to vector<1x256xf32>
    %146 = arith.mulf %141, %145 : vector<1x256xf32>
    %cst_110 = arith.constant 1.562500e-02 : f32
    %147 = vector.broadcast %cst_110 : f32 to vector<1x256xf32>
    %148 = arith.mulf %144, %147 : vector<1x256xf32>
    %149 = arith.mulf %146, %146 : vector<1x256xf32>
    %150 = arith.subf %148, %149 : vector<1x256xf32>
    %cst_111 = arith.constant 9.99999974E-6 : f32
    %151 = vector.broadcast %cst_111 : f32 to vector<1x256xf32>
    %152 = arith.addf %150, %151 : vector<1x256xf32>
    %153 = math.rsqrt %152 : vector<1x256xf32>
    %154 = vector.broadcast %146 : vector<1x256xf32> to vector<64x256xf32>
    %155 = arith.subf %139, %154 : vector<64x256xf32>
    %156 = vector.broadcast %153 : vector<1x256xf32> to vector<64x256xf32>
    %157 = arith.mulf %155, %156 : vector<64x256xf32>
    %c2_112 = arith.constant 2 : index
    %c0_113 = arith.constant 0 : index
    %c0_114 = arith.constant 0 : index
    %158 = vector.load %arg4[%c2_112, %c0_113, %c0_114] : memref<5x64x1xf32, #tpu.memory_space<vmem>>, vector<1x64x1xf32>
    %159 = vector.shape_cast %158 : vector<1x64x1xf32> to vector<64x1xf32>
    %160 = vector.broadcast %159 : vector<64x1xf32> to vector<64x256xf32>
    %161 = arith.mulf %157, %160 : vector<64x256xf32>
    %c2_115 = arith.constant 2 : index
    %c0_116 = arith.constant 0 : index
    %c0_117 = arith.constant 0 : index
    %162 = vector.load %arg5[%c2_115, %c0_116, %c0_117] : memref<5x64x1xf32, #tpu.memory_space<vmem>>, vector<1x64x1xf32>
    %163 = vector.shape_cast %162 : vector<1x64x1xf32> to vector<64x1xf32>
    %164 = vector.broadcast %163 : vector<64x1xf32> to vector<64x256xf32>
    %165 = arith.addf %161, %164 : vector<64x256xf32>
    %c3 = arith.constant 3 : index
    %c0_118 = arith.constant 0 : index
    %c0_119 = arith.constant 0 : index
    %c0_120 = arith.constant 0 : index
    %166 = vector.load %arg2[%c3, %c0_118, %c0_119, %c0_120] : memref<6x3x64x64xbf16, #tpu.memory_space<vmem>>, vector<1x1x64x64xbf16>
    %167 = vector.shape_cast %166 : vector<1x1x64x64xbf16> to vector<64x64xbf16>
    %168 = arith.truncf %165 : vector<64x256xf32> to vector<64x256xbf16>
    %cst_121 = arith.constant dense<0.000000e+00> : vector<64x256xf32>
    %169 = tpu.matmul %167, %168, %cst_121 {dimension_numbers = #tpu.dot_dimension_numbers<[1], [0], [0], [1], [0, 0, 1, 1], [], []>} : vector<64x64xbf16>, vector<64x256xbf16>, vector<64x256xf32> -> vector<64x256xf32>
    %c3_122 = arith.constant 3 : index
    %c0_123 = arith.constant 0 : index
    %c0_124 = arith.constant 0 : index
    %c0_125 = arith.constant 0 : index
    %170 = vector.load %arg3[%c3_122, %c0_123, %c0_124, %c0_125] : memref<6x3x64x1xf32, #tpu.memory_space<vmem>>, vector<1x1x64x1xf32>
    %171 = vector.shape_cast %170 : vector<1x1x64x1xf32> to vector<64x1xf32>
    %172 = vector.broadcast %171 : vector<64x1xf32> to vector<64x256xf32>
    %173 = arith.addf %169, %172 : vector<64x256xf32>
    %cst_126 = arith.constant 0.000000e+00 : f32
    %174 = vector.broadcast %cst_126 : f32 to vector<64x256xf32>
    %175 = arith.maximumf %173, %174 : vector<64x256xf32>
    %c3_127 = arith.constant 3 : index
    %c1_128 = arith.constant 1 : index
    %c0_129 = arith.constant 0 : index
    %c0_130 = arith.constant 0 : index
    %176 = vector.load %arg2[%c3_127, %c1_128, %c0_129, %c0_130] : memref<6x3x64x64xbf16, #tpu.memory_space<vmem>>, vector<1x1x64x64xbf16>
    %177 = vector.shape_cast %176 : vector<1x1x64x64xbf16> to vector<64x64xbf16>
    %178 = arith.truncf %175 : vector<64x256xf32> to vector<64x256xbf16>
    %cst_131 = arith.constant dense<0.000000e+00> : vector<64x256xf32>
    %179 = tpu.matmul %177, %178, %cst_131 {dimension_numbers = #tpu.dot_dimension_numbers<[1], [0], [0], [1], [0, 0, 1, 1], [], []>} : vector<64x64xbf16>, vector<64x256xbf16>, vector<64x256xf32> -> vector<64x256xf32>
    %c3_132 = arith.constant 3 : index
    %c1_133 = arith.constant 1 : index
    %c0_134 = arith.constant 0 : index
    %c0_135 = arith.constant 0 : index
    %180 = vector.load %arg3[%c3_132, %c1_133, %c0_134, %c0_135] : memref<6x3x64x1xf32, #tpu.memory_space<vmem>>, vector<1x1x64x1xf32>
    %181 = vector.shape_cast %180 : vector<1x1x64x1xf32> to vector<64x1xf32>
    %182 = vector.broadcast %181 : vector<64x1xf32> to vector<64x256xf32>
    %183 = arith.addf %179, %182 : vector<64x256xf32>
    %cst_136 = arith.constant 0.000000e+00 : f32
    %184 = vector.broadcast %cst_136 : f32 to vector<64x256xf32>
    %185 = arith.maximumf %183, %184 : vector<64x256xf32>
    %c3_137 = arith.constant 3 : index
    %c2_138 = arith.constant 2 : index
    %c0_139 = arith.constant 0 : index
    %c0_140 = arith.constant 0 : index
    %186 = vector.load %arg2[%c3_137, %c2_138, %c0_139, %c0_140] : memref<6x3x64x64xbf16, #tpu.memory_space<vmem>>, vector<1x1x64x64xbf16>
    %187 = vector.shape_cast %186 : vector<1x1x64x64xbf16> to vector<64x64xbf16>
    %188 = arith.truncf %185 : vector<64x256xf32> to vector<64x256xbf16>
    %cst_141 = arith.constant dense<0.000000e+00> : vector<64x256xf32>
    %189 = tpu.matmul %187, %188, %cst_141 {dimension_numbers = #tpu.dot_dimension_numbers<[1], [0], [0], [1], [0, 0, 1, 1], [], []>} : vector<64x64xbf16>, vector<64x256xbf16>, vector<64x256xf32> -> vector<64x256xf32>
    %c3_142 = arith.constant 3 : index
    %c2_143 = arith.constant 2 : index
    %c0_144 = arith.constant 0 : index
    %c0_145 = arith.constant 0 : index
    %190 = vector.load %arg3[%c3_142, %c2_143, %c0_144, %c0_145] : memref<6x3x64x1xf32, #tpu.memory_space<vmem>>, vector<1x1x64x1xf32>
    %191 = vector.shape_cast %190 : vector<1x1x64x1xf32> to vector<64x1xf32>
    %192 = vector.broadcast %191 : vector<64x1xf32> to vector<64x256xf32>
    %193 = arith.addf %189, %192 : vector<64x256xf32>
    %194 = arith.addf %193, %165 : vector<64x256xf32>
    %cst_146 = arith.constant dense<0.000000e+00> : vector<256xf32>
    %195 = vector.multi_reduction <add>, %194, %cst_146 [0] : vector<64x256xf32> to vector<256xf32>
    %196 = vector.shape_cast %195 : vector<256xf32> to vector<1x256xf32>
    %197 = arith.mulf %194, %194 : vector<64x256xf32>
    %cst_147 = arith.constant dense<0.000000e+00> : vector<256xf32>
    %198 = vector.multi_reduction <add>, %197, %cst_147 [0] : vector<64x256xf32> to vector<256xf32>
    %199 = vector.shape_cast %198 : vector<256xf32> to vector<1x256xf32>
    %cst_148 = arith.constant 1.562500e-02 : f32
    %200 = vector.broadcast %cst_148 : f32 to vector<1x256xf32>
    %201 = arith.mulf %196, %200 : vector<1x256xf32>
    %cst_149 = arith.constant 1.562500e-02 : f32
    %202 = vector.broadcast %cst_149 : f32 to vector<1x256xf32>
    %203 = arith.mulf %199, %202 : vector<1x256xf32>
    %204 = arith.mulf %201, %201 : vector<1x256xf32>
    %205 = arith.subf %203, %204 : vector<1x256xf32>
    %cst_150 = arith.constant 9.99999974E-6 : f32
    %206 = vector.broadcast %cst_150 : f32 to vector<1x256xf32>
    %207 = arith.addf %205, %206 : vector<1x256xf32>
    %208 = math.rsqrt %207 : vector<1x256xf32>
    %209 = vector.broadcast %201 : vector<1x256xf32> to vector<64x256xf32>
    %210 = arith.subf %194, %209 : vector<64x256xf32>
    %211 = vector.broadcast %208 : vector<1x256xf32> to vector<64x256xf32>
    %212 = arith.mulf %210, %211 : vector<64x256xf32>
    %c3_151 = arith.constant 3 : index
    %c0_152 = arith.constant 0 : index
    %c0_153 = arith.constant 0 : index
    %213 = vector.load %arg4[%c3_151, %c0_152, %c0_153] : memref<5x64x1xf32, #tpu.memory_space<vmem>>, vector<1x64x1xf32>
    %214 = vector.shape_cast %213 : vector<1x64x1xf32> to vector<64x1xf32>
    %215 = vector.broadcast %214 : vector<64x1xf32> to vector<64x256xf32>
    %216 = arith.mulf %212, %215 : vector<64x256xf32>
    %c3_154 = arith.constant 3 : index
    %c0_155 = arith.constant 0 : index
    %c0_156 = arith.constant 0 : index
    %217 = vector.load %arg5[%c3_154, %c0_155, %c0_156] : memref<5x64x1xf32, #tpu.memory_space<vmem>>, vector<1x64x1xf32>
    %218 = vector.shape_cast %217 : vector<1x64x1xf32> to vector<64x1xf32>
    %219 = vector.broadcast %218 : vector<64x1xf32> to vector<64x256xf32>
    %220 = arith.addf %216, %219 : vector<64x256xf32>
    %c4 = arith.constant 4 : index
    %c0_157 = arith.constant 0 : index
    %c0_158 = arith.constant 0 : index
    %c0_159 = arith.constant 0 : index
    %221 = vector.load %arg2[%c4, %c0_157, %c0_158, %c0_159] : memref<6x3x64x64xbf16, #tpu.memory_space<vmem>>, vector<1x1x64x64xbf16>
    %222 = vector.shape_cast %221 : vector<1x1x64x64xbf16> to vector<64x64xbf16>
    %223 = arith.truncf %220 : vector<64x256xf32> to vector<64x256xbf16>
    %cst_160 = arith.constant dense<0.000000e+00> : vector<64x256xf32>
    %224 = tpu.matmul %222, %223, %cst_160 {dimension_numbers = #tpu.dot_dimension_numbers<[1], [0], [0], [1], [0, 0, 1, 1], [], []>} : vector<64x64xbf16>, vector<64x256xbf16>, vector<64x256xf32> -> vector<64x256xf32>
    %c4_161 = arith.constant 4 : index
    %c0_162 = arith.constant 0 : index
    %c0_163 = arith.constant 0 : index
    %c0_164 = arith.constant 0 : index
    %225 = vector.load %arg3[%c4_161, %c0_162, %c0_163, %c0_164] : memref<6x3x64x1xf32, #tpu.memory_space<vmem>>, vector<1x1x64x1xf32>
    %226 = vector.shape_cast %225 : vector<1x1x64x1xf32> to vector<64x1xf32>
    %227 = vector.broadcast %226 : vector<64x1xf32> to vector<64x256xf32>
    %228 = arith.addf %224, %227 : vector<64x256xf32>
    %cst_165 = arith.constant 0.000000e+00 : f32
    %229 = vector.broadcast %cst_165 : f32 to vector<64x256xf32>
    %230 = arith.maximumf %228, %229 : vector<64x256xf32>
    %c4_166 = arith.constant 4 : index
    %c1_167 = arith.constant 1 : index
    %c0_168 = arith.constant 0 : index
    %c0_169 = arith.constant 0 : index
    %231 = vector.load %arg2[%c4_166, %c1_167, %c0_168, %c0_169] : memref<6x3x64x64xbf16, #tpu.memory_space<vmem>>, vector<1x1x64x64xbf16>
    %232 = vector.shape_cast %231 : vector<1x1x64x64xbf16> to vector<64x64xbf16>
    %233 = arith.truncf %230 : vector<64x256xf32> to vector<64x256xbf16>
    %cst_170 = arith.constant dense<0.000000e+00> : vector<64x256xf32>
    %234 = tpu.matmul %232, %233, %cst_170 {dimension_numbers = #tpu.dot_dimension_numbers<[1], [0], [0], [1], [0, 0, 1, 1], [], []>} : vector<64x64xbf16>, vector<64x256xbf16>, vector<64x256xf32> -> vector<64x256xf32>
    %c4_171 = arith.constant 4 : index
    %c1_172 = arith.constant 1 : index
    %c0_173 = arith.constant 0 : index
    %c0_174 = arith.constant 0 : index
    %235 = vector.load %arg3[%c4_171, %c1_172, %c0_173, %c0_174] : memref<6x3x64x1xf32, #tpu.memory_space<vmem>>, vector<1x1x64x1xf32>
    %236 = vector.shape_cast %235 : vector<1x1x64x1xf32> to vector<64x1xf32>
    %237 = vector.broadcast %236 : vector<64x1xf32> to vector<64x256xf32>
    %238 = arith.addf %234, %237 : vector<64x256xf32>
    %cst_175 = arith.constant 0.000000e+00 : f32
    %239 = vector.broadcast %cst_175 : f32 to vector<64x256xf32>
    %240 = arith.maximumf %238, %239 : vector<64x256xf32>
    %c4_176 = arith.constant 4 : index
    %c2_177 = arith.constant 2 : index
    %c0_178 = arith.constant 0 : index
    %c0_179 = arith.constant 0 : index
    %241 = vector.load %arg2[%c4_176, %c2_177, %c0_178, %c0_179] : memref<6x3x64x64xbf16, #tpu.memory_space<vmem>>, vector<1x1x64x64xbf16>
    %242 = vector.shape_cast %241 : vector<1x1x64x64xbf16> to vector<64x64xbf16>
    %243 = arith.truncf %240 : vector<64x256xf32> to vector<64x256xbf16>
    %cst_180 = arith.constant dense<0.000000e+00> : vector<64x256xf32>
    %244 = tpu.matmul %242, %243, %cst_180 {dimension_numbers = #tpu.dot_dimension_numbers<[1], [0], [0], [1], [0, 0, 1, 1], [], []>} : vector<64x64xbf16>, vector<64x256xbf16>, vector<64x256xf32> -> vector<64x256xf32>
    %c4_181 = arith.constant 4 : index
    %c2_182 = arith.constant 2 : index
    %c0_183 = arith.constant 0 : index
    %c0_184 = arith.constant 0 : index
    %245 = vector.load %arg3[%c4_181, %c2_182, %c0_183, %c0_184] : memref<6x3x64x1xf32, #tpu.memory_space<vmem>>, vector<1x1x64x1xf32>
    %246 = vector.shape_cast %245 : vector<1x1x64x1xf32> to vector<64x1xf32>
    %247 = vector.broadcast %246 : vector<64x1xf32> to vector<64x256xf32>
    %248 = arith.addf %244, %247 : vector<64x256xf32>
    %249 = arith.addf %248, %220 : vector<64x256xf32>
    %cst_185 = arith.constant dense<0.000000e+00> : vector<256xf32>
    %250 = vector.multi_reduction <add>, %249, %cst_185 [0] : vector<64x256xf32> to vector<256xf32>
    %251 = vector.shape_cast %250 : vector<256xf32> to vector<1x256xf32>
    %252 = arith.mulf %249, %249 : vector<64x256xf32>
    %cst_186 = arith.constant dense<0.000000e+00> : vector<256xf32>
    %253 = vector.multi_reduction <add>, %252, %cst_186 [0] : vector<64x256xf32> to vector<256xf32>
    %254 = vector.shape_cast %253 : vector<256xf32> to vector<1x256xf32>
    %cst_187 = arith.constant 1.562500e-02 : f32
    %255 = vector.broadcast %cst_187 : f32 to vector<1x256xf32>
    %256 = arith.mulf %251, %255 : vector<1x256xf32>
    %cst_188 = arith.constant 1.562500e-02 : f32
    %257 = vector.broadcast %cst_188 : f32 to vector<1x256xf32>
    %258 = arith.mulf %254, %257 : vector<1x256xf32>
    %259 = arith.mulf %256, %256 : vector<1x256xf32>
    %260 = arith.subf %258, %259 : vector<1x256xf32>
    %cst_189 = arith.constant 9.99999974E-6 : f32
    %261 = vector.broadcast %cst_189 : f32 to vector<1x256xf32>
    %262 = arith.addf %260, %261 : vector<1x256xf32>
    %263 = math.rsqrt %262 : vector<1x256xf32>
    %264 = vector.broadcast %256 : vector<1x256xf32> to vector<64x256xf32>
    %265 = arith.subf %249, %264 : vector<64x256xf32>
    %266 = vector.broadcast %263 : vector<1x256xf32> to vector<64x256xf32>
    %267 = arith.mulf %265, %266 : vector<64x256xf32>
    %c4_190 = arith.constant 4 : index
    %c0_191 = arith.constant 0 : index
    %c0_192 = arith.constant 0 : index
    %268 = vector.load %arg4[%c4_190, %c0_191, %c0_192] : memref<5x64x1xf32, #tpu.memory_space<vmem>>, vector<1x64x1xf32>
    %269 = vector.shape_cast %268 : vector<1x64x1xf32> to vector<64x1xf32>
    %270 = vector.broadcast %269 : vector<64x1xf32> to vector<64x256xf32>
    %271 = arith.mulf %267, %270 : vector<64x256xf32>
    %c4_193 = arith.constant 4 : index
    %c0_194 = arith.constant 0 : index
    %c0_195 = arith.constant 0 : index
    %272 = vector.load %arg5[%c4_193, %c0_194, %c0_195] : memref<5x64x1xf32, #tpu.memory_space<vmem>>, vector<1x64x1xf32>
    %273 = vector.shape_cast %272 : vector<1x64x1xf32> to vector<64x1xf32>
    %274 = vector.broadcast %273 : vector<64x1xf32> to vector<64x256xf32>
    %275 = arith.addf %271, %274 : vector<64x256xf32>
    %c5 = arith.constant 5 : index
    %c0_196 = arith.constant 0 : index
    %c0_197 = arith.constant 0 : index
    %c0_198 = arith.constant 0 : index
    %276 = vector.load %arg2[%c5, %c0_196, %c0_197, %c0_198] : memref<6x3x64x64xbf16, #tpu.memory_space<vmem>>, vector<1x1x64x64xbf16>
    %277 = vector.shape_cast %276 : vector<1x1x64x64xbf16> to vector<64x64xbf16>
    %278 = arith.truncf %275 : vector<64x256xf32> to vector<64x256xbf16>
    %cst_199 = arith.constant dense<0.000000e+00> : vector<64x256xf32>
    %279 = tpu.matmul %277, %278, %cst_199 {dimension_numbers = #tpu.dot_dimension_numbers<[1], [0], [0], [1], [0, 0, 1, 1], [], []>} : vector<64x64xbf16>, vector<64x256xbf16>, vector<64x256xf32> -> vector<64x256xf32>
    %c5_200 = arith.constant 5 : index
    %c0_201 = arith.constant 0 : index
    %c0_202 = arith.constant 0 : index
    %c0_203 = arith.constant 0 : index
    %280 = vector.load %arg3[%c5_200, %c0_201, %c0_202, %c0_203] : memref<6x3x64x1xf32, #tpu.memory_space<vmem>>, vector<1x1x64x1xf32>
    %281 = vector.shape_cast %280 : vector<1x1x64x1xf32> to vector<64x1xf32>
    %282 = vector.broadcast %281 : vector<64x1xf32> to vector<64x256xf32>
    %283 = arith.addf %279, %282 : vector<64x256xf32>
    %cst_204 = arith.constant 0.000000e+00 : f32
    %284 = vector.broadcast %cst_204 : f32 to vector<64x256xf32>
    %285 = arith.maximumf %283, %284 : vector<64x256xf32>
    %c5_205 = arith.constant 5 : index
    %c1_206 = arith.constant 1 : index
    %c0_207 = arith.constant 0 : index
    %c0_208 = arith.constant 0 : index
    %286 = vector.load %arg2[%c5_205, %c1_206, %c0_207, %c0_208] : memref<6x3x64x64xbf16, #tpu.memory_space<vmem>>, vector<1x1x64x64xbf16>
    %287 = vector.shape_cast %286 : vector<1x1x64x64xbf16> to vector<64x64xbf16>
    %288 = arith.truncf %285 : vector<64x256xf32> to vector<64x256xbf16>
    %cst_209 = arith.constant dense<0.000000e+00> : vector<64x256xf32>
    %289 = tpu.matmul %287, %288, %cst_209 {dimension_numbers = #tpu.dot_dimension_numbers<[1], [0], [0], [1], [0, 0, 1, 1], [], []>} : vector<64x64xbf16>, vector<64x256xbf16>, vector<64x256xf32> -> vector<64x256xf32>
    %c5_210 = arith.constant 5 : index
    %c1_211 = arith.constant 1 : index
    %c0_212 = arith.constant 0 : index
    %c0_213 = arith.constant 0 : index
    %290 = vector.load %arg3[%c5_210, %c1_211, %c0_212, %c0_213] : memref<6x3x64x1xf32, #tpu.memory_space<vmem>>, vector<1x1x64x1xf32>
    %291 = vector.shape_cast %290 : vector<1x1x64x1xf32> to vector<64x1xf32>
    %292 = vector.broadcast %291 : vector<64x1xf32> to vector<64x256xf32>
    %293 = arith.addf %289, %292 : vector<64x256xf32>
    %cst_214 = arith.constant 0.000000e+00 : f32
    %294 = vector.broadcast %cst_214 : f32 to vector<64x256xf32>
    %295 = arith.maximumf %293, %294 : vector<64x256xf32>
    %c5_215 = arith.constant 5 : index
    %c2_216 = arith.constant 2 : index
    %c0_217 = arith.constant 0 : index
    %c0_218 = arith.constant 0 : index
    %296 = vector.load %arg2[%c5_215, %c2_216, %c0_217, %c0_218] : memref<6x3x64x64xbf16, #tpu.memory_space<vmem>>, vector<1x1x64x64xbf16>
    %297 = vector.shape_cast %296 : vector<1x1x64x64xbf16> to vector<64x64xbf16>
    %298 = arith.truncf %295 : vector<64x256xf32> to vector<64x256xbf16>
    %cst_219 = arith.constant dense<0.000000e+00> : vector<64x256xf32>
    %299 = tpu.matmul %297, %298, %cst_219 {dimension_numbers = #tpu.dot_dimension_numbers<[1], [0], [0], [1], [0, 0, 1, 1], [], []>} : vector<64x64xbf16>, vector<64x256xbf16>, vector<64x256xf32> -> vector<64x256xf32>
    %c5_220 = arith.constant 5 : index
    %c2_221 = arith.constant 2 : index
    %c0_222 = arith.constant 0 : index
    %c0_223 = arith.constant 0 : index
    %300 = vector.load %arg3[%c5_220, %c2_221, %c0_222, %c0_223] : memref<6x3x64x1xf32, #tpu.memory_space<vmem>>, vector<1x1x64x1xf32>
    %301 = vector.shape_cast %300 : vector<1x1x64x1xf32> to vector<64x1xf32>
    %302 = vector.broadcast %301 : vector<64x1xf32> to vector<64x256xf32>
    %303 = arith.addf %299, %302 : vector<64x256xf32>
    %304 = arith.addf %303, %275 : vector<64x256xf32>
    %c0_224 = arith.constant 0 : index
    %c0_225 = arith.constant 0 : index
    %305 = vector.load %arg6[%c0_224, %c0_225] : memref<64x256xf32, #tpu.memory_space<vmem>>, vector<64x256xf32>
    tpu.vector_store %arg6[%c0_224, %c0_225], %304 {strides = array<i32>} : memref<64x256xf32, #tpu.memory_space<vmem>>, vector<64x256xf32>,
    return
  }
  func.func @transform_0(%arg0: i32) -> (i32, i32) {
    %c0_i32 = arith.constant 0 : i32
    %c0_i32_0 = arith.constant 0 : i32
    return %c0_i32, %arg0 : i32, i32
  }
  func.func @transform_1(%arg0: i32) -> (i32, i32, i32, i32) {
    %c0_i32 = arith.constant 0 : i32
    %c0_i32_0 = arith.constant 0 : i32
    %c0_i32_1 = arith.constant 0 : i32
    %c0_i32_2 = arith.constant 0 : i32
    %c0_i32_3 = arith.constant 0 : i32
    return %c0_i32, %c0_i32_0, %c0_i32_1, %c0_i32_2 : i32, i32, i32, i32
  }
  func.func @transform_2(%arg0: i32) -> (i32, i32, i32, i32) {
    %c0_i32 = arith.constant 0 : i32
    %c0_i32_0 = arith.constant 0 : i32
    %c0_i32_1 = arith.constant 0 : i32
    %c0_i32_2 = arith.constant 0 : i32
    %c0_i32_3 = arith.constant 0 : i32
    return %c0_i32, %c0_i32_0, %c0_i32_1, %c0_i32_2 : i32, i32, i32, i32
  }
  func.func @transform_3(%arg0: i32) -> (i32, i32, i32) {
    %c0_i32 = arith.constant 0 : i32
    %c0_i32_0 = arith.constant 0 : i32
    %c0_i32_1 = arith.constant 0 : i32
    %c0_i32_2 = arith.constant 0 : i32
    return %c0_i32, %c0_i32_0, %c0_i32_1 : i32, i32, i32
  }
  func.func @transform_4(%arg0: i32) -> (i32, i32, i32) {
    %c0_i32 = arith.constant 0 : i32
    %c0_i32_0 = arith.constant 0 : i32
    %c0_i32_1 = arith.constant 0 : i32
    %c0_i32_2 = arith.constant 0 : i32
    return %c0_i32, %c0_i32_0, %c0_i32_1 : i32, i32, i32
  }
  func.func @transform_5(%arg0: i32) -> (i32, i32) {
    %c0_i32 = arith.constant 0 : i32
    %c0_i32_0 = arith.constant 0 : i32
    return %c0_i32, %arg0 : i32, i32
  }
}

</mosaic_0001>

<llo_original>
// kernel: bignet_forward.1
$region0: #{bignet_forward.1}
  #allocation0 [shape = 'u32[]', space=smem, size = 0x4, offset = 0x4, fixed_abs, tag = 'smem constant byte address 0x4 - core index']
  #allocation1 [shape = 'u32[144,128]{1,0:T(1,128)}', space=vmem, size = 0x12000, scoped, tag = 'internal scratch']
  %s0 = inlined_call_operand.vmem [shape: f32[64,256], index: 0, kind: input, shape index: {}]
  %s1 = inlined_call_operand.vmem [shape: bf16[6,3,64,64], index: 1, kind: input, shape index: {}]
  %s2 = inlined_call_operand.vmem [shape: f32[6,3,64,1], index: 2, kind: input, shape index: {}]
  %s3 = inlined_call_operand.vmem [shape: f32[5,64,1], index: 3, kind: input, shape index: {}]
  %s4 = inlined_call_operand.vmem [shape: f32[5,64,1], index: 4, kind: input, shape index: {}]
  %s5 = inlined_call_operand.hbm [shape: f32[64,256], index: 5, kind: output, shape index: {}]
  %s6 = sld [smem:[#allocation0]]
  $region30: #{bignet_forward.1} parent=0
    _
  %s8 = ssub.s32 1, %s6
  %s9 = scalar_select 0, %s8, %s6
  $region1: #{bignet_forward.1} parent=0
    #allocation2 [shape = 'u8[65536]{0}', space=vmem, size = 0x10000, scoped, tag = 'output window, operand 0, single buffered']
    #allocation3 [shape = 's32[1]{0}', space=sflag, size = 0x4, scoped, tag = 'scoped memory for bignet_forward.1']
    %10 = vsyncpa [#allocation3], 0
    // Predicated region
    $region2: #{bignet_forward.1} parent=1 // pred_check
      _
    $region3: #{bignet_forward.1} parent=1 // pred_check_branch
      %12 = sbr.rel (0) target = $region5
    $region4: #{bignet_forward.1} parent=1 // pred_region
      _
    $region5: #{bignet_forward.1} parent=1 // pred_fallthru
      _
    // Predicated region
    $region6: #{bignet_forward.1} parent=1 // pred_check
      _
    $region7: #{bignet_forward.1} parent=1 // pred_check_branch
      %14 = sbr.rel (0) target = $region9
    $region8: #{bignet_forward.1} parent=1 // pred_region
      _
    $region9: #{bignet_forward.1} parent=1 // pred_fallthru
      _
    // Predicated region
    $region10: #{bignet_forward.1} parent=1 // pred_check
      _
    $region11: #{bignet_forward.1} parent=1 // pred_check_branch
      %16 = sbr.rel (0) target = $region13
    $region12: #{bignet_forward.1} parent=1 // pred_region
      _
    $region13: #{bignet_forward.1} parent=1 // pred_fallthru
      _
    // Predicated region
    $region14: #{bignet_forward.1} parent=1 // pred_check
      _
    $region15: #{bignet_forward.1} parent=1 // pred_check_branch
      %18 = sbr.rel (0) target = $region17
    $region16: #{bignet_forward.1} parent=1 // pred_region
      _
    $region17: #{bignet_forward.1} parent=1 // pred_fallthru
      _
    // Predicated region
    $region18: #{bignet_forward.1} parent=1 // pred_check
      _
    $region19: #{bignet_forward.1} parent=1 // pred_check_branch
      %20 = sbr.rel (0) target = $region21
    $region20: #{bignet_forward.1} parent=1 // pred_region
      _
    $region21: #{bignet_forward.1} parent=1 // pred_fallthru
      _
    %v22 = vld [vmem:[%s0] sm:$0xff]
    %v23 = vld [vmem:[%s0 + $0x8] sm:$0xff]
    %v24 = vld [vmem:[%s0 + $0x10] sm:$0xff]
    %v25 = vld [vmem:[%s0 + $0x18] sm:$0xff]
    %v26 = vld [vmem:[%s0 + $0x20] sm:$0xff]
    %v27 = vld [vmem:[%s0 + $0x28] sm:$0xff]
    %v28 = vld [vmem:[%s0 + $0x30] sm:$0xff]
    %v29 = vld [vmem:[%s0 + $0x38] sm:$0xff]
    %v30 = vld [vmem:[%s0 + $0x40] sm:$0xff]
    %v31 = vld [vmem:[%s0 + $0x48] sm:$0xff]
    %v32 = vld [vmem:[%s0 + $0x50] sm:$0xff]
    %v33 = vld [vmem:[%s0 + $0x58] sm:$0xff]
    %v34 = vld [vmem:[%s0 + $0x60] sm:$0xff]
    %v35 = vld [vmem:[%s0 + $0x68] sm:$0xff]
    %v36 = vld [vmem:[%s0 + $0x70] sm:$0xff]
    %v37 = vld [vmem:[%s0 + $0x78] sm:$0xff]
    %v38 = vld [vmem:[%s1] sm:$0xf]
    %v39 = vld [vmem:[%s1 + $0x4] sm:$0xf]
    %v40 = vld [vmem:[%s1 + $0x8] sm:$0xf]
    %v41 = vld [vmem:[%s1 + $0xc] sm:$0xf]
    %v42 = vld [vmem:[%s1 + $0x10] sm:$0xf]
    %v43 = vld [vmem:[%s1 + $0x14] sm:$0xf]
    %v44 = vld [vmem:[%s1 + $0x18] sm:$0xf]
    %v45 = vld [vmem:[%s1 + $0x1c] sm:$0xf]
    %v46 = vpack.c.bf16 %v24, %v22
    %v47 = vpack.c.bf16 %v25, %v23
    %v48 = vpack.c.bf16 %v28, %v26
    %v49 = vpack.c.bf16 %v29, %v27
    %v50 = vpack.c.bf16 %v32, %v30
    %v51 = vpack.c.bf16 %v33, %v31
    %v52 = vpack.c.bf16 %v36, %v34
    %v53 = vpack.c.bf16 %v37, %v35
    %v54 = vld [vmem:[%s2] sm:$0xff]
    %v55 = vld [vmem:[%s2 + $0x8] sm:$0xff]
    %v56 = vld [vmem:[%s2 + $0x10] sm:$0xff]
    %v57 = vld [vmem:[%s2 + $0x18] sm:$0xff]
    %v58 = vld [vmem:[%s2 + $0x20] sm:$0xff]
    %v59 = vld [vmem:[%s2 + $0x28] sm:$0xff]
    %v60 = vld [vmem:[%s2 + $0x30] sm:$0xff]
    %v61 = vld [vmem:[%s2 + $0x38] sm:$0xff]
    %63 = vset.pattern.permute.xlu0 0
    %64 = vperm.xlu0 %63, %v54
    %v65 = vpop.permute.xlu0 %64
    %68 = vset.pattern.permute.xlu0 0
    %69 = vperm.xlu0 %68, %v55
    %v70 = vpop.permute.xlu0 %69
    %73 = vset.pattern.permute.xlu0 0
    %74 = vperm.xlu0 %73, %v56
    %v75 = vpop.permute.xlu0 %74
    %78 = vset.pattern.permute.xlu0 0
    %79 = vperm.xlu0 %78, %v57
    %v80 = vpop.permute.xlu0 %79
    %83 = vset.pattern.permute.xlu0 0
    %84 = vperm.xlu0 %83, %v58
    %v85 = vpop.permute.xlu0 %84
    %88 = vset.pattern.permute.xlu0 0
    %89 = vperm.xlu0 %88, %v59
    %v90 = vpop.permute.xlu0 %89
    %93 = vset.pattern.permute.xlu0 0
    %94 = vperm.xlu0 %93, %v60
    %v95 = vpop.permute.xlu0 %94
    %98 = vset.pattern.permute.xlu0 0
    %99 = vperm.xlu0 %98, %v61
    %v100 = vpop.permute.xlu0 %99
    %v110 = vunpack.c.l.b16 %v38
    %v111 = vunpack.c.l.b16 %v39
    %v112 = vunpack.c.l.b16 %v40
    %v113 = vunpack.c.l.b16 %v41
    %v114 = vunpack.c.l.b16 %v42
    %v115 = vunpack.c.l.b16 %v43
    %v116 = vunpack.c.l.b16 %v44
    %v117 = vunpack.c.l.b16 %v45
    %v118 = vpack.c.b16 %v111, %v110
    %v119 = vpack.c.b16 %v113, %v112
    %v120 = vpack.c.b16 %v115, %v114
    %v121 = vpack.c.b16 %v117, %v116
    %vm122 = vcmask 523264
    %v124 = vsel %vm122, %v118, 0
    %v127 = vsel %vm122, %v119, 0
    %v130 = vsel %vm122, %v120, 0
    %v133 = vsel %vm122, %v121, 0
    %135 = vmatprep.subr.bf16.mxu0 %v47
    %136 = vmatpush1.bf16.msra.mxu0 %v46
    %137 = vmatprep.subr.bf16.mxu0 %v49
    %138 = vmatpush1.bf16.msra.mxu0 %v48
    %139 = vmatprep.subr.bf16.mxu0 %v51
    %140 = vmatpush1.bf16.msra.mxu0 %v50
    %141 = vmatprep.subr.bf16.mxu0 %v53
    %142 = vmatpush1.bf16.msra.mxu0 %v52
    %143 = vmatprep.subr.bf16.mxu0 0
    %144 = vmatpush1.bf16.msra.mxu0 0
    %145 = vmatprep.subr.bf16.mxu0 0
    %146 = vmatpush1.bf16.msra.mxu0 0
    %147 = vmatprep.subr.bf16.mxu0 0
    %148 = vmatpush1.bf16.msra.mxu0 0
    %149 = vmatprep.subr.bf16.mxu0 0
    %150 = vmatpush1.bf16.msra.mxu0 0
    %151 = vmatprep.subr.bf16.mxu0 0
    %152 = vmatpush1.bf16.msra.mxu0 0
    %153 = vmatprep.subr.bf16.mxu0 0
    %154 = vmatpush1.bf16.msra.mxu0 0
    %155 = vmatprep.subr.bf16.mxu0 0
    %156 = vmatpush1.bf16.msra.mxu0 0
    %157 = vmatprep.subr.bf16.mxu0 0
    %158 = vmatpush1.bf16.msra.mxu0 0
    %159 = vmatprep.subr.bf16.mxu0 0
    %160 = vmatpush1.bf16.msra.mxu0 0
    %161 = vmatprep.subr.bf16.mxu0 0
    %162 = vmatpush1.bf16.msra.mxu0 0
    %163 = vmatprep.subr.bf16.mxu0 0
    %164 = vmatpush1.bf16.msra.mxu0 0
    %165 = vmatprep.subr.bf16.mxu0 0
    %166 = vmatpush1.bf16.msra.mxu0 0
    %167 = vmatprep.mubr.bf16.mxu0 0
    %168 = vmatmul.mubr.bf16.gmra.mrb[0].mxu0 %v124
    %v169 = vpop.f32.mrb[0].mxu0
    %v170 = vadd.f32 %v65, %v169
    %v171 = vpop.f32.mrb[0].mxu0
    %v172 = vadd.f32 %v65, %v171
    %v173 = vpop.f32.mrb[0].mxu0
    %v174 = vadd.f32 %v70, %v173
    %v175 = vpop.f32.mrb[0].mxu0
    %v176 = vadd.f32 %v70, %v175
    %177 = vmatprep.mubr.bf16.mxu0 0
    %178 = vmatmul.mubr.bf16.gmra.mrb[0].mxu0 %v127
    %v179 = vpop.f32.mrb[0].mxu0
    %v180 = vadd.f32 %v75, %v179
    %v181 = vpop.f32.mrb[0].mxu0
    %v182 = vadd.f32 %v75, %v181
    %v183 = vpop.f32.mrb[0].mxu0
    %v184 = vadd.f32 %v80, %v183
    %v185 = vpop.f32.mrb[0].mxu0
    %v186 = vadd.f32 %v80, %v185
    %187 = vmatprep.mubr.bf16.mxu0 0
    %188 = vmatmul.mubr.bf16.gmra.mrb[0].mxu0 %v130
    %v189 = vpop.f32.mrb[0].mxu0
    %v190 = vadd.f32 %v85, %v189
    %v191 = vpop.f32.mrb[0].mxu0
    %v192 = vadd.f32 %v85, %v191
    %v193 = vpop.f32.mrb[0].mxu0
    %v194 = vadd.f32 %v90, %v193
    %v195 = vpop.f32.mrb[0].mxu0
    %v196 = vadd.f32 %v90, %v195
    %197 = vmatprep.mubr.bf16.mxu0 0
    %198 = vmatmul.mubr.bf16.gmra.mrb[0].mxu0 %v133
    %v199 = vpop.f32.mrb[0].mxu0
    %v200 = vadd.f32 %v95, %v199
    %v201 = vpop.f32.mrb[0].mxu0
    %v202 = vadd.f32 %v95, %v201
    %v203 = vpop.f32.mrb[0].mxu0
    %v204 = vadd.f32 %v100, %v203
    %v205 = vpop.f32.mrb[0].mxu0
    %v206 = vadd.f32 %v100, %v205
    %207 = vdwg.mxu0
    %v208 = vmax.f32 %v170, 0.0
    %v209 = vmax.f32 %v172, 0.0
    %v210 = vmax.f32 %v174, 0.0
    %v211 = vmax.f32 %v176, 0.0
    %v212 = vmax.f32 %v180, 0.0
    %v213 = vmax.f32 %v182, 0.0
    %v214 = vmax.f32 %v184, 0.0
    %v215 = vmax.f32 %v186, 0.0
    %v216 = vmax.f32 %v190, 0.0
    %v217 = vmax.f32 %v192, 0.0
    %v218 = vmax.f32 %v194, 0.0
    %v219 = vmax.f32 %v196, 0.0
    %v220 = vmax.f32 %v200, 0.0
    %v221 = vmax.f32 %v202, 0.0
    %v222 = vmax.f32 %v204, 0.0
    %v223 = vmax.f32 %v206, 0.0
    %s224 = scalar_lea.vmem %s1, 32
    %v225 = vld [vmem:[%s224] sm:$0xf]
    %v226 = vld [vmem:[%s224 + $0x4] sm:$0xf]
    %v227 = vld [vmem:[%s224 + $0x8] sm:$0xf]
    %v228 = vld [vmem:[%s224 + $0xc] sm:$0xf]
    %v229 = vld [vmem:[%s224 + $0x10] sm:$0xf]
    %v230 = vld [vmem:[%s224 + $0x14] sm:$0xf]
    %v231 = vld [vmem:[%s224 + $0x18] sm:$0xf]
    %v232 = vld [vmem:[%s224 + $0x1c] sm:$0xf]
    %v233 = vpack.c.bf16 %v210, %v208
    %v234 = vpack.c.bf16 %v211, %v209
    %v235 = vpack.c.bf16 %v214, %v212
    %v236 = vpack.c.bf16 %v215, %v213
    %v237 = vpack.c.bf16 %v218, %v216
    %v238 = vpack.c.bf16 %v219, %v217
    %v239 = vpack.c.bf16 %v222, %v220
    %v240 = vpack.c.bf16 %v223, %v221
    %s241 = scalar_lea.vmem %s2, 64
    %v242 = vld [vmem:[%s241] sm:$0xff]
    %v243 = vld [vmem:[%s241 + $0x8] sm:$0xff]
    %v244 = vld [vmem:[%s241 + $0x10] sm:$0xff]
    %v245 = vld [vmem:[%s241 + $0x18] sm:$0xff]
    %v246 = vld [vmem:[%s241 + $0x20] sm:$0xff]
    %v247 = vld [vmem:[%s241 + $0x28] sm:$0xff]
    %v248 = vld [vmem:[%s241 + $0x30] sm:$0xff]
    %v249 = vld [vmem:[%s241 + $0x38] sm:$0xff]
    %251 = vset.pattern.permute.xlu0 0
    %252 = vperm.xlu0 %251, %v242
    %v253 = vpop.permute.xlu0 %252
    %256 = vset.pattern.permute.xlu0 0
    %257 = vperm.xlu0 %256, %v243
    %v258 = vpop.permute.xlu0 %257
    %261 = vset.pattern.permute.xlu0 0
    %262 = vperm.xlu0 %261, %v244
    %v263 = vpop.permute.xlu0 %262
    %266 = vset.pattern.permute.xlu0 0
    %267 = vperm.xlu0 %266, %v245
    %v268 = vpop.permute.xlu0 %267
    %271 = vset.pattern.permute.xlu0 0
    %272 = vperm.xlu0 %271, %v246
    %v273 = vpop.permute.xlu0 %272
    %276 = vset.pattern.permute.xlu0 0
    %277 = vperm.xlu0 %276, %v247
    %v278 = vpop.permute.xlu0 %277
    %281 = vset.pattern.permute.xlu0 0
    %282 = vperm.xlu0 %281, %v248
    %v283 = vpop.permute.xlu0 %282
    %286 = vset.pattern.permute.xlu0 0
    %287 = vperm.xlu0 %286, %v249
    %v288 = vpop.permute.xlu0 %287
    %v298 = vunpack.c.l.b16 %v225
    %v299 = vunpack.c.l.b16 %v226
    %v300 = vunpack.c.l.b16 %v227
    %v301 = vunpack.c.l.b16 %v228
    %v302 = vunpack.c.l.b16 %v229
    %v303 = vunpack.c.l.b16 %v230
    %v304 = vunpack.c.l.b16 %v231
    %v305 = vunpack.c.l.b16 %v232
    %v306 = vpack.c.b16 %v299, %v298
    %v307 = vpack.c.b16 %v301, %v300
    %v308 = vpack.c.b16 %v303, %v302
    %v309 = vpack.c.b16 %v305, %v304
    %v311 = vsel %vm122, %v306, 0
    %v314 = vsel %vm122, %v307, 0
    %v317 = vsel %vm122, %v308, 0
    %v320 = vsel %vm122, %v309, 0
    %322 = vmatprep.subr.bf16.mxu0 %v234
    %323 = vmatpush1.bf16.msra.mxu0 %v233
    %324 = vmatprep.subr.bf16.mxu0 %v236
    %325 = vmatpush1.bf16.msra.mxu0 %v235
    %326 = vmatprep.subr.bf16.mxu0 %v238
    %327 = vmatpush1.bf16.msra.mxu0 %v237
    %328 = vmatprep.subr.bf16.mxu0 %v240
    %329 = vmatpush1.bf16.msra.mxu0 %v239
    %330 = vmatprep.subr.bf16.mxu0 0
    %331 = vmatpush1.bf16.msra.mxu0 0
    %332 = vmatprep.subr.bf16.mxu0 0
    %333 = vmatpush1.bf16.msra.mxu0 0
    %334 = vmatprep.subr.bf16.mxu0 0
    %335 = vmatpush1.bf16.msra.mxu0 0
    %336 = vmatprep.subr.bf16.mxu0 0
    %337 = vmatpush1.bf16.msra.mxu0 0
    %338 = vmatprep.subr.bf16.mxu0 0
    %339 = vmatpush1.bf16.msra.mxu0 0
    %340 = vmatprep.subr.bf16.mxu0 0
    %341 = vmatpush1.bf16.msra.mxu0 0
    %342 = vmatprep.subr.bf16.mxu0 0
    %343 = vmatpush1.bf16.msra.mxu0 0
    %344 = vmatprep.subr.bf16.mxu0 0
    %345 = vmatpush1.bf16.msra.mxu0 0
    %346 = vmatprep.subr.bf16.mxu0 0
    %347 = vmatpush1.bf16.msra.mxu0 0
    %348 = vmatprep.subr.bf16.mxu0 0
    %349 = vmatpush1.bf16.msra.mxu0 0
    %350 = vmatprep.subr.bf16.mxu0 0
    %351 = vmatpush1.bf16.msra.mxu0 0
    %352 = vmatprep.subr.bf16.mxu0 0
    %353 = vmatpush1.bf16.msra.mxu0 0
    %354 = vmatprep.mubr.bf16.mxu0 0
    %355 = vmatmul.mubr.bf16.gmra.mrb[0].mxu0 %v311
    %v356 = vpop.f32.mrb[0].mxu0
    %v357 = vadd.f32 %v253, %v356
    %v358 = vpop.f32.mrb[0].mxu0
    %v359 = vadd.f32 %v253, %v358
    %v360 = vpop.f32.mrb[0].mxu0
    %v361 = vadd.f32 %v258, %v360
    %v362 = vpop.f32.mrb[0].mxu0
    %v363 = vadd.f32 %v258, %v362
    %364 = vmatprep.mubr.bf16.mxu0 0
    %365 = vmatmul.mubr.bf16.gmra.mrb[0].mxu0 %v314
    %v366 = vpop.f32.mrb[0].mxu0
    %v367 = vadd.f32 %v263, %v366
    %v368 = vpop.f32.mrb[0].mxu0
    %v369 = vadd.f32 %v263, %v368
    %v370 = vpop.f32.mrb[0].mxu0
    %v371 = vadd.f32 %v268, %v370
    %v372 = vpop.f32.mrb[0].mxu0
    %v373 = vadd.f32 %v268, %v372
    %374 = vmatprep.mubr.bf16.mxu0 0
    %375 = vmatmul.mubr.bf16.gmra.mrb[0].mxu0 %v317
    %v376 = vpop.f32.mrb[0].mxu0
    %v377 = vadd.f32 %v273, %v376
    %v378 = vpop.f32.mrb[0].mxu0
    %v379 = vadd.f32 %v273, %v378
    %v380 = vpop.f32.mrb[0].mxu0
    %v381 = vadd.f32 %v278, %v380
    %v382 = vpop.f32.mrb[0].mxu0
    %v383 = vadd.f32 %v278, %v382
    %384 = vmatprep.mubr.bf16.mxu0 0
    %385 = vmatmul.mubr.bf16.gmra.mrb[0].mxu0 %v320
    %v386 = vpop.f32.mrb[0].mxu0
    %v387 = vadd.f32 %v283, %v386
    %v388 = vpop.f32.mrb[0].mxu0
    %v389 = vadd.f32 %v283, %v388
    %v390 = vpop.f32.mrb[0].mxu0
    %v391 = vadd.f32 %v288, %v390
    %v392 = vpop.f32.mrb[0].mxu0
    %v393 = vadd.f32 %v288, %v392
    %394 = vdwg.mxu0
    %v395 = vmax.f32 %v357, 0.0
    %v396 = vmax.f32 %v359, 0.0
    %v397 = vmax.f32 %v361, 0.0
    %v398 = vmax.f32 %v363, 0.0
    %v399 = vmax.f32 %v367, 0.0
    %v400 = vmax.f32 %v369, 0.0
    %v401 = vmax.f32 %v371, 0.0
    %v402 = vmax.f32 %v373, 0.0
    %v403 = vmax.f32 %v377, 0.0
    %v404 = vmax.f32 %v379, 0.0
    %v405 = vmax.f32 %v381, 0.0
    %v406 = vmax.f32 %v383, 0.0
    %v407 = vmax.f32 %v387, 0.0
    %v408 = vmax.f32 %v389, 0.0
    %v409 = vmax.f32 %v391, 0.0
    %v410 = vmax.f32 %v393, 0.0
    %s411 = scalar_lea.vmem %s1, 64
    %v412 = vld [vmem:[%s411] sm:$0xf]
    %v413 = vld [vmem:[%s411 + $0x4] sm:$0xf]
    %v414 = vld [vmem:[%s411 + $0x8] sm:$0xf]
    %v415 = vld [vmem:[%s411 + $0xc] sm:$0xf]
    %v416 = vld [vmem:[%s411 + $0x10] sm:$0xf]
    %v417 = vld [vmem:[%s411 + $0x14] sm:$0xf]
    %v418 = vld [vmem:[%s411 + $0x18] sm:$0xf]
    %v419 = vld [vmem:[%s411 + $0x1c] sm:$0xf]
    %v420 = vpack.c.bf16 %v397, %v395
    %v421 = vpack.c.bf16 %v398, %v396
    %v422 = vpack.c.bf16 %v401, %v399
    %v423 = vpack.c.bf16 %v402, %v400
    %v424 = vpack.c.bf16 %v405, %v403
    %v425 = vpack.c.bf16 %v406, %v404
    %v426 = vpack.c.bf16 %v409, %v407
    %v427 = vpack.c.bf16 %v410, %v408
    %s428 = scalar_lea.vmem %s2, 128
    %v429 = vld [vmem:[%s428] sm:$0xff]
    %v430 = vld [vmem:[%s428 + $0x8] sm:$0xff]
    %v431 = vld [vmem:[%s428 + $0x10] sm:$0xff]
    %v432 = vld [vmem:[%s428 + $0x18] sm:$0xff]
    %v433 = vld [vmem:[%s428 + $0x20] sm:$0xff]
    %v434 = vld [vmem:[%s428 + $0x28] sm:$0xff]
    %v435 = vld [vmem:[%s428 + $0x30] sm:$0xff]
    %v436 = vld [vmem:[%s428 + $0x38] sm:$0xff]
    %438 = vset.pattern.permute.xlu0 0
    %439 = vperm.xlu0 %438, %v429
    %v440 = vpop.permute.xlu0 %439
    %443 = vset.pattern.permute.xlu0 0
    %444 = vperm.xlu0 %443, %v430
    %v445 = vpop.permute.xlu0 %444
    %448 = vset.pattern.permute.xlu0 0
    %449 = vperm.xlu0 %448, %v431
    %v450 = vpop.permute.xlu0 %449
    %453 = vset.pattern.permute.xlu0 0
    %454 = vperm.xlu0 %453, %v432
    %v455 = vpop.permute.xlu0 %454
    %458 = vset.pattern.permute.xlu0 0
    %459 = vperm.xlu0 %458, %v433
    %v460 = vpop.permute.xlu0 %459
    %463 = vset.pattern.permute.xlu0 0
    %464 = vperm.xlu0 %463, %v434
    %v465 = vpop.permute.xlu0 %464
    %468 = vset.pattern.permute.xlu0 0
    %469 = vperm.xlu0 %468, %v435
    %v470 = vpop.permute.xlu0 %469
    %473 = vset.pattern.permute.xlu0 0
    %474 = vperm.xlu0 %473, %v436
    %v475 = vpop.permute.xlu0 %474
    %v485 = vunpack.c.l.b16 %v412
    %v486 = vunpack.c.l.b16 %v413
    %v487 = vunpack.c.l.b16 %v414
    %v488 = vunpack.c.l.b16 %v415
    %v489 = vunpack.c.l.b16 %v416
    %v490 = vunpack.c.l.b16 %v417
    %v491 = vunpack.c.l.b16 %v418
    %v492 = vunpack.c.l.b16 %v419
    %v493 = vpack.c.b16 %v486, %v485
    %v494 = vpack.c.b16 %v488, %v487
    %v495 = vpack.c.b16 %v490, %v489
    %v496 = vpack.c.b16 %v492, %v491
    %v498 = vsel %vm122, %v493, 0
    %v501 = vsel %vm122, %v494, 0
    %v504 = vsel %vm122, %v495, 0
    %v507 = vsel %vm122, %v496, 0
    %509 = vmatprep.subr.bf16.mxu0 %v421
    %510 = vmatpush1.bf16.msra.mxu0 %v420
    %511 = vmatprep.subr.bf16.mxu0 %v423
    %512 = vmatpush1.bf16.msra.mxu0 %v422
    %513 = vmatprep.subr.bf16.mxu0 %v425
    %514 = vmatpush1.bf16.msra.mxu0 %v424
    %515 = vmatprep.subr.bf16.mxu0 %v427
    %516 = vmatpush1.bf16.msra.mxu0 %v426
    %517 = vmatprep.subr.bf16.mxu0 0
    %518 = vmatpush1.bf16.msra.mxu0 0
    %519 = vmatprep.subr.bf16.mxu0 0
    %520 = vmatpush1.bf16.msra.mxu0 0
    %521 = vmatprep.subr.bf16.mxu0 0
    %522 = vmatpush1.bf16.msra.mxu0 0
    %523 = vmatprep.subr.bf16.mxu0 0
    %524 = vmatpush1.bf16.msra.mxu0 0
    %525 = vmatprep.subr.bf16.mxu0 0
    %526 = vmatpush1.bf16.msra.mxu0 0
    %527 = vmatprep.subr.bf16.mxu0 0
    %528 = vmatpush1.bf16.msra.mxu0 0
    %529 = vmatprep.subr.bf16.mxu0 0
    %530 = vmatpush1.bf16.msra.mxu0 0
    %531 = vmatprep.subr.bf16.mxu0 0
    %532 = vmatpush1.bf16.msra.mxu0 0
    %533 = vmatprep.subr.bf16.mxu0 0
    %534 = vmatpush1.bf16.msra.mxu0 0
    %535 = vmatprep.subr.bf16.mxu0 0
    %536 = vmatpush1.bf16.msra.mxu0 0
    %537 = vmatprep.subr.bf16.mxu0 0
    %538 = vmatpush1.bf16.msra.mxu0 0
    %539 = vmatprep.subr.bf16.mxu0 0
    %540 = vmatpush1.bf16.msra.mxu0 0
    %541 = vmatprep.mubr.bf16.mxu0 0
    %542 = vmatmul.mubr.bf16.gmra.mrb[0].mxu0 %v498
    %v543 = vpop.f32.mrb[0].mxu0
    %v544 = vadd.f32 %v440, %v543
    %v545 = vpop.f32.mrb[0].mxu0
    %v546 = vadd.f32 %v440, %v545
    %v547 = vpop.f32.mrb[0].mxu0
    %v548 = vadd.f32 %v445, %v547
    %v549 = vpop.f32.mrb[0].mxu0
    %v550 = vadd.f32 %v445, %v549
    %551 = vmatprep.mubr.bf16.mxu0 0
    %552 = vmatmul.mubr.bf16.gmra.mrb[0].mxu0 %v501
    %v553 = vpop.f32.mrb[0].mxu0
    %v554 = vadd.f32 %v450, %v553
    %v555 = vpop.f32.mrb[0].mxu0
    %v556 = vadd.f32 %v450, %v555
    %v557 = vpop.f32.mrb[0].mxu0
    %v558 = vadd.f32 %v455, %v557
    %v559 = vpop.f32.mrb[0].mxu0
    %v560 = vadd.f32 %v455, %v559
    %561 = vmatprep.mubr.bf16.mxu0 0
    %562 = vmatmul.mubr.bf16.gmra.mrb[0].mxu0 %v504
    %v563 = vpop.f32.mrb[0].mxu0
    %v564 = vadd.f32 %v460, %v563
    %v565 = vpop.f32.mrb[0].mxu0
    %v566 = vadd.f32 %v460, %v565
    %v567 = vpop.f32.mrb[0].mxu0
    %v568 = vadd.f32 %v465, %v567
    %v569 = vpop.f32.mrb[0].mxu0
    %v570 = vadd.f32 %v465, %v569
    %571 = vmatprep.mubr.bf16.mxu0 0
    %572 = vmatmul.mubr.bf16.gmra.mrb[0].mxu0 %v507
    %v573 = vpop.f32.mrb[0].mxu0
    %v574 = vadd.f32 %v470, %v573
    %v575 = vpop.f32.mrb[0].mxu0
    %v576 = vadd.f32 %v470, %v575
    %v577 = vpop.f32.mrb[0].mxu0
    %v578 = vadd.f32 %v475, %v577
    %v579 = vpop.f32.mrb[0].mxu0
    %v580 = vadd.f32 %v475, %v579
    %581 = vdwg.mxu0
    %v582 = vadd.f32 %v544, %v22
    %v583 = vadd.f32 %v546, %v23
    %v584 = vadd.f32 %v548, %v24
    %v585 = vadd.f32 %v550, %v25
    %v586 = vadd.f32 %v554, %v26
    %v587 = vadd.f32 %v556, %v27
    %v588 = vadd.f32 %v558, %v28
    %v589 = vadd.f32 %v560, %v29
    %v590 = vadd.f32 %v564, %v30
    %v591 = vadd.f32 %v566, %v31
    %v592 = vadd.f32 %v568, %v32
    %v593 = vadd.f32 %v570, %v33
    %v594 = vadd.f32 %v574, %v34
    %v595 = vadd.f32 %v576, %v35
    %v596 = vadd.f32 %v578, %v36
    %v597 = vadd.f32 %v580, %v37
    %v598 = vadd.f32 %v582, %v584
    %v599 = vadd.f32 %v598, %v586
    %v600 = vadd.f32 %v599, %v588
    %v601 = vadd.f32 %v600, %v590
    %v602 = vadd.f32 %v601, %v592
    %v603 = vadd.f32 %v602, %v594
    %v604 = vadd.f32 %v603, %v596
    %v605 = vrot.slane %v604, 4
    %v606 = vadd.f32 %v604, %v605
    %v607 = vrot.slane %v606, 2
    %v608 = vadd.f32 %v606, %v607
    %v609 = vrot.slane %v608, 1
    %v610 = vadd.f32 %v608, %v609
    %v611 = vadd.f32 %v583, %v585
    %v612 = vadd.f32 %v611, %v587
    %v613 = vadd.f32 %v612, %v589
    %v614 = vadd.f32 %v613, %v591
    %v615 = vadd.f32 %v614, %v593
    %v616 = vadd.f32 %v615, %v595
    %v617 = vadd.f32 %v616, %v597
    %v618 = vrot.slane %v617, 4
    %v619 = vadd.f32 %v617, %v618
    %v620 = vrot.slane %v619, 2
    %v621 = vadd.f32 %v619, %v620
    %v622 = vrot.slane %v621, 1
    %v623 = vadd.f32 %v621, %v622
    %v624 = vmul.f32 %v582, %v582
    %v625 = vmul.f32 %v583, %v583
    %v626 = vmul.f32 %v584, %v584
    %v627 = vmul.f32 %v585, %v585
    %v628 = vmul.f32 %v586, %v586
    %v629 = vmul.f32 %v587, %v587
    %v630 = vmul.f32 %v588, %v588
    %v631 = vmul.f32 %v589, %v589
    %v632 = vmul.f32 %v590, %v590
    %v633 = vmul.f32 %v591, %v591
    %v634 = vmul.f32 %v592, %v592
    %v635 = vmul.f32 %v593, %v593
    %v636 = vmul.f32 %v594, %v594
    %v637 = vmul.f32 %v595, %v595
    %v638 = vmul.f32 %v596, %v596
    %v639 = vmul.f32 %v597, %v597
    %v640 = vadd.f32 %v624, %v626
    %v641 = vadd.f32 %v640, %v628
    %v642 = vadd.f32 %v641, %v630
    %v643 = vadd.f32 %v642, %v632
    %v644 = vadd.f32 %v643, %v634
    %v645 = vadd.f32 %v644, %v636
    %v646 = vadd.f32 %v645, %v638
    %v647 = vrot.slane %v646, 4
    %v648 = vadd.f32 %v646, %v647
    %v649 = vrot.slane %v648, 2
    %v650 = vadd.f32 %v648, %v649
    %v651 = vrot.slane %v650, 1
    %v652 = vadd.f32 %v650, %v651
    %v653 = vadd.f32 %v625, %v627
    %v654 = vadd.f32 %v653, %v629
    %v655 = vadd.f32 %v654, %v631
    %v656 = vadd.f32 %v655, %v633
    %v657 = vadd.f32 %v656, %v635
    %v658 = vadd.f32 %v657, %v637
    %v659 = vadd.f32 %v658, %v639
    %v660 = vrot.slane %v659, 4
    %v661 = vadd.f32 %v659, %v660
    %v662 = vrot.slane %v661, 2
    %v663 = vadd.f32 %v661, %v662
    %v664 = vrot.slane %v663, 1
    %v665 = vadd.f32 %v663, %v664
    %v666 = vmul.f32 %v610, 0.015625
    %v667 = vmul.f32 %v623, 0.015625
    %v668 = vmul.f32 %v652, 0.015625
    %v669 = vmul.f32 %v665, 0.015625
    %v670 = vmul.f32 %v666, %v666
    %v671 = vmul.f32 %v667, %v667
    %v672 = vsub.f32 %v668, %v670
    %v673 = vsub.f32 %v669, %v671
    %v674 = vadd.f32 %v672, 1e-05
    %v675 = vadd.f32 %v673, 1e-05
    %v676 = vrsqrt.pop %v674
    %v677 = vrsqrt.pop %v675
    %v678 = vsub.f32 %v582, %v666
    %v679 = vsub.f32 %v583, %v667
    %v680 = vsub.f32 %v584, %v666
    %v681 = vsub.f32 %v585, %v667
    %v682 = vsub.f32 %v586, %v666
    %v683 = vsub.f32 %v587, %v667
    %v684 = vsub.f32 %v588, %v666
    %v685 = vsub.f32 %v589, %v667
    %v686 = vsub.f32 %v590, %v666
    %v687 = vsub.f32 %v591, %v667
    %v688 = vsub.f32 %v592, %v666
    %v689 = vsub.f32 %v593, %v667
    %v690 = vsub.f32 %v594, %v666
    %v691 = vsub.f32 %v595, %v667
    %v692 = vsub.f32 %v596, %v666
    %v693 = vsub.f32 %v597, %v667
    %v694 = vmul.f32 %v678, %v676
    %v695 = vmul.f32 %v679, %v677
    %v696 = vmul.f32 %v680, %v676
    %v697 = vmul.f32 %v681, %v677
    %v698 = vmul.f32 %v682, %v676
    %v699 = vmul.f32 %v683, %v677
    %v700 = vmul.f32 %v684, %v676
    %v701 = vmul.f32 %v685, %v677
    %v702 = vmul.f32 %v686, %v676
    %v703 = vmul.f32 %v687, %v677
    %v704 = vmul.f32 %v688, %v676
    %v705 = vmul.f32 %v689, %v677
    %v706 = vmul.f32 %v690, %v676
    %v707 = vmul.f32 %v691, %v677
    %v708 = vmul.f32 %v692, %v676
    %v709 = vmul.f32 %v693, %v677
    %v710 = vld [vmem:[%s3] sm:$0xff]
    %v711 = vld [vmem:[%s3 + $0x8] sm:$0xff]
    %v712 = vld [vmem:[%s3 + $0x10] sm:$0xff]
    %v713 = vld [vmem:[%s3 + $0x18] sm:$0xff]
    %v714 = vld [vmem:[%s3 + $0x20] sm:$0xff]
    %v715 = vld [vmem:[%s3 + $0x28] sm:$0xff]
    %v716 = vld [vmem:[%s3 + $0x30] sm:$0xff]
    %v717 = vld [vmem:[%s3 + $0x38] sm:$0xff]
    %719 = vset.pattern.permute.xlu0 0
    %720 = vperm.xlu0 %719, %v710
    %v721 = vpop.permute.xlu0 %720
    %724 = vset.pattern.permute.xlu0 0
    %725 = vperm.xlu0 %724, %v711
    %v726 = vpop.permute.xlu0 %725
    %729 = vset.pattern.permute.xlu0 0
    %730 = vperm.xlu0 %729, %v712
    %v731 = vpop.permute.xlu0 %730
    %734 = vset.pattern.permute.xlu0 0
    %735 = vperm.xlu0 %734, %v713
    %v736 = vpop.permute.xlu0 %735
    %739 = vset.pattern.permute.xlu0 0
    %740 = vperm.xlu0 %739, %v714
    %v741 = vpop.permute.xlu0 %740
    %744 = vset.pattern.permute.xlu0 0
    %745 = vperm.xlu0 %744, %v715
    %v746 = vpop.permute.xlu0 %745
    %749 = vset.pattern.permute.xlu0 0
    %750 = vperm.xlu0 %749, %v716
    %v751 = vpop.permute.xlu0 %750
    %754 = vset.pattern.permute.xlu0 0
    %755 = vperm.xlu0 %754, %v717
    %v756 = vpop.permute.xlu0 %755
    %v758 = vmul.f32 %v694, %v721
    %v759 = vmul.f32 %v695, %v721
    %v760 = vmul.f32 %v696, %v726
    %v761 = vmul.f32 %v697, %v726
    %v762 = vmul.f32 %v698, %v731
    %v763 = vmul.f32 %v699, %v731
    %v764 = vmul.f32 %v700, %v736
    %v765 = vmul.f32 %v701, %v736
    %v766 = vmul.f32 %v702, %v741
    %v767 = vmul.f32 %v703, %v741
    %v768 = vmul.f32 %v704, %v746
    %v769 = vmul.f32 %v705, %v746
    %v770 = vmul.f32 %v706, %v751
    %v771 = vmul.f32 %v707, %v751
    %v772 = vmul.f32 %v708, %v756
    %v773 = vmul.f32 %v709, %v756
    %v774 = vld [vmem:[%s4] sm:$0xff]
    %v775 = vld [vmem:[%s4 + $0x8] sm:$0xff]
    %v776 = vld [vmem:[%s4 + $0x10] sm:$0xff]
    %v777 = vld [vmem:[%s4 + $0x18] sm:$0xff]
    %v778 = vld [vmem:[%s4 + $0x20] sm:$0xff]
    %v779 = vld [vmem:[%s4 + $0x28] sm:$0xff]
    %v780 = vld [vmem:[%s4 + $0x30] sm:$0xff]
    %v781 = vld [vmem:[%s4 + $0x38] sm:$0xff]
    %783 = vset.pattern.permute.xlu0 0
    %784 = vperm.xlu0 %783, %v774
    %v785 = vpop.permute.xlu0 %784
    %788 = vset.pattern.permute.xlu0 0
    %789 = vperm.xlu0 %788, %v775
    %v790 = vpop.permute.xlu0 %789
    %793 = vset.pattern.permute.xlu0 0
    %794 = vperm.xlu0 %793, %v776
    %v795 = vpop.permute.xlu0 %794
    %798 = vset.pattern.permute.xlu0 0
    %799 = vperm.xlu0 %798, %v777
    %v800 = vpop.permute.xlu0 %799
    %803 = vset.pattern.permute.xlu0 0
    %804 = vperm.xlu0 %803, %v778
    %v805 = vpop.permute.xlu0 %804
    %808 = vset.pattern.permute.xlu0 0
    %809 = vperm.xlu0 %808, %v779
    %v810 = vpop.permute.xlu0 %809
    %813 = vset.pattern.permute.xlu0 0
    %814 = vperm.xlu0 %813, %v780
    %v815 = vpop.permute.xlu0 %814
    %818 = vset.pattern.permute.xlu0 0
    %819 = vperm.xlu0 %818, %v781
    %v820 = vpop.permute.xlu0 %819
    %v822 = vadd.f32 %v758, %v785
    %v823 = vadd.f32 %v759, %v785
    %v824 = vadd.f32 %v760, %v790
    %v825 = vadd.f32 %v761, %v790
    %v826 = vadd.f32 %v762, %v795
    %v827 = vadd.f32 %v763, %v795
    %v828 = vadd.f32 %v764, %v800
    %v829 = vadd.f32 %v765, %v800
    %v830 = vadd.f32 %v766, %v805
    %v831 = vadd.f32 %v767, %v805
    %v832 = vadd.f32 %v768, %v810
    %v833 = vadd.f32 %v769, %v810
    %v834 = vadd.f32 %v770, %v815
    %v835 = vadd.f32 %v771, %v815
    %v836 = vadd.f32 %v772, %v820
    %v837 = vadd.f32 %v773, %v820
    %s838 = scalar_lea.vmem %s1, 96
    %v839 = vld [vmem:[%s838] sm:$0xf]
    %v840 = vld [vmem:[%s838 + $0x4] sm:$0xf]
    %v841 = vld [vmem:[%s838 + $0x8] sm:$0xf]
    %v842 = vld [vmem:[%s838 + $0xc] sm:$0xf]
    %v843 = vld [vmem:[%s838 + $0x10] sm:$0xf]
    %v844 = vld [vmem:[%s838 + $0x14] sm:$0xf]
    %v845 = vld [vmem:[%s838 + $0x18] sm:$0xf]
    %v846 = vld [vmem:[%s838 + $0x1c] sm:$0xf]
    %v847 = vpack.c.bf16 %v824, %v822
    %v848 = vpack.c.bf16 %v825, %v823
    %v849 = vpack.c.bf16 %v828, %v826
    %v850 = vpack.c.bf16 %v829, %v827
    %v851 = vpack.c.bf16 %v832, %v830
    %v852 = vpack.c.bf16 %v833, %v831
    %v853 = vpack.c.bf16 %v836, %v834
    %v854 = vpack.c.bf16 %v837, %v835
    %s855 = scalar_lea.vmem %s2, 192
    %v856 = vld [vmem:[%s855] sm:$0xff]
    %v857 = vld [vmem:[%s855 + $0x8] sm:$0xff]
    %v858 = vld [vmem:[%s855 + $0x10] sm:$0xff]
    %v859 = vld [vmem:[%s855 + $0x18] sm:$0xff]
    %v860 = vld [vmem:[%s855 + $0x20] sm:$0xff]
    %v861 = vld [vmem:[%s855 + $0x28] sm:$0xff]
    %v862 = vld [vmem:[%s855 + $0x30] sm:$0xff]
    %v863 = vld [vmem:[%s855 + $0x38] sm:$0xff]
    %865 = vset.pattern.permute.xlu0 0
    %866 = vperm.xlu0 %865, %v856
    %v867 = vpop.permute.xlu0 %866
    %870 = vset.pattern.permute.xlu0 0
    %871 = vperm.xlu0 %870, %v857
    %v872 = vpop.permute.xlu0 %871
    %875 = vset.pattern.permute.xlu0 0
    %876 = vperm.xlu0 %875, %v858
    %v877 = vpop.permute.xlu0 %876
    %880 = vset.pattern.permute.xlu0 0
    %881 = vperm.xlu0 %880, %v859
    %v882 = vpop.permute.xlu0 %881
    %885 = vset.pattern.permute.xlu0 0
    %886 = vperm.xlu0 %885, %v860
    %v887 = vpop.permute.xlu0 %886
    %890 = vset.pattern.permute.xlu0 0
    %891 = vperm.xlu0 %890, %v861
    %v892 = vpop.permute.xlu0 %891
    %895 = vset.pattern.permute.xlu0 0
    %896 = vperm.xlu0 %895, %v862
    %v897 = vpop.permute.xlu0 %896
    %900 = vset.pattern.permute.xlu0 0
    %901 = vperm.xlu0 %900, %v863
    %v902 = vpop.permute.xlu0 %901
    %v912 = vunpack.c.l.b16 %v839
    %v913 = vunpack.c.l.b16 %v840
    %v914 = vunpack.c.l.b16 %v841
    %v915 = vunpack.c.l.b16 %v842
    %v916 = vunpack.c.l.b16 %v843
    %v917 = vunpack.c.l.b16 %v844
    %v918 = vunpack.c.l.b16 %v845
    %v919 = vunpack.c.l.b16 %v846
    %v920 = vpack.c.b16 %v913, %v912
    %v921 = vpack.c.b16 %v915, %v914
    %v922 = vpack.c.b16 %v917, %v916
    %v923 = vpack.c.b16 %v919, %v918
    %v925 = vsel %vm122, %v920, 0
    %v928 = vsel %vm122, %v921, 0
    %v931 = vsel %vm122, %v922, 0
    %v934 = vsel %vm122, %v923, 0
    %936 = vmatprep.subr.bf16.mxu0 %v848
    %937 = vmatpush1.bf16.msra.mxu0 %v847
    %938 = vmatprep.subr.bf16.mxu0 %v850
    %939 = vmatpush1.bf16.msra.mxu0 %v849
    %940 = vmatprep.subr.bf16.mxu0 %v852
    %941 = vmatpush1.bf16.msra.mxu0 %v851
    %942 = vmatprep.subr.bf16.mxu0 %v854
    %943 = vmatpush1.bf16.msra.mxu0 %v853
    %944 = vmatprep.subr.bf16.mxu0 0
    %945 = vmatpush1.bf16.msra.mxu0 0
    %946 = vmatprep.subr.bf16.mxu0 0
    %947 = vmatpush1.bf16.msra.mxu0 0
    %948 = vmatprep.subr.bf16.mxu0 0
    %949 = vmatpush1.bf16.msra.mxu0 0
    %950 = vmatprep.subr.bf16.mxu0 0
    %951 = vmatpush1.bf16.msra.mxu0 0
    %952 = vmatprep.subr.bf16.mxu0 0
    %953 = vmatpush1.bf16.msra.mxu0 0
    %954 = vmatprep.subr.bf16.mxu0 0
    %955 = vmatpush1.bf16.msra.mxu0 0
    %956 = vmatprep.subr.bf16.mxu0 0
    %957 = vmatpush1.bf16.msra.mxu0 0
    %958 = vmatprep.subr.bf16.mxu0 0
    %959 = vmatpush1.bf16.msra.mxu0 0
    %960 = vmatprep.subr.bf16.mxu0 0
    %961 = vmatpush1.bf16.msra.mxu0 0
    %962 = vmatprep.subr.bf16.mxu0 0
    %963 = vmatpush1.bf16.msra.mxu0 0
    %964 = vmatprep.subr.bf16.mxu0 0
    %965 = vmatpush1.bf16.msra.mxu0 0
    %966 = vmatprep.subr.bf16.mxu0 0
    %967 = vmatpush1.bf16.msra.mxu0 0
    %968 = vmatprep.mubr.bf16.mxu0 0
    %969 = vmatmul.mubr.bf16.gmra.mrb[0].mxu0 %v925
    %v970 = vpop.f32.mrb[0].mxu0
    %v971 = vadd.f32 %v867, %v970
    %v972 = vpop.f32.mrb[0].mxu0
    %v973 = vadd.f32 %v867, %v972
    %v974 = vpop.f32.mrb[0].mxu0
    %v975 = vadd.f32 %v872, %v974
    %v976 = vpop.f32.mrb[0].mxu0
    %v977 = vadd.f32 %v872, %v976
    %978 = vmatprep.mubr.bf16.mxu0 0
    %979 = vmatmul.mubr.bf16.gmra.mrb[0].mxu0 %v928
    %v980 = vpop.f32.mrb[0].mxu0
    %v981 = vadd.f32 %v877, %v980
    %v982 = vpop.f32.mrb[0].mxu0
    %v983 = vadd.f32 %v877, %v982
    %v984 = vpop.f32.mrb[0].mxu0
    %v985 = vadd.f32 %v882, %v984
    %v986 = vpop.f32.mrb[0].mxu0
    %v987 = vadd.f32 %v882, %v986
    %988 = vmatprep.mubr.bf16.mxu0 0
    %989 = vmatmul.mubr.bf16.gmra.mrb[0].mxu0 %v931
    %v990 = vpop.f32.mrb[0].mxu0
    %v991 = vadd.f32 %v887, %v990
    %v992 = vpop.f32.mrb[0].mxu0
    %v993 = vadd.f32 %v887, %v992
    %v994 = vpop.f32.mrb[0].mxu0
    %v995 = vadd.f32 %v892, %v994
    %v996 = vpop.f32.mrb[0].mxu0
    %v997 = vadd.f32 %v892, %v996
    %998 = vmatprep.mubr.bf16.mxu0 0
    %999 = vmatmul.mubr.bf16.gmra.mrb[0].mxu0 %v934
    %v1000 = vpop.f32.mrb[0].mxu0
    %v1001 = vadd.f32 %v897, %v1000
    %v1002 = vpop.f32.mrb[0].mxu0
    %v1003 = vadd.f32 %v897, %v1002
    %v1004 = vpop.f32.mrb[0].mxu0
    %v1005 = vadd.f32 %v902, %v1004
    %v1006 = vpop.f32.mrb[0].mxu0
    %v1007 = vadd.f32 %v902, %v1006
    %1008 = vdwg.mxu0
    %v1009 = vmax.f32 %v971, 0.0
    %v1010 = vmax.f32 %v973, 0.0
    %v1011 = vmax.f32 %v975, 0.0
    %v1012 = vmax.f32 %v977, 0.0
    %v1013 = vmax.f32 %v981, 0.0
    %v1014 = vmax.f32 %v983, 0.0
    %v1015 = vmax.f32 %v985, 0.0
    %v1016 = vmax.f32 %v987, 0.0
    %v1017 = vmax.f32 %v991, 0.0
    %v1018 = vmax.f32 %v993, 0.0
    %v1019 = vmax.f32 %v995, 0.0
    %v1020 = vmax.f32 %v997, 0.0
    %v1021 = vmax.f32 %v1001, 0.0
    %v1022 = vmax.f32 %v1003, 0.0
    %v1023 = vmax.f32 %v1005, 0.0
    %v1024 = vmax.f32 %v1007, 0.0
    %s1025 = scalar_lea.vmem %s1, 128
    %v1026 = vld [vmem:[%s1025] sm:$0xf]
    %v1027 = vld [vmem:[%s1025 + $0x4] sm:$0xf]
    %v1028 = vld [vmem:[%s1025 + $0x8] sm:$0xf]
    %v1029 = vld [vmem:[%s1025 + $0xc] sm:$0xf]
    %v1030 = vld [vmem:[%s1025 + $0x10] sm:$0xf]
    %v1031 = vld [vmem:[%s1025 + $0x14] sm:$0xf]
    %v1032 = vld [vmem:[%s1025 + $0x18] sm:$0xf]
    %v1033 = vld [vmem:[%s1025 + $0x1c] sm:$0xf]
    %v1034 = vpack.c.bf16 %v1011, %v1009
    %v1035 = vpack.c.bf16 %v1012, %v1010
    %v1036 = vpack.c.bf16 %v1015, %v1013
    %v1037 = vpack.c.bf16 %v1016, %v1014
    %v1038 = vpack.c.bf16 %v1019, %v1017
    %v1039 = vpack.c.bf16 %v1020, %v1018
    %v1040 = vpack.c.bf16 %v1023, %v1021
    %v1041 = vpack.c.bf16 %v1024, %v1022
    %s1042 = scalar_lea.vmem %s2, 256
    %v1043 = vld [vmem:[%s1042] sm:$0xff]
    %v1044 = vld [vmem:[%s1042 + $0x8] sm:$0xff]
    %v1045 = vld [vmem:[%s1042 + $0x10] sm:$0xff]
    %v1046 = vld [vmem:[%s1042 + $0x18] sm:$0xff]
    %v1047 = vld [vmem:[%s1042 + $0x20] sm:$0xff]
    %v1048 = vld [vmem:[%s1042 + $0x28] sm:$0xff]
    %v1049 = vld [vmem:[%s1042 + $0x30] sm:$0xff]
    %v1050 = vld [vmem:[%s1042 + $0x38] sm:$0xff]
    %1052 = vset.pattern.permute.xlu0 0
    %1053 = vperm.xlu0 %1052, %v1043
    %v1054 = vpop.permute.xlu0 %1053
    %1057 = vset.pattern.permute.xlu0 0
    %1058 = vperm.xlu0 %1057, %v1044
    %v1059 = vpop.permute.xlu0 %1058
    %1062 = vset.pattern.permute.xlu0 0
    %1063 = vperm.xlu0 %1062, %v1045
    %v1064 = vpop.permute.xlu0 %1063
    %1067 = vset.pattern.permute.xlu0 0
    %1068 = vperm.xlu0 %1067, %v1046
    %v1069 = vpop.permute.xlu0 %1068
    %1072 = vset.pattern.permute.xlu0 0
    %1073 = vperm.xlu0 %1072, %v1047
    %v1074 = vpop.permute.xlu0 %1073
    %1077 = vset.pattern.permute.xlu0 0
    %1078 = vperm.xlu0 %1077, %v1048
    %v1079 = vpop.permute.xlu0 %1078
    %1082 = vset.pattern.permute.xlu0 0
    %1083 = vperm.xlu0 %1082, %v1049
    %v1084 = vpop.permute.xlu0 %1083
    %1087 = vset.pattern.permute.xlu0 0
    %1088 = vperm.xlu0 %1087, %v1050
    %v1089 = vpop.permute.xlu0 %1088
    %v1099 = vunpack.c.l.b16 %v1026
    %v1100 = vunpack.c.l.b16 %v1027
    %v1101 = vunpack.c.l.b16 %v1028
    %v1102 = vunpack.c.l.b16 %v1029
    %v1103 = vunpack.c.l.b16 %v1030
    %v1104 = vunpack.c.l.b16 %v1031
    %v1105 = vunpack.c.l.b16 %v1032
    %v1106 = vunpack.c.l.b16 %v1033
    %v1107 = vpack.c.b16 %v1100, %v1099
    %v1108 = vpack.c.b16 %v1102, %v1101
    %v1109 = vpack.c.b16 %v1104, %v1103
    %v1110 = vpack.c.b16 %v1106, %v1105
    %v1112 = vsel %vm122, %v1107, 0
    %v1115 = vsel %vm122, %v1108, 0
    %v1118 = vsel %vm122, %v1109, 0
    %v1121 = vsel %vm122, %v1110, 0
    %1123 = vmatprep.subr.bf16.mxu0 %v1035
    %1124 = vmatpush1.bf16.msra.mxu0 %v1034
    %1125 = vmatprep.subr.bf16.mxu0 %v1037
    %1126 = vmatpush1.bf16.msra.mxu0 %v1036
    %1127 = vmatprep.subr.bf16.mxu0 %v1039
    %1128 = vmatpush1.bf16.msra.mxu0 %v1038
    %1129 = vmatprep.subr.bf16.mxu0 %v1041
    %1130 = vmatpush1.bf16.msra.mxu0 %v1040
    %1131 = vmatprep.subr.bf16.mxu0 0
    %1132 = vmatpush1.bf16.msra.mxu0 0
    %1133 = vmatprep.subr.bf16.mxu0 0
    %1134 = vmatpush1.bf16.msra.mxu0 0
    %1135 = vmatprep.subr.bf16.mxu0 0
    %1136 = vmatpush1.bf16.msra.mxu0 0
    %1137 = vmatprep.subr.bf16.mxu0 0
    %1138 = vmatpush1.bf16.msra.mxu0 0
    %1139 = vmatprep.subr.bf16.mxu0 0
    %1140 = vmatpush1.bf16.msra.mxu0 0
    %1141 = vmatprep.subr.bf16.mxu0 0
    %1142 = vmatpush1.bf16.msra.mxu0 0
    %1143 = vmatprep.subr.bf16.mxu0 0
    %1144 = vmatpush1.bf16.msra.mxu0 0
    %1145 = vmatprep.subr.bf16.mxu0 0
    %1146 = vmatpush1.bf16.msra.mxu0 0
    %1147 = vmatprep.subr.bf16.mxu0 0
    %1148 = vmatpush1.bf16.msra.mxu0 0
    %1149 = vmatprep.subr.bf16.mxu0 0
    %1150 = vmatpush1.bf16.msra.mxu0 0
    %1151 = vmatprep.subr.bf16.mxu0 0
    %1152 = vmatpush1.bf16.msra.mxu0 0
    %1153 = vmatprep.subr.bf16.mxu0 0
    %1154 = vmatpush1.bf16.msra.mxu0 0
    %1155 = vmatprep.mubr.bf16.mxu0 0
    %1156 = vmatmul.mubr.bf16.gmra.mrb[0].mxu0 %v1112
    %v1157 = vpop.f32.mrb[0].mxu0
    %v1158 = vadd.f32 %v1054, %v1157
    %v1159 = vpop.f32.mrb[0].mxu0
    %v1160 = vadd.f32 %v1054, %v1159
    %v1161 = vpop.f32.mrb[0].mxu0
    %v1162 = vadd.f32 %v1059, %v1161
    %v1163 = vpop.f32.mrb[0].mxu0
    %v1164 = vadd.f32 %v1059, %v1163
    %1165 = vmatprep.mubr.bf16.mxu0 0
    %1166 = vmatmul.mubr.bf16.gmra.mrb[0].mxu0 %v1115
    %v1167 = vpop.f32.mrb[0].mxu0
    %v1168 = vadd.f32 %v1064, %v1167
    %v1169 = vpop.f32.mrb[0].mxu0
    %v1170 = vadd.f32 %v1064, %v1169
    %v1171 = vpop.f32.mrb[0].mxu0
    %v1172 = vadd.f32 %v1069, %v1171
    %v1173 = vpop.f32.mrb[0].mxu0
    %v1174 = vadd.f32 %v1069, %v1173
    %1175 = vmatprep.mubr.bf16.mxu0 0
    %1176 = vmatmul.mubr.bf16.gmra.mrb[0].mxu0 %v1118
    %v1177 = vpop.f32.mrb[0].mxu0
    %v1178 = vadd.f32 %v1074, %v1177
    %v1179 = vpop.f32.mrb[0].mxu0
    %v1180 = vadd.f32 %v1074, %v1179
    %v1181 = vpop.f32.mrb[0].mxu0
    %v1182 = vadd.f32 %v1079, %v1181
    %v1183 = vpop.f32.mrb[0].mxu0
    %v1184 = vadd.f32 %v1079, %v1183
    %1185 = vmatprep.mubr.bf16.mxu0 0
    %1186 = vmatmul.mubr.bf16.gmra.mrb[0].mxu0 %v1121
    %v1187 = vpop.f32.mrb[0].mxu0
    %v1188 = vadd.f32 %v1084, %v1187
    %v1189 = vpop.f32.mrb[0].mxu0
    %v1190 = vadd.f32 %v1084, %v1189
    %v1191 = vpop.f32.mrb[0].mxu0
    %v1192 = vadd.f32 %v1089, %v1191
    %v1193 = vpop.f32.mrb[0].mxu0
    %v1194 = vadd.f32 %v1089, %v1193
    %1195 = vdwg.mxu0
    %v1196 = vmax.f32 %v1158, 0.0
    %v1197 = vmax.f32 %v1160, 0.0
    %v1198 = vmax.f32 %v1162, 0.0
    %v1199 = vmax.f32 %v1164, 0.0
    %v1200 = vmax.f32 %v1168, 0.0
    %v1201 = vmax.f32 %v1170, 0.0
    %v1202 = vmax.f32 %v1172, 0.0
    %v1203 = vmax.f32 %v1174, 0.0
    %v1204 = vmax.f32 %v1178, 0.0
    %v1205 = vmax.f32 %v1180, 0.0
    %v1206 = vmax.f32 %v1182, 0.0
    %v1207 = vmax.f32 %v1184, 0.0
    %v1208 = vmax.f32 %v1188, 0.0
    %v1209 = vmax.f32 %v1190, 0.0
    %v1210 = vmax.f32 %v1192, 0.0
    %v1211 = vmax.f32 %v1194, 0.0
    %s1212 = scalar_lea.vmem %s1, 160
    %v1213 = vld [vmem:[%s1212] sm:$0xf]
    %v1214 = vld [vmem:[%s1212 + $0x4] sm:$0xf]
    %v1215 = vld [vmem:[%s1212 + $0x8] sm:$0xf]
    %v1216 = vld [vmem:[%s1212 + $0xc] sm:$0xf]
    %v1217 = vld [vmem:[%s1212 + $0x10] sm:$0xf]
    %v1218 = vld [vmem:[%s1212 + $0x14] sm:$0xf]
    %v1219 = vld [vmem:[%s1212 + $0x18] sm:$0xf]
    %v1220 = vld [vmem:[%s1212 + $0x1c] sm:$0xf]
    %v1221 = vpack.c.bf16 %v1198, %v1196
    %v1222 = vpack.c.bf16 %v1199, %v1197
    %v1223 = vpack.c.bf16 %v1202, %v1200
    %v1224 = vpack.c.bf16 %v1203, %v1201
    %v1225 = vpack.c.bf16 %v1206, %v1204
    %v1226 = vpack.c.bf16 %v1207, %v1205
    %v1227 = vpack.c.bf16 %v1210, %v1208
    %v1228 = vpack.c.bf16 %v1211, %v1209
    %s1229 = scalar_lea.vmem %s2, 320
    %v1230 = vld [vmem:[%s1229] sm:$0xff]
    %v1231 = vld [vmem:[%s1229 + $0x8] sm:$0xff]
    %v1232 = vld [vmem:[%s1229 + $0x10] sm:$0xff]
    %v1233 = vld [vmem:[%s1229 + $0x18] sm:$0xff]
    %v1234 = vld [vmem:[%s1229 + $0x20] sm:$0xff]
    %v1235 = vld [vmem:[%s1229 + $0x28] sm:$0xff]
    %v1236 = vld [vmem:[%s1229 + $0x30] sm:$0xff]
    %v1237 = vld [vmem:[%s1229 + $0x38] sm:$0xff]
    %1239 = vset.pattern.permute.xlu0 0
    %1240 = vperm.xlu0 %1239, %v1230
    %v1241 = vpop.permute.xlu0 %1240
    %1244 = vset.pattern.permute.xlu0 0
    %1245 = vperm.xlu0 %1244, %v1231
    %v1246 = vpop.permute.xlu0 %1245
    %1249 = vset.pattern.permute.xlu0 0
    %1250 = vperm.xlu0 %1249, %v1232
    %v1251 = vpop.permute.xlu0 %1250
    %1254 = vset.pattern.permute.xlu0 0
    %1255 = vperm.xlu0 %1254, %v1233
    %v1256 = vpop.permute.xlu0 %1255
    %1259 = vset.pattern.permute.xlu0 0
    %1260 = vperm.xlu0 %1259, %v1234
    %v1261 = vpop.permute.xlu0 %1260
    %1264 = vset.pattern.permute.xlu0 0
    %1265 = vperm.xlu0 %1264, %v1235
    %v1266 = vpop.permute.xlu0 %1265
    %1269 = vset.pattern.permute.xlu0 0
    %1270 = vperm.xlu0 %1269, %v1236
    %v1271 = vpop.permute.xlu0 %1270
    %1274 = vset.pattern.permute.xlu0 0
    %1275 = vperm.xlu0 %1274, %v1237
    %v1276 = vpop.permute.xlu0 %1275
    %v1286 = vunpack.c.l.b16 %v1213
    %v1287 = vunpack.c.l.b16 %v1214
    %v1288 = vunpack.c.l.b16 %v1215
    %v1289 = vunpack.c.l.b16 %v1216
    %v1290 = vunpack.c.l.b16 %v1217
    %v1291 = vunpack.c.l.b16 %v1218
    %v1292 = vunpack.c.l.b16 %v1219
    %v1293 = vunpack.c.l.b16 %v1220
    %v1294 = vpack.c.b16 %v1287, %v1286
    %v1295 = vpack.c.b16 %v1289, %v1288
    %v1296 = vpack.c.b16 %v1291, %v1290
    %v1297 = vpack.c.b16 %v1293, %v1292
    %v1299 = vsel %vm122, %v1294, 0
    %v1302 = vsel %vm122, %v1295, 0
    %v1305 = vsel %vm122, %v1296, 0
    %v1308 = vsel %vm122, %v1297, 0
    %1310 = vmatprep.subr.bf16.mxu0 %v1222
    %1311 = vmatpush1.bf16.msra.mxu0 %v1221
    %1312 = vmatprep.subr.bf16.mxu0 %v1224
    %1313 = vmatpush1.bf16.msra.mxu0 %v1223
    %1314 = vmatprep.subr.bf16.mxu0 %v1226
    %1315 = vmatpush1.bf16.msra.mxu0 %v1225
    %1316 = vmatprep.subr.bf16.mxu0 %v1228
    %1317 = vmatpush1.bf16.msra.mxu0 %v1227
    %1318 = vmatprep.subr.bf16.mxu0 0
    %1319 = vmatpush1.bf16.msra.mxu0 0
    %1320 = vmatprep.subr.bf16.mxu0 0
    %1321 = vmatpush1.bf16.msra.mxu0 0
    %1322 = vmatprep.subr.bf16.mxu0 0
    %1323 = vmatpush1.bf16.msra.mxu0 0
    %1324 = vmatprep.subr.bf16.mxu0 0
    %1325 = vmatpush1.bf16.msra.mxu0 0
    %1326 = vmatprep.subr.bf16.mxu0 0
    %1327 = vmatpush1.bf16.msra.mxu0 0
    %1328 = vmatprep.subr.bf16.mxu0 0
    %1329 = vmatpush1.bf16.msra.mxu0 0
    %1330 = vmatprep.subr.bf16.mxu0 0
    %1331 = vmatpush1.bf16.msra.mxu0 0
    %1332 = vmatprep.subr.bf16.mxu0 0
    %1333 = vmatpush1.bf16.msra.mxu0 0
    %1334 = vmatprep.subr.bf16.mxu0 0
    %1335 = vmatpush1.bf16.msra.mxu0 0
    %1336 = vmatprep.subr.bf16.mxu0 0
    %1337 = vmatpush1.bf16.msra.mxu0 0
    %1338 = vmatprep.subr.bf16.mxu0 0
    %1339 = vmatpush1.bf16.msra.mxu0 0
    %1340 = vmatprep.subr.bf16.mxu0 0
    %1341 = vmatpush1.bf16.msra.mxu0 0
    %1342 = vmatprep.mubr.bf16.mxu0 0
    %1343 = vmatmul.mubr.bf16.gmra.mrb[0].mxu0 %v1299
    %v1344 = vpop.f32.mrb[0].mxu0
    %v1345 = vadd.f32 %v1241, %v1344
    %v1346 = vpop.f32.mrb[0].mxu0
    %v1347 = vadd.f32 %v1241, %v1346
    %v1348 = vpop.f32.mrb[0].mxu0
    %v1349 = vadd.f32 %v1246, %v1348
    %v1350 = vpop.f32.mrb[0].mxu0
    %v1351 = vadd.f32 %v1246, %v1350
    %1352 = vmatprep.mubr.bf16.mxu0 0
    %1353 = vmatmul.mubr.bf16.gmra.mrb[0].mxu0 %v1302
    %v1354 = vpop.f32.mrb[0].mxu0
    %v1355 = vadd.f32 %v1251, %v1354
    %v1356 = vpop.f32.mrb[0].mxu0
    %v1357 = vadd.f32 %v1251, %v1356
    %v1358 = vpop.f32.mrb[0].mxu0
    %v1359 = vadd.f32 %v1256, %v1358
    %v1360 = vpop.f32.mrb[0].mxu0
    %v1361 = vadd.f32 %v1256, %v1360
    %1362 = vmatprep.mubr.bf16.mxu0 0
    %1363 = vmatmul.mubr.bf16.gmra.mrb[0].mxu0 %v1305
    %v1364 = vpop.f32.mrb[0].mxu0
    %v1365 = vadd.f32 %v1261, %v1364
    %v1366 = vpop.f32.mrb[0].mxu0
    %v1367 = vadd.f32 %v1261, %v1366
    %v1368 = vpop.f32.mrb[0].mxu0
    %v1369 = vadd.f32 %v1266, %v1368
    %v1370 = vpop.f32.mrb[0].mxu0
    %v1371 = vadd.f32 %v1266, %v1370
    %1372 = vmatprep.mubr.bf16.mxu0 0
    %1373 = vmatmul.mubr.bf16.gmra.mrb[0].mxu0 %v1308
    %v1374 = vpop.f32.mrb[0].mxu0
    %v1375 = vadd.f32 %v1271, %v1374
    %v1376 = vpop.f32.mrb[0].mxu0
    %v1377 = vadd.f32 %v1271, %v1376
    %v1378 = vpop.f32.mrb[0].mxu0
    %v1379 = vadd.f32 %v1276, %v1378
    %v1380 = vpop.f32.mrb[0].mxu0
    %v1381 = vadd.f32 %v1276, %v1380
    %1382 = vdwg.mxu0
    %v1383 = vadd.f32 %v1345, %v822
    %v1384 = vadd.f32 %v1347, %v823
    %v1385 = vadd.f32 %v1349, %v824
    %v1386 = vadd.f32 %v1351, %v825
    %v1387 = vadd.f32 %v1355, %v826
    %v1388 = vadd.f32 %v1357, %v827
    %v1389 = vadd.f32 %v1359, %v828
    %v1390 = vadd.f32 %v1361, %v829
    %v1391 = vadd.f32 %v1365, %v830
    %v1392 = vadd.f32 %v1367, %v831
    %v1393 = vadd.f32 %v1369, %v832
    %v1394 = vadd.f32 %v1371, %v833
    %v1395 = vadd.f32 %v1375, %v834
    %v1396 = vadd.f32 %v1377, %v835
    %v1397 = vadd.f32 %v1379, %v836
    %v1398 = vadd.f32 %v1381, %v837
    %v1399 = vadd.f32 %v1383, %v1385
    %v1400 = vadd.f32 %v1399, %v1387
    %v1401 = vadd.f32 %v1400, %v1389
    %v1402 = vadd.f32 %v1401, %v1391
    %v1403 = vadd.f32 %v1402, %v1393
    %v1404 = vadd.f32 %v1403, %v1395
    %v1405 = vadd.f32 %v1404, %v1397
    %v1406 = vrot.slane %v1405, 4
    %v1407 = vadd.f32 %v1405, %v1406
    %v1408 = vrot.slane %v1407, 2
    %v1409 = vadd.f32 %v1407, %v1408
    %v1410 = vrot.slane %v1409, 1
    %v1411 = vadd.f32 %v1409, %v1410
    %v1412 = vadd.f32 %v1384, %v1386
    %v1413 = vadd.f32 %v1412, %v1388
    %v1414 = vadd.f32 %v1413, %v1390
    %v1415 = vadd.f32 %v1414, %v1392
    %v1416 = vadd.f32 %v1415, %v1394
    %v1417 = vadd.f32 %v1416, %v1396
    %v1418 = vadd.f32 %v1417, %v1398
    %v1419 = vrot.slane %v1418, 4
    %v1420 = vadd.f32 %v1418, %v1419
    %v1421 = vrot.slane %v1420, 2
    %v1422 = vadd.f32 %v1420, %v1421
    %v1423 = vrot.slane %v1422, 1
    %v1424 = vadd.f32 %v1422, %v1423
    %v1425 = vmul.f32 %v1383, %v1383
    %v1426 = vmul.f32 %v1384, %v1384
    %v1427 = vmul.f32 %v1385, %v1385
    %v1428 = vmul.f32 %v1386, %v1386
    %v1429 = vmul.f32 %v1387, %v1387
    %v1430 = vmul.f32 %v1388, %v1388
    %v1431 = vmul.f32 %v1389, %v1389
    %v1432 = vmul.f32 %v1390, %v1390
    %v1433 = vmul.f32 %v1391, %v1391
    %v1434 = vmul.f32 %v1392, %v1392
    %v1435 = vmul.f32 %v1393, %v1393
    %v1436 = vmul.f32 %v1394, %v1394
    %v1437 = vmul.f32 %v1395, %v1395
    %v1438 = vmul.f32 %v1396, %v1396
    %v1439 = vmul.f32 %v1397, %v1397
    %v1440 = vmul.f32 %v1398, %v1398
    %v1441 = vadd.f32 %v1425, %v1427
    %v1442 = vadd.f32 %v1441, %v1429
    %v1443 = vadd.f32 %v1442, %v1431
    %v1444 = vadd.f32 %v1443, %v1433
    %v1445 = vadd.f32 %v1444, %v1435
    %v1446 = vadd.f32 %v1445, %v1437
    %v1447 = vadd.f32 %v1446, %v1439
    %v1448 = vrot.slane %v1447, 4
    %v1449 = vadd.f32 %v1447, %v1448
    %v1450 = vrot.slane %v1449, 2
    %v1451 = vadd.f32 %v1449, %v1450
    %v1452 = vrot.slane %v1451, 1
    %v1453 = vadd.f32 %v1451, %v1452
    %v1454 = vadd.f32 %v1426, %v1428
    %v1455 = vadd.f32 %v1454, %v1430
    %v1456 = vadd.f32 %v1455, %v1432
    %v1457 = vadd.f32 %v1456, %v1434
    %v1458 = vadd.f32 %v1457, %v1436
    %v1459 = vadd.f32 %v1458, %v1438
    %v1460 = vadd.f32 %v1459, %v1440
    %v1461 = vrot.slane %v1460, 4
    %v1462 = vadd.f32 %v1460, %v1461
    %v1463 = vrot.slane %v1462, 2
    %v1464 = vadd.f32 %v1462, %v1463
    %v1465 = vrot.slane %v1464, 1
    %v1466 = vadd.f32 %v1464, %v1465
    %v1467 = vmul.f32 %v1411, 0.015625
    %v1468 = vmul.f32 %v1424, 0.015625
    %v1469 = vmul.f32 %v1453, 0.015625
    %v1470 = vmul.f32 %v1466, 0.015625
    %v1471 = vmul.f32 %v1467, %v1467
    %v1472 = vmul.f32 %v1468, %v1468
    %v1473 = vsub.f32 %v1469, %v1471
    %v1474 = vsub.f32 %v1470, %v1472
    %v1475 = vadd.f32 %v1473, 1e-05
    %v1476 = vadd.f32 %v1474, 1e-05
    %v1477 = vrsqrt.pop %v1475
    %v1478 = vrsqrt.pop %v1476
    %v1479 = vsub.f32 %v1383, %v1467
    %v1480 = vsub.f32 %v1384, %v1468
    %v1481 = vsub.f32 %v1385, %v1467
    %v1482 = vsub.f32 %v1386, %v1468
    %v1483 = vsub.f32 %v1387, %v1467
    %v1484 = vsub.f32 %v1388, %v1468
    %v1485 = vsub.f32 %v1389, %v1467
    %v1486 = vsub.f32 %v1390, %v1468
    %v1487 = vsub.f32 %v1391, %v1467
    %v1488 = vsub.f32 %v1392, %v1468
    %v1489 = vsub.f32 %v1393, %v1467
    %v1490 = vsub.f32 %v1394, %v1468
    %v1491 = vsub.f32 %v1395, %v1467
    %v1492 = vsub.f32 %v1396, %v1468
    %v1493 = vsub.f32 %v1397, %v1467
    %v1494 = vsub.f32 %v1398, %v1468
    %v1495 = vmul.f32 %v1479, %v1477
    %v1496 = vmul.f32 %v1480, %v1478
    %v1497 = vmul.f32 %v1481, %v1477
    %v1498 = vmul.f32 %v1482, %v1478
    %v1499 = vmul.f32 %v1483, %v1477
    %v1500 = vmul.f32 %v1484, %v1478
    %v1501 = vmul.f32 %v1485, %v1477
    %v1502 = vmul.f32 %v1486, %v1478
    %v1503 = vmul.f32 %v1487, %v1477
    %v1504 = vmul.f32 %v1488, %v1478
    %v1505 = vmul.f32 %v1489, %v1477
    %v1506 = vmul.f32 %v1490, %v1478
    %v1507 = vmul.f32 %v1491, %v1477
    %v1508 = vmul.f32 %v1492, %v1478
    %v1509 = vmul.f32 %v1493, %v1477
    %v1510 = vmul.f32 %v1494, %v1478
    %s1511 = scalar_lea.vmem %s3, 64
    %v1512 = vld [vmem:[%s1511] sm:$0xff]
    %v1513 = vld [vmem:[%s1511 + $0x8] sm:$0xff]
    %v1514 = vld [vmem:[%s1511 + $0x10] sm:$0xff]
    %v1515 = vld [vmem:[%s1511 + $0x18] sm:$0xff]
    %v1516 = vld [vmem:[%s1511 + $0x20] sm:$0xff]
    %v1517 = vld [vmem:[%s1511 + $0x28] sm:$0xff]
    %v1518 = vld [vmem:[%s1511 + $0x30] sm:$0xff]
    %v1519 = vld [vmem:[%s1511 + $0x38] sm:$0xff]
    %1521 = vset.pattern.permute.xlu0 0
    %1522 = vperm.xlu0 %1521, %v1512
    %v1523 = vpop.permute.xlu0 %1522
    %1526 = vset.pattern.permute.xlu0 0
    %1527 = vperm.xlu0 %1526, %v1513
    %v1528 = vpop.permute.xlu0 %1527
    %1531 = vset.pattern.permute.xlu0 0
    %1532 = vperm.xlu0 %1531, %v1514
    %v1533 = vpop.permute.xlu0 %1532
    %1536 = vset.pattern.permute.xlu0 0
    %1537 = vperm.xlu0 %1536, %v1515
    %v1538 = vpop.permute.xlu0 %1537
    %1541 = vset.pattern.permute.xlu0 0
    %1542 = vperm.xlu0 %1541, %v1516
    %v1543 = vpop.permute.xlu0 %1542
    %1546 = vset.pattern.permute.xlu0 0
    %1547 = vperm.xlu0 %1546, %v1517
    %v1548 = vpop.permute.xlu0 %1547
    %1551 = vset.pattern.permute.xlu0 0
    %1552 = vperm.xlu0 %1551, %v1518
    %v1553 = vpop.permute.xlu0 %1552
    %1556 = vset.pattern.permute.xlu0 0
    %1557 = vperm.xlu0 %1556, %v1519
    %v1558 = vpop.permute.xlu0 %1557
    %v1560 = vmul.f32 %v1495, %v1523
    %v1561 = vmul.f32 %v1496, %v1523
    %v1562 = vmul.f32 %v1497, %v1528
    %v1563 = vmul.f32 %v1498, %v1528
    %v1564 = vmul.f32 %v1499, %v1533
    %v1565 = vmul.f32 %v1500, %v1533
    %v1566 = vmul.f32 %v1501, %v1538
    %v1567 = vmul.f32 %v1502, %v1538
    %v1568 = vmul.f32 %v1503, %v1543
    %v1569 = vmul.f32 %v1504, %v1543
    %v1570 = vmul.f32 %v1505, %v1548
    %v1571 = vmul.f32 %v1506, %v1548
    %v1572 = vmul.f32 %v1507, %v1553
    %v1573 = vmul.f32 %v1508, %v1553
    %v1574 = vmul.f32 %v1509, %v1558
    %v1575 = vmul.f32 %v1510, %v1558
    %s1576 = scalar_lea.vmem %s4, 64
    %v1577 = vld [vmem:[%s1576] sm:$0xff]
    %v1578 = vld [vmem:[%s1576 + $0x8] sm:$0xff]
    %v1579 = vld [vmem:[%s1576 + $0x10] sm:$0xff]
    %v1580 = vld [vmem:[%s1576 + $0x18] sm:$0xff]
    %v1581 = vld [vmem:[%s1576 + $0x20] sm:$0xff]
    %v1582 = vld [vmem:[%s1576 + $0x28] sm:$0xff]
    %v1583 = vld [vmem:[%s1576 + $0x30] sm:$0xff]
    %v1584 = vld [vmem:[%s1576 + $0x38] sm:$0xff]
    %1586 = vset.pattern.permute.xlu0 0
    %1587 = vperm.xlu0 %1586, %v1577
    %v1588 = vpop.permute.xlu0 %1587
    %1591 = vset.pattern.permute.xlu0 0
    %1592 = vperm.xlu0 %1591, %v1578
    %v1593 = vpop.permute.xlu0 %1592
    %1596 = vset.pattern.permute.xlu0 0
    %1597 = vperm.xlu0 %1596, %v1579
    %v1598 = vpop.permute.xlu0 %1597
    %1601 = vset.pattern.permute.xlu0 0
    %1602 = vperm.xlu0 %1601, %v1580
    %v1603 = vpop.permute.xlu0 %1602
    %1606 = vset.pattern.permute.xlu0 0
    %1607 = vperm.xlu0 %1606, %v1581
    %v1608 = vpop.permute.xlu0 %1607
    %1611 = vset.pattern.permute.xlu0 0
    %1612 = vperm.xlu0 %1611, %v1582
    %v1613 = vpop.permute.xlu0 %1612
    %1616 = vset.pattern.permute.xlu0 0
    %1617 = vperm.xlu0 %1616, %v1583
    %v1618 = vpop.permute.xlu0 %1617
    %1621 = vset.pattern.permute.xlu0 0
    %1622 = vperm.xlu0 %1621, %v1584
    %v1623 = vpop.permute.xlu0 %1622
    %v1625 = vadd.f32 %v1560, %v1588
    %v1626 = vadd.f32 %v1561, %v1588
    %v1627 = vadd.f32 %v1562, %v1593
    %v1628 = vadd.f32 %v1563, %v1593
    %v1629 = vadd.f32 %v1564, %v1598
    %v1630 = vadd.f32 %v1565, %v1598
    %v1631 = vadd.f32 %v1566, %v1603
    %v1632 = vadd.f32 %v1567, %v1603
    %v1633 = vadd.f32 %v1568, %v1608
    %v1634 = vadd.f32 %v1569, %v1608
    %v1635 = vadd.f32 %v1570, %v1613
    %v1636 = vadd.f32 %v1571, %v1613
    %v1637 = vadd.f32 %v1572, %v1618
    %v1638 = vadd.f32 %v1573, %v1618
    %v1639 = vadd.f32 %v1574, %v1623
    %v1640 = vadd.f32 %v1575, %v1623
    %s1641 = scalar_lea.vmem %s1, 192
    %v1642 = vld [vmem:[%s1641] sm:$0xf]
    %v1643 = vld [vmem:[%s1641 + $0x4] sm:$0xf]
    %v1644 = vld [vmem:[%s1641 + $0x8] sm:$0xf]
    %v1645 = vld [vmem:[%s1641 + $0xc] sm:$0xf]
    %v1646 = vld [vmem:[%s1641 + $0x10] sm:$0xf]
    %v1647 = vld [vmem:[%s1641 + $0x14] sm:$0xf]
    %v1648 = vld [vmem:[%s1641 + $0x18] sm:$0xf]
    %v1649 = vld [vmem:[%s1641 + $0x1c] sm:$0xf]
    %v1650 = vpack.c.bf16 %v1627, %v1625
    %v1651 = vpack.c.bf16 %v1628, %v1626
    %v1652 = vpack.c.bf16 %v1631, %v1629
    %v1653 = vpack.c.bf16 %v1632, %v1630
    %v1654 = vpack.c.bf16 %v1635, %v1633
    %v1655 = vpack.c.bf16 %v1636, %v1634
    %v1656 = vpack.c.bf16 %v1639, %v1637
    %v1657 = vpack.c.bf16 %v1640, %v1638
    %s1658 = scalar_lea.vmem %s2, 384
    %v1659 = vld [vmem:[%s1658] sm:$0xff]
    %v1660 = vld [vmem:[%s1658 + $0x8] sm:$0xff]
    %v1661 = vld [vmem:[%s1658 + $0x10] sm:$0xff]
    %v1662 = vld [vmem:[%s1658 + $0x18] sm:$0xff]
    %v1663 = vld [vmem:[%s1658 + $0x20] sm:$0xff]
    %v1664 = vld [vmem:[%s1658 + $0x28] sm:$0xff]
    %v1665 = vld [vmem:[%s1658 + $0x30] sm:$0xff]
    %v1666 = vld [vmem:[%s1658 + $0x38] sm:$0xff]
    %1668 = vset.pattern.permute.xlu0 0
    %1669 = vperm.xlu0 %1668, %v1659
    %v1670 = vpop.permute.xlu0 %1669
    %1673 = vset.pattern.permute.xlu0 0
    %1674 = vperm.xlu0 %1673, %v1660
    %v1675 = vpop.permute.xlu0 %1674
    %1678 = vset.pattern.permute.xlu0 0
    %1679 = vperm.xlu0 %1678, %v1661
    %v1680 = vpop.permute.xlu0 %1679
    %1683 = vset.pattern.permute.xlu0 0
    %1684 = vperm.xlu0 %1683, %v1662
    %v1685 = vpop.permute.xlu0 %1684
    %1688 = vset.pattern.permute.xlu0 0
    %1689 = vperm.xlu0 %1688, %v1663
    %v1690 = vpop.permute.xlu0 %1689
    %1693 = vset.pattern.permute.xlu0 0
    %1694 = vperm.xlu0 %1693, %v1664
    %v1695 = vpop.permute.xlu0 %1694
    %1698 = vset.pattern.permute.xlu0 0
    %1699 = vperm.xlu0 %1698, %v1665
    %v1700 = vpop.permute.xlu0 %1699
    %1703 = vset.pattern.permute.xlu0 0
    %1704 = vperm.xlu0 %1703, %v1666
    %v1705 = vpop.permute.xlu0 %1704
    %v1715 = vunpack.c.l.b16 %v1642
    %v1716 = vunpack.c.l.b16 %v1643
    %v1717 = vunpack.c.l.b16 %v1644
    %v1718 = vunpack.c.l.b16 %v1645
    %v1719 = vunpack.c.l.b16 %v1646
    %v1720 = vunpack.c.l.b16 %v1647
    %v1721 = vunpack.c.l.b16 %v1648
    %v1722 = vunpack.c.l.b16 %v1649
    %v1723 = vpack.c.b16 %v1716, %v1715
    %v1724 = vpack.c.b16 %v1718, %v1717
    %v1725 = vpack.c.b16 %v1720, %v1719
    %v1726 = vpack.c.b16 %v1722, %v1721
    %v1728 = vsel %vm122, %v1723, 0
    %v1731 = vsel %vm122, %v1724, 0
    %v1734 = vsel %vm122, %v1725, 0
    %v1737 = vsel %vm122, %v1726, 0
    %1739 = vmatprep.subr.bf16.mxu0 %v1651
    %1740 = vmatpush1.bf16.msra.mxu0 %v1650
    %1741 = vmatprep.subr.bf16.mxu0 %v1653
    %1742 = vmatpush1.bf16.msra.mxu0 %v1652
    %1743 = vmatprep.subr.bf16.mxu0 %v1655
    %1744 = vmatpush1.bf16.msra.mxu0 %v1654
    %1745 = vmatprep.subr.bf16.mxu0 %v1657
    %1746 = vmatpush1.bf16.msra.mxu0 %v1656
    %1747 = vmatprep.subr.bf16.mxu0 0
    %1748 = vmatpush1.bf16.msra.mxu0 0
    %1749 = vmatprep.subr.bf16.mxu0 0
    %1750 = vmatpush1.bf16.msra.mxu0 0
    %1751 = vmatprep.subr.bf16.mxu0 0
    %1752 = vmatpush1.bf16.msra.mxu0 0
    %1753 = vmatprep.subr.bf16.mxu0 0
    %1754 = vmatpush1.bf16.msra.mxu0 0
    %1755 = vmatprep.subr.bf16.mxu0 0
    %1756 = vmatpush1.bf16.msra.mxu0 0
    %1757 = vmatprep.subr.bf16.mxu0 0
    %1758 = vmatpush1.bf16.msra.mxu0 0
    %1759 = vmatprep.subr.bf16.mxu0 0
    %1760 = vmatpush1.bf16.msra.mxu0 0
    %1761 = vmatprep.subr.bf16.mxu0 0
    %1762 = vmatpush1.bf16.msra.mxu0 0
    %1763 = vmatprep.subr.bf16.mxu0 0
    %1764 = vmatpush1.bf16.msra.mxu0 0
    %1765 = vmatprep.subr.bf16.mxu0 0
    %1766 = vmatpush1.bf16.msra.mxu0 0
    %1767 = vmatprep.subr.bf16.mxu0 0
    %1768 = vmatpush1.bf16.msra.mxu0 0
    %1769 = vmatprep.subr.bf16.mxu0 0
    %1770 = vmatpush1.bf16.msra.mxu0 0
    %1771 = vmatprep.mubr.bf16.mxu0 0
    %1772 = vmatmul.mubr.bf16.gmra.mrb[0].mxu0 %v1728
    %v1773 = vpop.f32.mrb[0].mxu0
    %v1774 = vadd.f32 %v1670, %v1773
    %v1775 = vpop.f32.mrb[0].mxu0
    %v1776 = vadd.f32 %v1670, %v1775
    %v1777 = vpop.f32.mrb[0].mxu0
    %v1778 = vadd.f32 %v1675, %v1777
    %v1779 = vpop.f32.mrb[0].mxu0
    %v1780 = vadd.f32 %v1675, %v1779
    %1781 = vmatprep.mubr.bf16.mxu0 0
    %1782 = vmatmul.mubr.bf16.gmra.mrb[0].mxu0 %v1731
    %v1783 = vpop.f32.mrb[0].mxu0
    %v1784 = vadd.f32 %v1680, %v1783
    %v1785 = vpop.f32.mrb[0].mxu0
    %v1786 = vadd.f32 %v1680, %v1785
    %v1787 = vpop.f32.mrb[0].mxu0
    %v1788 = vadd.f32 %v1685, %v1787
    %v1789 = vpop.f32.mrb[0].mxu0
    %v1790 = vadd.f32 %v1685, %v1789
    %1791 = vmatprep.mubr.bf16.mxu0 0
    %1792 = vmatmul.mubr.bf16.gmra.mrb[0].mxu0 %v1734
    %v1793 = vpop.f32.mrb[0].mxu0
    %v1794 = vadd.f32 %v1690, %v1793
    %v1795 = vpop.f32.mrb[0].mxu0
    %v1796 = vadd.f32 %v1690, %v1795
    %v1797 = vpop.f32.mrb[0].mxu0
    %v1798 = vadd.f32 %v1695, %v1797
    %v1799 = vpop.f32.mrb[0].mxu0
    %v1800 = vadd.f32 %v1695, %v1799
    %1801 = vmatprep.mubr.bf16.mxu0 0
    %1802 = vmatmul.mubr.bf16.gmra.mrb[0].mxu0 %v1737
    %v1803 = vpop.f32.mrb[0].mxu0
    %v1804 = vadd.f32 %v1700, %v1803
    %v1805 = vpop.f32.mrb[0].mxu0
    %v1806 = vadd.f32 %v1700, %v1805
    %v1807 = vpop.f32.mrb[0].mxu0
    %v1808 = vadd.f32 %v1705, %v1807
    %v1809 = vpop.f32.mrb[0].mxu0
    %v1810 = vadd.f32 %v1705, %v1809
    %1811 = vdwg.mxu0
    %v1812 = vmax.f32 %v1774, 0.0
    %v1813 = vmax.f32 %v1776, 0.0
    %v1814 = vmax.f32 %v1778, 0.0
    %v1815 = vmax.f32 %v1780, 0.0
    %v1816 = vmax.f32 %v1784, 0.0
    %v1817 = vmax.f32 %v1786, 0.0
    %v1818 = vmax.f32 %v1788, 0.0
    %v1819 = vmax.f32 %v1790, 0.0
    %v1820 = vmax.f32 %v1794, 0.0
    %v1821 = vmax.f32 %v1796, 0.0
    %v1822 = vmax.f32 %v1798, 0.0
    %v1823 = vmax.f32 %v1800, 0.0
    %v1824 = vmax.f32 %v1804, 0.0
    %v1825 = vmax.f32 %v1806, 0.0
    %v1826 = vmax.f32 %v1808, 0.0
    %v1827 = vmax.f32 %v1810, 0.0
    %s1828 = scalar_lea.vmem %s1, 224
    %v1829 = vld [vmem:[%s1828] sm:$0xf]
    %v1830 = vld [vmem:[%s1828 + $0x4] sm:$0xf]
    %v1831 = vld [vmem:[%s1828 + $0x8] sm:$0xf]
    %v1832 = vld [vmem:[%s1828 + $0xc] sm:$0xf]
    %v1833 = vld [vmem:[%s1828 + $0x10] sm:$0xf]
    %v1834 = vld [vmem:[%s1828 + $0x14] sm:$0xf]
    %v1835 = vld [vmem:[%s1828 + $0x18] sm:$0xf]
    %v1836 = vld [vmem:[%s1828 + $0x1c] sm:$0xf]
    %v1837 = vpack.c.bf16 %v1814, %v1812
    %v1838 = vpack.c.bf16 %v1815, %v1813
    %v1839 = vpack.c.bf16 %v1818, %v1816
    %v1840 = vpack.c.bf16 %v1819, %v1817
    %v1841 = vpack.c.bf16 %v1822, %v1820
    %v1842 = vpack.c.bf16 %v1823, %v1821
    %v1843 = vpack.c.bf16 %v1826, %v1824
    %v1844 = vpack.c.bf16 %v1827, %v1825
    %s1845 = scalar_lea.vmem %s2, 448
    %v1846 = vld [vmem:[%s1845] sm:$0xff]
    %v1847 = vld [vmem:[%s1845 + $0x8] sm:$0xff]
    %v1848 = vld [vmem:[%s1845 + $0x10] sm:$0xff]
    %v1849 = vld [vmem:[%s1845 + $0x18] sm:$0xff]
    %v1850 = vld [vmem:[%s1845 + $0x20] sm:$0xff]
    %v1851 = vld [vmem:[%s1845 + $0x28] sm:$0xff]
    %v1852 = vld [vmem:[%s1845 + $0x30] sm:$0xff]
    %v1853 = vld [vmem:[%s1845 + $0x38] sm:$0xff]
    %1855 = vset.pattern.permute.xlu0 0
    %1856 = vperm.xlu0 %1855, %v1846
    %v1857 = vpop.permute.xlu0 %1856
    %1860 = vset.pattern.permute.xlu0 0
    %1861 = vperm.xlu0 %1860, %v1847
    %v1862 = vpop.permute.xlu0 %1861
    %1865 = vset.pattern.permute.xlu0 0
    %1866 = vperm.xlu0 %1865, %v1848
    %v1867 = vpop.permute.xlu0 %1866
    %1870 = vset.pattern.permute.xlu0 0
    %1871 = vperm.xlu0 %1870, %v1849
    %v1872 = vpop.permute.xlu0 %1871
    %1875 = vset.pattern.permute.xlu0 0
    %1876 = vperm.xlu0 %1875, %v1850
    %v1877 = vpop.permute.xlu0 %1876
    %1880 = vset.pattern.permute.xlu0 0
    %1881 = vperm.xlu0 %1880, %v1851
    %v1882 = vpop.permute.xlu0 %1881
    %1885 = vset.pattern.permute.xlu0 0
    %1886 = vperm.xlu0 %1885, %v1852
    %v1887 = vpop.permute.xlu0 %1886
    %1890 = vset.pattern.permute.xlu0 0
    %1891 = vperm.xlu0 %1890, %v1853
    %v1892 = vpop.permute.xlu0 %1891
    %v1902 = vunpack.c.l.b16 %v1829
    %v1903 = vunpack.c.l.b16 %v1830
    %v1904 = vunpack.c.l.b16 %v1831
    %v1905 = vunpack.c.l.b16 %v1832
    %v1906 = vunpack.c.l.b16 %v1833
    %v1907 = vunpack.c.l.b16 %v1834
    %v1908 = vunpack.c.l.b16 %v1835
    %v1909 = vunpack.c.l.b16 %v1836
    %v1910 = vpack.c.b16 %v1903, %v1902
    %v1911 = vpack.c.b16 %v1905, %v1904
    %v1912 = vpack.c.b16 %v1907, %v1906
    %v1913 = vpack.c.b16 %v1909, %v1908
    %v1915 = vsel %vm122, %v1910, 0
    %v1918 = vsel %vm122, %v1911, 0
    %v1921 = vsel %vm122, %v1912, 0
    %v1924 = vsel %vm122, %v1913, 0
    %1926 = vmatprep.subr.bf16.mxu0 %v1838
    %1927 = vmatpush1.bf16.msra.mxu0 %v1837
    %1928 = vmatprep.subr.bf16.mxu0 %v1840
    %1929 = vmatpush1.bf16.msra.mxu0 %v1839
    %1930 = vmatprep.subr.bf16.mxu0 %v1842
    %1931 = vmatpush1.bf16.msra.mxu0 %v1841
    %1932 = vmatprep.subr.bf16.mxu0 %v1844
    %1933 = vmatpush1.bf16.msra.mxu0 %v1843
    %1934 = vmatprep.subr.bf16.mxu0 0
    %1935 = vmatpush1.bf16.msra.mxu0 0
    %1936 = vmatprep.subr.bf16.mxu0 0
    %1937 = vmatpush1.bf16.msra.mxu0 0
    %1938 = vmatprep.subr.bf16.mxu0 0
    %1939 = vmatpush1.bf16.msra.mxu0 0
    %1940 = vmatprep.subr.bf16.mxu0 0
    %1941 = vmatpush1.bf16.msra.mxu0 0
    %1942 = vmatprep.subr.bf16.mxu0 0
    %1943 = vmatpush1.bf16.msra.mxu0 0
    %1944 = vmatprep.subr.bf16.mxu0 0
    %1945 = vmatpush1.bf16.msra.mxu0 0
    %1946 = vmatprep.subr.bf16.mxu0 0
    %1947 = vmatpush1.bf16.msra.mxu0 0
    %1948 = vmatprep.subr.bf16.mxu0 0
    %1949 = vmatpush1.bf16.msra.mxu0 0
    %1950 = vmatprep.subr.bf16.mxu0 0
    %1951 = vmatpush1.bf16.msra.mxu0 0
    %1952 = vmatprep.subr.bf16.mxu0 0
    %1953 = vmatpush1.bf16.msra.mxu0 0
    %1954 = vmatprep.subr.bf16.mxu0 0
    %1955 = vmatpush1.bf16.msra.mxu0 0
    %1956 = vmatprep.subr.bf16.mxu0 0
    %1957 = vmatpush1.bf16.msra.mxu0 0
    %1958 = vmatprep.mubr.bf16.mxu0 0
    %1959 = vmatmul.mubr.bf16.gmra.mrb[0].mxu0 %v1915
    %v1960 = vpop.f32.mrb[0].mxu0
    %v1961 = vadd.f32 %v1857, %v1960
    %v1962 = vpop.f32.mrb[0].mxu0
    %v1963 = vadd.f32 %v1857, %v1962
    %v1964 = vpop.f32.mrb[0].mxu0
    %v1965 = vadd.f32 %v1862, %v1964
    %v1966 = vpop.f32.mrb[0].mxu0
    %v1967 = vadd.f32 %v1862, %v1966
    %1968 = vmatprep.mubr.bf16.mxu0 0
    %1969 = vmatmul.mubr.bf16.gmra.mrb[0].mxu0 %v1918
    %v1970 = vpop.f32.mrb[0].mxu0
    %v1971 = vadd.f32 %v1867, %v1970
    %v1972 = vpop.f32.mrb[0].mxu0
    %v1973 = vadd.f32 %v1867, %v1972
    %v1974 = vpop.f32.mrb[0].mxu0
    %v1975 = vadd.f32 %v1872, %v1974
    %v1976 = vpop.f32.mrb[0].mxu0
    %v1977 = vadd.f32 %v1872, %v1976
    %1978 = vmatprep.mubr.bf16.mxu0 0
    %1979 = vmatmul.mubr.bf16.gmra.mrb[0].mxu0 %v1921
    %v1980 = vpop.f32.mrb[0].mxu0
    %v1981 = vadd.f32 %v1877, %v1980
    %v1982 = vpop.f32.mrb[0].mxu0
    %v1983 = vadd.f32 %v1877, %v1982
    %v1984 = vpop.f32.mrb[0].mxu0
    %v1985 = vadd.f32 %v1882, %v1984
    %v1986 = vpop.f32.mrb[0].mxu0
    %v1987 = vadd.f32 %v1882, %v1986
    %1988 = vmatprep.mubr.bf16.mxu0 0
    %1989 = vmatmul.mubr.bf16.gmra.mrb[0].mxu0 %v1924
    %v1990 = vpop.f32.mrb[0].mxu0
    %v1991 = vadd.f32 %v1887, %v1990
    %v1992 = vpop.f32.mrb[0].mxu0
    %v1993 = vadd.f32 %v1887, %v1992
    %v1994 = vpop.f32.mrb[0].mxu0
    %v1995 = vadd.f32 %v1892, %v1994
    %v1996 = vpop.f32.mrb[0].mxu0
    %v1997 = vadd.f32 %v1892, %v1996
    %1998 = vdwg.mxu0
    %v1999 = vmax.f32 %v1961, 0.0
    %v2000 = vmax.f32 %v1963, 0.0
    %v2001 = vmax.f32 %v1965, 0.0
    %v2002 = vmax.f32 %v1967, 0.0
    %v2003 = vmax.f32 %v1971, 0.0
    %v2004 = vmax.f32 %v1973, 0.0
    %v2005 = vmax.f32 %v1975, 0.0
    %v2006 = vmax.f32 %v1977, 0.0
    %v2007 = vmax.f32 %v1981, 0.0
    %v2008 = vmax.f32 %v1983, 0.0
    %v2009 = vmax.f32 %v1985, 0.0
    %v2010 = vmax.f32 %v1987, 0.0
    %v2011 = vmax.f32 %v1991, 0.0
    %v2012 = vmax.f32 %v1993, 0.0
    %v2013 = vmax.f32 %v1995, 0.0
    %v2014 = vmax.f32 %v1997, 0.0
    %s2015 = scalar_lea.vmem %s1, 256
    %v2016 = vld [vmem:[%s2015] sm:$0xf]
    %v2017 = vld [vmem:[%s2015 + $0x4] sm:$0xf]
    %v2018 = vld [vmem:[%s2015 + $0x8] sm:$0xf]
    %v2019 = vld [vmem:[%s2015 + $0xc] sm:$0xf]
    %v2020 = vld [vmem:[%s2015 + $0x10] sm:$0xf]
    %v2021 = vld [vmem:[%s2015 + $0x14] sm:$0xf]
    %v2022 = vld [vmem:[%s2015 + $0x18] sm:$0xf]
    %v2023 = vld [vmem:[%s2015 + $0x1c] sm:$0xf]
    %v2024 = vpack.c.bf16 %v2001, %v1999
    %v2025 = vpack.c.bf16 %v2002, %v2000
    %v2026 = vpack.c.bf16 %v2005, %v2003
    %v2027 = vpack.c.bf16 %v2006, %v2004
    %v2028 = vpack.c.bf16 %v2009, %v2007
    %v2029 = vpack.c.bf16 %v2010, %v2008
    %v2030 = vpack.c.bf16 %v2013, %v2011
    %v2031 = vpack.c.bf16 %v2014, %v2012
    %s2032 = scalar_lea.vmem %s2, 512
    %v2033 = vld [vmem:[%s2032] sm:$0xff]
    %v2034 = vld [vmem:[%s2032 + $0x8] sm:$0xff]
    %v2035 = vld [vmem:[%s2032 + $0x10] sm:$0xff]
    %v2036 = vld [vmem:[%s2032 + $0x18] sm:$0xff]
    %v2037 = vld [vmem:[%s2032 + $0x20] sm:$0xff]
    %v2038 = vld [vmem:[%s2032 + $0x28] sm:$0xff]
    %v2039 = vld [vmem:[%s2032 + $0x30] sm:$0xff]
    %v2040 = vld [vmem:[%s2032 + $0x38] sm:$0xff]
    %2042 = vset.pattern.permute.xlu0 0
    %2043 = vperm.xlu0 %2042, %v2033
    %v2044 = vpop.permute.xlu0 %2043
    %2047 = vset.pattern.permute.xlu0 0
    %2048 = vperm.xlu0 %2047, %v2034
    %v2049 = vpop.permute.xlu0 %2048
    %2052 = vset.pattern.permute.xlu0 0
    %2053 = vperm.xlu0 %2052, %v2035
    %v2054 = vpop.permute.xlu0 %2053
    %2057 = vset.pattern.permute.xlu0 0
    %2058 = vperm.xlu0 %2057, %v2036
    %v2059 = vpop.permute.xlu0 %2058
    %2062 = vset.pattern.permute.xlu0 0
    %2063 = vperm.xlu0 %2062, %v2037
    %v2064 = vpop.permute.xlu0 %2063
    %2067 = vset.pattern.permute.xlu0 0
    %2068 = vperm.xlu0 %2067, %v2038
    %v2069 = vpop.permute.xlu0 %2068
    %2072 = vset.pattern.permute.xlu0 0
    %2073 = vperm.xlu0 %2072, %v2039
    %v2074 = vpop.permute.xlu0 %2073
    %2077 = vset.pattern.permute.xlu0 0
    %2078 = vperm.xlu0 %2077, %v2040
    %v2079 = vpop.permute.xlu0 %2078
    %v2089 = vunpack.c.l.b16 %v2016
    %v2090 = vunpack.c.l.b16 %v2017
    %v2091 = vunpack.c.l.b16 %v2018
    %v2092 = vunpack.c.l.b16 %v2019
    %v2093 = vunpack.c.l.b16 %v2020
    %v2094 = vunpack.c.l.b16 %v2021
    %v2095 = vunpack.c.l.b16 %v2022
    %v2096 = vunpack.c.l.b16 %v2023
    %v2097 = vpack.c.b16 %v2090, %v2089
    %v2098 = vpack.c.b16 %v2092, %v2091
    %v2099 = vpack.c.b16 %v2094, %v2093
    %v2100 = vpack.c.b16 %v2096, %v2095
    %v2102 = vsel %vm122, %v2097, 0
    %v2105 = vsel %vm122, %v2098, 0
    %v2108 = vsel %vm122, %v2099, 0
    %v2111 = vsel %vm122, %v2100, 0
    %2113 = vmatprep.subr.bf16.mxu0 %v2025
    %2114 = vmatpush1.bf16.msra.mxu0 %v2024
    %2115 = vmatprep.subr.bf16.mxu0 %v2027
    %2116 = vmatpush1.bf16.msra.mxu0 %v2026
    %2117 = vmatprep.subr.bf16.mxu0 %v2029
    %2118 = vmatpush1.bf16.msra.mxu0 %v2028
    %2119 = vmatprep.subr.bf16.mxu0 %v2031
    %2120 = vmatpush1.bf16.msra.mxu0 %v2030
    %2121 = vmatprep.subr.bf16.mxu0 0
    %2122 = vmatpush1.bf16.msra.mxu0 0
    %2123 = vmatprep.subr.bf16.mxu0 0
    %2124 = vmatpush1.bf16.msra.mxu0 0
    %2125 = vmatprep.subr.bf16.mxu0 0
    %2126 = vmatpush1.bf16.msra.mxu0 0
    %2127 = vmatprep.subr.bf16.mxu0 0
    %2128 = vmatpush1.bf16.msra.mxu0 0
    %2129 = vmatprep.subr.bf16.mxu0 0
    %2130 = vmatpush1.bf16.msra.mxu0 0
    %2131 = vmatprep.subr.bf16.mxu0 0
    %2132 = vmatpush1.bf16.msra.mxu0 0
    %2133 = vmatprep.subr.bf16.mxu0 0
    %2134 = vmatpush1.bf16.msra.mxu0 0
    %2135 = vmatprep.subr.bf16.mxu0 0
    %2136 = vmatpush1.bf16.msra.mxu0 0
    %2137 = vmatprep.subr.bf16.mxu0 0
    %2138 = vmatpush1.bf16.msra.mxu0 0
    %2139 = vmatprep.subr.bf16.mxu0 0
    %2140 = vmatpush1.bf16.msra.mxu0 0
    %2141 = vmatprep.subr.bf16.mxu0 0
    %2142 = vmatpush1.bf16.msra.mxu0 0
    %2143 = vmatprep.subr.bf16.mxu0 0
    %2144 = vmatpush1.bf16.msra.mxu0 0
    %2145 = vmatprep.mubr.bf16.mxu0 0
    %2146 = vmatmul.mubr.bf16.gmra.mrb[0].mxu0 %v2102
    %v2147 = vpop.f32.mrb[0].mxu0
    %v2148 = vadd.f32 %v2044, %v2147
    %v2149 = vpop.f32.mrb[0].mxu0
    %v2150 = vadd.f32 %v2044, %v2149
    %v2151 = vpop.f32.mrb[0].mxu0
    %v2152 = vadd.f32 %v2049, %v2151
    %v2153 = vpop.f32.mrb[0].mxu0
    %v2154 = vadd.f32 %v2049, %v2153
    %2155 = vmatprep.mubr.bf16.mxu0 0
    %2156 = vmatmul.mubr.bf16.gmra.mrb[0].mxu0 %v2105
    %v2157 = vpop.f32.mrb[0].mxu0
    %v2158 = vadd.f32 %v2054, %v2157
    %v2159 = vpop.f32.mrb[0].mxu0
    %v2160 = vadd.f32 %v2054, %v2159
    %v2161 = vpop.f32.mrb[0].mxu0
    %v2162 = vadd.f32 %v2059, %v2161
    %v2163 = vpop.f32.mrb[0].mxu0
    %v2164 = vadd.f32 %v2059, %v2163
    %2165 = vmatprep.mubr.bf16.mxu0 0
    %2166 = vmatmul.mubr.bf16.gmra.mrb[0].mxu0 %v2108
    %v2167 = vpop.f32.mrb[0].mxu0
    %v2168 = vadd.f32 %v2064, %v2167
    %v2169 = vpop.f32.mrb[0].mxu0
    %v2170 = vadd.f32 %v2064, %v2169
    %v2171 = vpop.f32.mrb[0].mxu0
    %v2172 = vadd.f32 %v2069, %v2171
    %v2173 = vpop.f32.mrb[0].mxu0
    %v2174 = vadd.f32 %v2069, %v2173
    %2175 = vmatprep.mubr.bf16.mxu0 0
    %2176 = vmatmul.mubr.bf16.gmra.mrb[0].mxu0 %v2111
    %v2177 = vpop.f32.mrb[0].mxu0
    %v2178 = vadd.f32 %v2074, %v2177
    %v2179 = vpop.f32.mrb[0].mxu0
    %v2180 = vadd.f32 %v2074, %v2179
    %v2181 = vpop.f32.mrb[0].mxu0
    %v2182 = vadd.f32 %v2079, %v2181
    %v2183 = vpop.f32.mrb[0].mxu0
    %v2184 = vadd.f32 %v2079, %v2183
    %2185 = vdwg.mxu0
    %v2186 = vadd.f32 %v2148, %v1625
    %v2187 = vadd.f32 %v2150, %v1626
    %v2188 = vadd.f32 %v2152, %v1627
    %v2189 = vadd.f32 %v2154, %v1628
    %v2190 = vadd.f32 %v2158, %v1629
    %v2191 = vadd.f32 %v2160, %v1630
    %v2192 = vadd.f32 %v2162, %v1631
    %v2193 = vadd.f32 %v2164, %v1632
    %v2194 = vadd.f32 %v2168, %v1633
    %v2195 = vadd.f32 %v2170, %v1634
    %v2196 = vadd.f32 %v2172, %v1635
    %v2197 = vadd.f32 %v2174, %v1636
    %v2198 = vadd.f32 %v2178, %v1637
    %v2199 = vadd.f32 %v2180, %v1638
    %v2200 = vadd.f32 %v2182, %v1639
    %v2201 = vadd.f32 %v2184, %v1640
    %v2202 = vadd.f32 %v2186, %v2188
    %v2203 = vadd.f32 %v2202, %v2190
    %v2204 = vadd.f32 %v2203, %v2192
    %v2205 = vadd.f32 %v2204, %v2194
    %v2206 = vadd.f32 %v2205, %v2196
    %v2207 = vadd.f32 %v2206, %v2198
    %v2208 = vadd.f32 %v2207, %v2200
    %v2209 = vrot.slane %v2208, 4
    %v2210 = vadd.f32 %v2208, %v2209
    %v2211 = vrot.slane %v2210, 2
    %v2212 = vadd.f32 %v2210, %v2211
    %v2213 = vrot.slane %v2212, 1
    %v2214 = vadd.f32 %v2212, %v2213
    %v2215 = vadd.f32 %v2187, %v2189
    %v2216 = vadd.f32 %v2215, %v2191
    %v2217 = vadd.f32 %v2216, %v2193
    %v2218 = vadd.f32 %v2217, %v2195
    %v2219 = vadd.f32 %v2218, %v2197
    %v2220 = vadd.f32 %v2219, %v2199
    %v2221 = vadd.f32 %v2220, %v2201
    %v2222 = vrot.slane %v2221, 4
    %v2223 = vadd.f32 %v2221, %v2222
    %v2224 = vrot.slane %v2223, 2
    %v2225 = vadd.f32 %v2223, %v2224
    %v2226 = vrot.slane %v2225, 1
    %v2227 = vadd.f32 %v2225, %v2226
    %v2228 = vmul.f32 %v2186, %v2186
    %v2229 = vmul.f32 %v2187, %v2187
    %v2230 = vmul.f32 %v2188, %v2188
    %v2231 = vmul.f32 %v2189, %v2189
    %v2232 = vmul.f32 %v2190, %v2190
    %v2233 = vmul.f32 %v2191, %v2191
    %v2234 = vmul.f32 %v2192, %v2192
    %v2235 = vmul.f32 %v2193, %v2193
    %v2236 = vmul.f32 %v2194, %v2194
    %v2237 = vmul.f32 %v2195, %v2195
    %v2238 = vmul.f32 %v2196, %v2196
    %v2239 = vmul.f32 %v2197, %v2197
    %v2240 = vmul.f32 %v2198, %v2198
    %v2241 = vmul.f32 %v2199, %v2199
    %v2242 = vmul.f32 %v2200, %v2200
    %v2243 = vmul.f32 %v2201, %v2201
    %v2244 = vadd.f32 %v2228, %v2230
    %v2245 = vadd.f32 %v2244, %v2232
    %v2246 = vadd.f32 %v2245, %v2234
    %v2247 = vadd.f32 %v2246, %v2236
    %v2248 = vadd.f32 %v2247, %v2238
    %v2249 = vadd.f32 %v2248, %v2240
    %v2250 = vadd.f32 %v2249, %v2242
    %v2251 = vrot.slane %v2250, 4
    %v2252 = vadd.f32 %v2250, %v2251
    %v2253 = vrot.slane %v2252, 2
    %v2254 = vadd.f32 %v2252, %v2253
    %v2255 = vrot.slane %v2254, 1
    %v2256 = vadd.f32 %v2254, %v2255
    %v2257 = vadd.f32 %v2229, %v2231
    %v2258 = vadd.f32 %v2257, %v2233
    %v2259 = vadd.f32 %v2258, %v2235
    %v2260 = vadd.f32 %v2259, %v2237
    %v2261 = vadd.f32 %v2260, %v2239
    %v2262 = vadd.f32 %v2261, %v2241
    %v2263 = vadd.f32 %v2262, %v2243
    %v2264 = vrot.slane %v2263, 4
    %v2265 = vadd.f32 %v2263, %v2264
    %v2266 = vrot.slane %v2265, 2
    %v2267 = vadd.f32 %v2265, %v2266
    %v2268 = vrot.slane %v2267, 1
    %v2269 = vadd.f32 %v2267, %v2268
    %v2270 = vmul.f32 %v2214, 0.015625
    %v2271 = vmul.f32 %v2227, 0.015625
    %v2272 = vmul.f32 %v2256, 0.015625
    %v2273 = vmul.f32 %v2269, 0.015625
    %v2274 = vmul.f32 %v2270, %v2270
    %v2275 = vmul.f32 %v2271, %v2271
    %v2276 = vsub.f32 %v2272, %v2274
    %v2277 = vsub.f32 %v2273, %v2275
    %v2278 = vadd.f32 %v2276, 1e-05
    %v2279 = vadd.f32 %v2277, 1e-05
    %v2280 = vrsqrt.pop %v2278
    %v2281 = vrsqrt.pop %v2279
    %v2282 = vsub.f32 %v2186, %v2270
    %v2283 = vsub.f32 %v2187, %v2271
    %v2284 = vsub.f32 %v2188, %v2270
    %v2285 = vsub.f32 %v2189, %v2271
    %v2286 = vsub.f32 %v2190, %v2270
    %v2287 = vsub.f32 %v2191, %v2271
    %v2288 = vsub.f32 %v2192, %v2270
    %v2289 = vsub.f32 %v2193, %v2271
    %v2290 = vsub.f32 %v2194, %v2270
    %v2291 = vsub.f32 %v2195, %v2271
    %v2292 = vsub.f32 %v2196, %v2270
    %v2293 = vsub.f32 %v2197, %v2271
    %v2294 = vsub.f32 %v2198, %v2270
    %v2295 = vsub.f32 %v2199, %v2271
    %v2296 = vsub.f32 %v2200, %v2270
    %v2297 = vsub.f32 %v2201, %v2271
    %v2298 = vmul.f32 %v2282, %v2280
    %v2299 = vmul.f32 %v2283, %v2281
    %v2300 = vmul.f32 %v2284, %v2280
    %v2301 = vmul.f32 %v2285, %v2281
    %v2302 = vmul.f32 %v2286, %v2280
    %v2303 = vmul.f32 %v2287, %v2281
    %v2304 = vmul.f32 %v2288, %v2280
    %v2305 = vmul.f32 %v2289, %v2281
    %v2306 = vmul.f32 %v2290, %v2280
    %v2307 = vmul.f32 %v2291, %v2281
    %v2308 = vmul.f32 %v2292, %v2280
    %v2309 = vmul.f32 %v2293, %v2281
    %v2310 = vmul.f32 %v2294, %v2280
    %v2311 = vmul.f32 %v2295, %v2281
    %v2312 = vmul.f32 %v2296, %v2280
    %v2313 = vmul.f32 %v2297, %v2281
    %s2314 = scalar_lea.vmem %s3, 128
    %v2315 = vld [vmem:[%s2314] sm:$0xff]
    %v2316 = vld [vmem:[%s2314 + $0x8] sm:$0xff]
    %v2317 = vld [vmem:[%s2314 + $0x10] sm:$0xff]
    %v2318 = vld [vmem:[%s2314 + $0x18] sm:$0xff]
    %v2319 = vld [vmem:[%s2314 + $0x20] sm:$0xff]
    %v2320 = vld [vmem:[%s2314 + $0x28] sm:$0xff]
    %v2321 = vld [vmem:[%s2314 + $0x30] sm:$0xff]
    %v2322 = vld [vmem:[%s2314 + $0x38] sm:$0xff]
    %2324 = vset.pattern.permute.xlu0 0
    %2325 = vperm.xlu0 %2324, %v2315
    %v2326 = vpop.permute.xlu0 %2325
    %2329 = vset.pattern.permute.xlu0 0
    %2330 = vperm.xlu0 %2329, %v2316
    %v2331 = vpop.permute.xlu0 %2330
    %2334 = vset.pattern.permute.xlu0 0
    %2335 = vperm.xlu0 %2334, %v2317
    %v2336 = vpop.permute.xlu0 %2335
    %2339 = vset.pattern.permute.xlu0 0
    %2340 = vperm.xlu0 %2339, %v2318
    %v2341 = vpop.permute.xlu0 %2340
    %2344 = vset.pattern.permute.xlu0 0
    %2345 = vperm.xlu0 %2344, %v2319
    %v2346 = vpop.permute.xlu0 %2345
    %2349 = vset.pattern.permute.xlu0 0
    %2350 = vperm.xlu0 %2349, %v2320
    %v2351 = vpop.permute.xlu0 %2350
    %2354 = vset.pattern.permute.xlu0 0
    %2355 = vperm.xlu0 %2354, %v2321
    %v2356 = vpop.permute.xlu0 %2355
    %2359 = vset.pattern.permute.xlu0 0
    %2360 = vperm.xlu0 %2359, %v2322
    %v2361 = vpop.permute.xlu0 %2360
    %v2363 = vmul.f32 %v2298, %v2326
    %v2364 = vmul.f32 %v2299, %v2326
    %v2365 = vmul.f32 %v2300, %v2331
    %v2366 = vmul.f32 %v2301, %v2331
    %v2367 = vmul.f32 %v2302, %v2336
    %v2368 = vmul.f32 %v2303, %v2336
    %v2369 = vmul.f32 %v2304, %v2341
    %v2370 = vmul.f32 %v2305, %v2341
    %v2371 = vmul.f32 %v2306, %v2346
    %v2372 = vmul.f32 %v2307, %v2346
    %v2373 = vmul.f32 %v2308, %v2351
    %v2374 = vmul.f32 %v2309, %v2351
    %v2375 = vmul.f32 %v2310, %v2356
    %v2376 = vmul.f32 %v2311, %v2356
    %v2377 = vmul.f32 %v2312, %v2361
    %v2378 = vmul.f32 %v2313, %v2361
    %s2379 = scalar_lea.vmem %s4, 128
    %v2380 = vld [vmem:[%s2379] sm:$0xff]
    %v2381 = vld [vmem:[%s2379 + $0x8] sm:$0xff]
    %v2382 = vld [vmem:[%s2379 + $0x10] sm:$0xff]
    %v2383 = vld [vmem:[%s2379 + $0x18] sm:$0xff]
    %v2384 = vld [vmem:[%s2379 + $0x20] sm:$0xff]
    %v2385 = vld [vmem:[%s2379 + $0x28] sm:$0xff]
    %v2386 = vld [vmem:[%s2379 + $0x30] sm:$0xff]
    %v2387 = vld [vmem:[%s2379 + $0x38] sm:$0xff]
    %2389 = vset.pattern.permute.xlu0 0
    %2390 = vperm.xlu0 %2389, %v2380
    %v2391 = vpop.permute.xlu0 %2390
    %2394 = vset.pattern.permute.xlu0 0
    %2395 = vperm.xlu0 %2394, %v2381
    %v2396 = vpop.permute.xlu0 %2395
    %2399 = vset.pattern.permute.xlu0 0
    %2400 = vperm.xlu0 %2399, %v2382
    %v2401 = vpop.permute.xlu0 %2400
    %2404 = vset.pattern.permute.xlu0 0
    %2405 = vperm.xlu0 %2404, %v2383
    %v2406 = vpop.permute.xlu0 %2405
    %2409 = vset.pattern.permute.xlu0 0
    %2410 = vperm.xlu0 %2409, %v2384
    %v2411 = vpop.permute.xlu0 %2410
    %2414 = vset.pattern.permute.xlu0 0
    %2415 = vperm.xlu0 %2414, %v2385
    %v2416 = vpop.permute.xlu0 %2415
    %2419 = vset.pattern.permute.xlu0 0
    %2420 = vperm.xlu0 %2419, %v2386
    %v2421 = vpop.permute.xlu0 %2420
    %2424 = vset.pattern.permute.xlu0 0
    %2425 = vperm.xlu0 %2424, %v2387
    %v2426 = vpop.permute.xlu0 %2425
    %v2428 = vadd.f32 %v2363, %v2391
    %v2429 = vadd.f32 %v2364, %v2391
    %v2430 = vadd.f32 %v2365, %v2396
    %v2431 = vadd.f32 %v2366, %v2396
    %v2432 = vadd.f32 %v2367, %v2401
    %v2433 = vadd.f32 %v2368, %v2401
    %v2434 = vadd.f32 %v2369, %v2406
    %v2435 = vadd.f32 %v2370, %v2406
    %v2436 = vadd.f32 %v2371, %v2411
    %v2437 = vadd.f32 %v2372, %v2411
    %v2438 = vadd.f32 %v2373, %v2416
    %v2439 = vadd.f32 %v2374, %v2416
    %v2440 = vadd.f32 %v2375, %v2421
    %v2441 = vadd.f32 %v2376, %v2421
    %v2442 = vadd.f32 %v2377, %v2426
    %v2443 = vadd.f32 %v2378, %v2426
    %s2444 = scalar_lea.vmem %s1, 288
    %v2445 = vld [vmem:[%s2444] sm:$0xf]
    %v2446 = vld [vmem:[%s2444 + $0x4] sm:$0xf]
    %v2447 = vld [vmem:[%s2444 + $0x8] sm:$0xf]
    %v2448 = vld [vmem:[%s2444 + $0xc] sm:$0xf]
    %v2449 = vld [vmem:[%s2444 + $0x10] sm:$0xf]
    %v2450 = vld [vmem:[%s2444 + $0x14] sm:$0xf]
    %v2451 = vld [vmem:[%s2444 + $0x18] sm:$0xf]
    %v2452 = vld [vmem:[%s2444 + $0x1c] sm:$0xf]
    %v2453 = vpack.c.bf16 %v2430, %v2428
    %v2454 = vpack.c.bf16 %v2431, %v2429
    %v2455 = vpack.c.bf16 %v2434, %v2432
    %v2456 = vpack.c.bf16 %v2435, %v2433
    %v2457 = vpack.c.bf16 %v2438, %v2436
    %v2458 = vpack.c.bf16 %v2439, %v2437
    %v2459 = vpack.c.bf16 %v2442, %v2440
    %v2460 = vpack.c.bf16 %v2443, %v2441
    %s2461 = scalar_lea.vmem %s2, 576
    %v2462 = vld [vmem:[%s2461] sm:$0xff]
    %v2463 = vld [vmem:[%s2461 + $0x8] sm:$0xff]
    %v2464 = vld [vmem:[%s2461 + $0x10] sm:$0xff]
    %v2465 = vld [vmem:[%s2461 + $0x18] sm:$0xff]
    %v2466 = vld [vmem:[%s2461 + $0x20] sm:$0xff]
    %v2467 = vld [vmem:[%s2461 + $0x28] sm:$0xff]
    %v2468 = vld [vmem:[%s2461 + $0x30] sm:$0xff]
    %v2469 = vld [vmem:[%s2461 + $0x38] sm:$0xff]
    %2471 = vset.pattern.permute.xlu0 0
    %2472 = vperm.xlu0 %2471, %v2462
    %v2473 = vpop.permute.xlu0 %2472
    %2476 = vset.pattern.permute.xlu0 0
    %2477 = vperm.xlu0 %2476, %v2463
    %v2478 = vpop.permute.xlu0 %2477
    %2481 = vset.pattern.permute.xlu0 0
    %2482 = vperm.xlu0 %2481, %v2464
    %v2483 = vpop.permute.xlu0 %2482
    %2486 = vset.pattern.permute.xlu0 0
    %2487 = vperm.xlu0 %2486, %v2465
    %v2488 = vpop.permute.xlu0 %2487
    %2491 = vset.pattern.permute.xlu0 0
    %2492 = vperm.xlu0 %2491, %v2466
    %v2493 = vpop.permute.xlu0 %2492
    %2496 = vset.pattern.permute.xlu0 0
    %2497 = vperm.xlu0 %2496, %v2467
    %v2498 = vpop.permute.xlu0 %2497
    %2501 = vset.pattern.permute.xlu0 0
    %2502 = vperm.xlu0 %2501, %v2468
    %v2503 = vpop.permute.xlu0 %2502
    %2506 = vset.pattern.permute.xlu0 0
    %2507 = vperm.xlu0 %2506, %v2469
    %v2508 = vpop.permute.xlu0 %2507
    %v2518 = vunpack.c.l.b16 %v2445
    %v2519 = vunpack.c.l.b16 %v2446
    %v2520 = vunpack.c.l.b16 %v2447
    %v2521 = vunpack.c.l.b16 %v2448
    %v2522 = vunpack.c.l.b16 %v2449
    %v2523 = vunpack.c.l.b16 %v2450
    %v2524 = vunpack.c.l.b16 %v2451
    %v2525 = vunpack.c.l.b16 %v2452
    %v2526 = vpack.c.b16 %v2519, %v2518
    %v2527 = vpack.c.b16 %v2521, %v2520
    %v2528 = vpack.c.b16 %v2523, %v2522
    %v2529 = vpack.c.b16 %v2525, %v2524
    %v2531 = vsel %vm122, %v2526, 0
    %v2534 = vsel %vm122, %v2527, 0
    %v2537 = vsel %vm122, %v2528, 0
    %v2540 = vsel %vm122, %v2529, 0
    %2542 = vmatprep.subr.bf16.mxu0 %v2454
    %2543 = vmatpush1.bf16.msra.mxu0 %v2453
    %2544 = vmatprep.subr.bf16.mxu0 %v2456
    %2545 = vmatpush1.bf16.msra.mxu0 %v2455
    %2546 = vmatprep.subr.bf16.mxu0 %v2458
    %2547 = vmatpush1.bf16.msra.mxu0 %v2457
    %2548 = vmatprep.subr.bf16.mxu0 %v2460
    %2549 = vmatpush1.bf16.msra.mxu0 %v2459
    %2550 = vmatprep.subr.bf16.mxu0 0
    %2551 = vmatpush1.bf16.msra.mxu0 0
    %2552 = vmatprep.subr.bf16.mxu0 0
    %2553 = vmatpush1.bf16.msra.mxu0 0
    %2554 = vmatprep.subr.bf16.mxu0 0
    %2555 = vmatpush1.bf16.msra.mxu0 0
    %2556 = vmatprep.subr.bf16.mxu0 0
    %2557 = vmatpush1.bf16.msra.mxu0 0
    %2558 = vmatprep.subr.bf16.mxu0 0
    %2559 = vmatpush1.bf16.msra.mxu0 0
    %2560 = vmatprep.subr.bf16.mxu0 0
    %2561 = vmatpush1.bf16.msra.mxu0 0
    %2562 = vmatprep.subr.bf16.mxu0 0
    %2563 = vmatpush1.bf16.msra.mxu0 0
    %2564 = vmatprep.subr.bf16.mxu0 0
    %2565 = vmatpush1.bf16.msra.mxu0 0
    %2566 = vmatprep.subr.bf16.mxu0 0
    %2567 = vmatpush1.bf16.msra.mxu0 0
    %2568 = vmatprep.subr.bf16.mxu0 0
    %2569 = vmatpush1.bf16.msra.mxu0 0
    %2570 = vmatprep.subr.bf16.mxu0 0
    %2571 = vmatpush1.bf16.msra.mxu0 0
    %2572 = vmatprep.subr.bf16.mxu0 0
    %2573 = vmatpush1.bf16.msra.mxu0 0
    %2574 = vmatprep.mubr.bf16.mxu0 0
    %2575 = vmatmul.mubr.bf16.gmra.mrb[0].mxu0 %v2531
    %v2576 = vpop.f32.mrb[0].mxu0
    %v2577 = vadd.f32 %v2473, %v2576
    %v2578 = vpop.f32.mrb[0].mxu0
    %v2579 = vadd.f32 %v2473, %v2578
    %v2580 = vpop.f32.mrb[0].mxu0
    %v2581 = vadd.f32 %v2478, %v2580
    %v2582 = vpop.f32.mrb[0].mxu0
    %v2583 = vadd.f32 %v2478, %v2582
    %2584 = vmatprep.mubr.bf16.mxu0 0
    %2585 = vmatmul.mubr.bf16.gmra.mrb[0].mxu0 %v2534
    %v2586 = vpop.f32.mrb[0].mxu0
    %v2587 = vadd.f32 %v2483, %v2586
    %v2588 = vpop.f32.mrb[0].mxu0
    %v2589 = vadd.f32 %v2483, %v2588
    %v2590 = vpop.f32.mrb[0].mxu0
    %v2591 = vadd.f32 %v2488, %v2590
    %v2592 = vpop.f32.mrb[0].mxu0
    %v2593 = vadd.f32 %v2488, %v2592
    %2594 = vmatprep.mubr.bf16.mxu0 0
    %2595 = vmatmul.mubr.bf16.gmra.mrb[0].mxu0 %v2537
    %v2596 = vpop.f32.mrb[0].mxu0
    %v2597 = vadd.f32 %v2493, %v2596
    %v2598 = vpop.f32.mrb[0].mxu0
    %v2599 = vadd.f32 %v2493, %v2598
    %v2600 = vpop.f32.mrb[0].mxu0
    %v2601 = vadd.f32 %v2498, %v2600
    %v2602 = vpop.f32.mrb[0].mxu0
    %v2603 = vadd.f32 %v2498, %v2602
    %2604 = vmatprep.mubr.bf16.mxu0 0
    %2605 = vmatmul.mubr.bf16.gmra.mrb[0].mxu0 %v2540
    %v2606 = vpop.f32.mrb[0].mxu0
    %v2607 = vadd.f32 %v2503, %v2606
    %v2608 = vpop.f32.mrb[0].mxu0
    %v2609 = vadd.f32 %v2503, %v2608
    %v2610 = vpop.f32.mrb[0].mxu0
    %v2611 = vadd.f32 %v2508, %v2610
    %v2612 = vpop.f32.mrb[0].mxu0
    %v2613 = vadd.f32 %v2508, %v2612
    %2614 = vdwg.mxu0
    %v2615 = vmax.f32 %v2577, 0.0
    %v2616 = vmax.f32 %v2579, 0.0
    %v2617 = vmax.f32 %v2581, 0.0
    %v2618 = vmax.f32 %v2583, 0.0
    %v2619 = vmax.f32 %v2587, 0.0
    %v2620 = vmax.f32 %v2589, 0.0
    %v2621 = vmax.f32 %v2591, 0.0
    %v2622 = vmax.f32 %v2593, 0.0
    %v2623 = vmax.f32 %v2597, 0.0
    %v2624 = vmax.f32 %v2599, 0.0
    %v2625 = vmax.f32 %v2601, 0.0
    %v2626 = vmax.f32 %v2603, 0.0
    %v2627 = vmax.f32 %v2607, 0.0
    %v2628 = vmax.f32 %v2609, 0.0
    %v2629 = vmax.f32 %v2611, 0.0
    %v2630 = vmax.f32 %v2613, 0.0
    %s2631 = scalar_lea.vmem %s1, 320
    %v2632 = vld [vmem:[%s2631] sm:$0xf]
    %v2633 = vld [vmem:[%s2631 + $0x4] sm:$0xf]
    %v2634 = vld [vmem:[%s2631 + $0x8] sm:$0xf]
    %v2635 = vld [vmem:[%s2631 + $0xc] sm:$0xf]
    %v2636 = vld [vmem:[%s2631 + $0x10] sm:$0xf]
    %v2637 = vld [vmem:[%s2631 + $0x14] sm:$0xf]
    %v2638 = vld [vmem:[%s2631 + $0x18] sm:$0xf]
    %v2639 = vld [vmem:[%s2631 + $0x1c] sm:$0xf]
    %v2640 = vpack.c.bf16 %v2617, %v2615
    %v2641 = vpack.c.bf16 %v2618, %v2616
    %v2642 = vpack.c.bf16 %v2621, %v2619
    %v2643 = vpack.c.bf16 %v2622, %v2620
    %v2644 = vpack.c.bf16 %v2625, %v2623
    %v2645 = vpack.c.bf16 %v2626, %v2624
    %v2646 = vpack.c.bf16 %v2629, %v2627
    %v2647 = vpack.c.bf16 %v2630, %v2628
    %s2648 = scalar_lea.vmem %s2, 640
    %v2649 = vld [vmem:[%s2648] sm:$0xff]
    %v2650 = vld [vmem:[%s2648 + $0x8] sm:$0xff]
    %v2651 = vld [vmem:[%s2648 + $0x10] sm:$0xff]
    %v2652 = vld [vmem:[%s2648 + $0x18] sm:$0xff]
    %v2653 = vld [vmem:[%s2648 + $0x20] sm:$0xff]
    %v2654 = vld [vmem:[%s2648 + $0x28] sm:$0xff]
    %v2655 = vld [vmem:[%s2648 + $0x30] sm:$0xff]
    %v2656 = vld [vmem:[%s2648 + $0x38] sm:$0xff]
    %2658 = vset.pattern.permute.xlu0 0
    %2659 = vperm.xlu0 %2658, %v2649
    %v2660 = vpop.permute.xlu0 %2659
    %2663 = vset.pattern.permute.xlu0 0
    %2664 = vperm.xlu0 %2663, %v2650
    %v2665 = vpop.permute.xlu0 %2664
    %2668 = vset.pattern.permute.xlu0 0
    %2669 = vperm.xlu0 %2668, %v2651
    %v2670 = vpop.permute.xlu0 %2669
    %2673 = vset.pattern.permute.xlu0 0
    %2674 = vperm.xlu0 %2673, %v2652
    %v2675 = vpop.permute.xlu0 %2674
    %2678 = vset.pattern.permute.xlu0 0
    %2679 = vperm.xlu0 %2678, %v2653
    %v2680 = vpop.permute.xlu0 %2679
    %2683 = vset.pattern.permute.xlu0 0
    %2684 = vperm.xlu0 %2683, %v2654
    %v2685 = vpop.permute.xlu0 %2684
    %2688 = vset.pattern.permute.xlu0 0
    %2689 = vperm.xlu0 %2688, %v2655
    %v2690 = vpop.permute.xlu0 %2689
    %2693 = vset.pattern.permute.xlu0 0
    %2694 = vperm.xlu0 %2693, %v2656
    %v2695 = vpop.permute.xlu0 %2694
    %v2705 = vunpack.c.l.b16 %v2632
    %v2706 = vunpack.c.l.b16 %v2633
    %v2707 = vunpack.c.l.b16 %v2634
    %v2708 = vunpack.c.l.b16 %v2635
    %v2709 = vunpack.c.l.b16 %v2636
    %v2710 = vunpack.c.l.b16 %v2637
    %v2711 = vunpack.c.l.b16 %v2638
    %v2712 = vunpack.c.l.b16 %v2639
    %v2713 = vpack.c.b16 %v2706, %v2705
    %v2714 = vpack.c.b16 %v2708, %v2707
    %v2715 = vpack.c.b16 %v2710, %v2709
    %v2716 = vpack.c.b16 %v2712, %v2711
    %v2718 = vsel %vm122, %v2713, 0
    %v2721 = vsel %vm122, %v2714, 0
    %v2724 = vsel %vm122, %v2715, 0
    %v2727 = vsel %vm122, %v2716, 0
    %2729 = vmatprep.subr.bf16.mxu0 %v2641
    %2730 = vmatpush1.bf16.msra.mxu0 %v2640
    %2731 = vmatprep.subr.bf16.mxu0 %v2643
    %2732 = vmatpush1.bf16.msra.mxu0 %v2642
    %2733 = vmatprep.subr.bf16.mxu0 %v2645
    %2734 = vmatpush1.bf16.msra.mxu0 %v2644
    %2735 = vmatprep.subr.bf16.mxu0 %v2647
    %2736 = vmatpush1.bf16.msra.mxu0 %v2646
    %2737 = vmatprep.subr.bf16.mxu0 0
    %2738 = vmatpush1.bf16.msra.mxu0 0
    %2739 = vmatprep.subr.bf16.mxu0 0
    %2740 = vmatpush1.bf16.msra.mxu0 0
    %2741 = vmatprep.subr.bf16.mxu0 0
    %2742 = vmatpush1.bf16.msra.mxu0 0
    %2743 = vmatprep.subr.bf16.mxu0 0
    %2744 = vmatpush1.bf16.msra.mxu0 0
    %2745 = vmatprep.subr.bf16.mxu0 0
    %2746 = vmatpush1.bf16.msra.mxu0 0
    %2747 = vmatprep.subr.bf16.mxu0 0
    %2748 = vmatpush1.bf16.msra.mxu0 0
    %2749 = vmatprep.subr.bf16.mxu0 0
    %2750 = vmatpush1.bf16.msra.mxu0 0
    %2751 = vmatprep.subr.bf16.mxu0 0
    %2752 = vmatpush1.bf16.msra.mxu0 0
    %2753 = vmatprep.subr.bf16.mxu0 0
    %2754 = vmatpush1.bf16.msra.mxu0 0
    %2755 = vmatprep.subr.bf16.mxu0 0
    %2756 = vmatpush1.bf16.msra.mxu0 0
    %2757 = vmatprep.subr.bf16.mxu0 0
    %2758 = vmatpush1.bf16.msra.mxu0 0
    %2759 = vmatprep.subr.bf16.mxu0 0
    %2760 = vmatpush1.bf16.msra.mxu0 0
    %2761 = vmatprep.mubr.bf16.mxu0 0
    %2762 = vmatmul.mubr.bf16.gmra.mrb[0].mxu0 %v2718
    %v2763 = vpop.f32.mrb[0].mxu0
    %v2764 = vadd.f32 %v2660, %v2763
    %v2765 = vpop.f32.mrb[0].mxu0
    %v2766 = vadd.f32 %v2660, %v2765
    %v2767 = vpop.f32.mrb[0].mxu0
    %v2768 = vadd.f32 %v2665, %v2767
    %v2769 = vpop.f32.mrb[0].mxu0
    %v2770 = vadd.f32 %v2665, %v2769
    %2771 = vmatprep.mubr.bf16.mxu0 0
    %2772 = vmatmul.mubr.bf16.gmra.mrb[0].mxu0 %v2721
    %v2773 = vpop.f32.mrb[0].mxu0
    %v2774 = vadd.f32 %v2670, %v2773
    %v2775 = vpop.f32.mrb[0].mxu0
    %v2776 = vadd.f32 %v2670, %v2775
    %v2777 = vpop.f32.mrb[0].mxu0
    %v2778 = vadd.f32 %v2675, %v2777
    %v2779 = vpop.f32.mrb[0].mxu0
    %v2780 = vadd.f32 %v2675, %v2779
    %2781 = vmatprep.mubr.bf16.mxu0 0
    %2782 = vmatmul.mubr.bf16.gmra.mrb[0].mxu0 %v2724
    %v2783 = vpop.f32.mrb[0].mxu0
    %v2784 = vadd.f32 %v2680, %v2783
    %v2785 = vpop.f32.mrb[0].mxu0
    %v2786 = vadd.f32 %v2680, %v2785
    %v2787 = vpop.f32.mrb[0].mxu0
    %v2788 = vadd.f32 %v2685, %v2787
    %v2789 = vpop.f32.mrb[0].mxu0
    %v2790 = vadd.f32 %v2685, %v2789
    %2791 = vmatprep.mubr.bf16.mxu0 0
    %2792 = vmatmul.mubr.bf16.gmra.mrb[0].mxu0 %v2727
    %v2793 = vpop.f32.mrb[0].mxu0
    %v2794 = vadd.f32 %v2690, %v2793
    %v2795 = vpop.f32.mrb[0].mxu0
    %v2796 = vadd.f32 %v2690, %v2795
    %v2797 = vpop.f32.mrb[0].mxu0
    %v2798 = vadd.f32 %v2695, %v2797
    %v2799 = vpop.f32.mrb[0].mxu0
    %v2800 = vadd.f32 %v2695, %v2799
    %2801 = vdwg.mxu0
    %v2802 = vmax.f32 %v2764, 0.0
    %v2803 = vmax.f32 %v2766, 0.0
    %v2804 = vmax.f32 %v2768, 0.0
    %v2805 = vmax.f32 %v2770, 0.0
    %v2806 = vmax.f32 %v2774, 0.0
    %v2807 = vmax.f32 %v2776, 0.0
    %v2808 = vmax.f32 %v2778, 0.0
    %v2809 = vmax.f32 %v2780, 0.0
    %v2810 = vmax.f32 %v2784, 0.0
    %v2811 = vmax.f32 %v2786, 0.0
    %v2812 = vmax.f32 %v2788, 0.0
    %v2813 = vmax.f32 %v2790, 0.0
    %v2814 = vmax.f32 %v2794, 0.0
    %v2815 = vmax.f32 %v2796, 0.0
    %v2816 = vmax.f32 %v2798, 0.0
    %v2817 = vmax.f32 %v2800, 0.0
    %s2818 = scalar_lea.vmem %s1, 352
    %v2819 = vld [vmem:[%s2818] sm:$0xf]
    %v2820 = vld [vmem:[%s2818 + $0x4] sm:$0xf]
    %v2821 = vld [vmem:[%s2818 + $0x8] sm:$0xf]
    %v2822 = vld [vmem:[%s2818 + $0xc] sm:$0xf]
    %v2823 = vld [vmem:[%s2818 + $0x10] sm:$0xf]
    %v2824 = vld [vmem:[%s2818 + $0x14] sm:$0xf]
    %v2825 = vld [vmem:[%s2818 + $0x18] sm:$0xf]
    %v2826 = vld [vmem:[%s2818 + $0x1c] sm:$0xf]
    %v2827 = vpack.c.bf16 %v2804, %v2802
    %v2828 = vpack.c.bf16 %v2805, %v2803
    %v2829 = vpack.c.bf16 %v2808, %v2806
    %v2830 = vpack.c.bf16 %v2809, %v2807
    %v2831 = vpack.c.bf16 %v2812, %v2810
    %v2832 = vpack.c.bf16 %v2813, %v2811
    %v2833 = vpack.c.bf16 %v2816, %v2814
    %v2834 = vpack.c.bf16 %v2817, %v2815
    %s2835 = scalar_lea.vmem %s2, 704
    %v2836 = vld [vmem:[%s2835] sm:$0xff]
    %v2837 = vld [vmem:[%s2835 + $0x8] sm:$0xff]
    %v2838 = vld [vmem:[%s2835 + $0x10] sm:$0xff]
    %v2839 = vld [vmem:[%s2835 + $0x18] sm:$0xff]
    %v2840 = vld [vmem:[%s2835 + $0x20] sm:$0xff]
    %v2841 = vld [vmem:[%s2835 + $0x28] sm:$0xff]
    %v2842 = vld [vmem:[%s2835 + $0x30] sm:$0xff]
    %v2843 = vld [vmem:[%s2835 + $0x38] sm:$0xff]
    %2845 = vset.pattern.permute.xlu0 0
    %2846 = vperm.xlu0 %2845, %v2836
    %v2847 = vpop.permute.xlu0 %2846
    %2850 = vset.pattern.permute.xlu0 0
    %2851 = vperm.xlu0 %2850, %v2837
    %v2852 = vpop.permute.xlu0 %2851
    %2855 = vset.pattern.permute.xlu0 0
    %2856 = vperm.xlu0 %2855, %v2838
    %v2857 = vpop.permute.xlu0 %2856
    %2860 = vset.pattern.permute.xlu0 0
    %2861 = vperm.xlu0 %2860, %v2839
    %v2862 = vpop.permute.xlu0 %2861
    %2865 = vset.pattern.permute.xlu0 0
    %2866 = vperm.xlu0 %2865, %v2840
    %v2867 = vpop.permute.xlu0 %2866
    %2870 = vset.pattern.permute.xlu0 0
    %2871 = vperm.xlu0 %2870, %v2841
    %v2872 = vpop.permute.xlu0 %2871
    %2875 = vset.pattern.permute.xlu0 0
    %2876 = vperm.xlu0 %2875, %v2842
    %v2877 = vpop.permute.xlu0 %2876
    %2880 = vset.pattern.permute.xlu0 0
    %2881 = vperm.xlu0 %2880, %v2843
    %v2882 = vpop.permute.xlu0 %2881
    %v2892 = vunpack.c.l.b16 %v2819
    %v2893 = vunpack.c.l.b16 %v2820
    %v2894 = vunpack.c.l.b16 %v2821
    %v2895 = vunpack.c.l.b16 %v2822
    %v2896 = vunpack.c.l.b16 %v2823
    %v2897 = vunpack.c.l.b16 %v2824
    %v2898 = vunpack.c.l.b16 %v2825
    %v2899 = vunpack.c.l.b16 %v2826
    %v2900 = vpack.c.b16 %v2893, %v2892
    %v2901 = vpack.c.b16 %v2895, %v2894
    %v2902 = vpack.c.b16 %v2897, %v2896
    %v2903 = vpack.c.b16 %v2899, %v2898
    %v2905 = vsel %vm122, %v2900, 0
    %v2908 = vsel %vm122, %v2901, 0
    %v2911 = vsel %vm122, %v2902, 0
    %v2914 = vsel %vm122, %v2903, 0
    %2916 = vmatprep.subr.bf16.mxu0 %v2828
    %2917 = vmatpush1.bf16.msra.mxu0 %v2827
    %2918 = vmatprep.subr.bf16.mxu0 %v2830
    %2919 = vmatpush1.bf16.msra.mxu0 %v2829
    %2920 = vmatprep.subr.bf16.mxu0 %v2832
    %2921 = vmatpush1.bf16.msra.mxu0 %v2831
    %2922 = vmatprep.subr.bf16.mxu0 %v2834
    %2923 = vmatpush1.bf16.msra.mxu0 %v2833
    %2924 = vmatprep.subr.bf16.mxu0 0
    %2925 = vmatpush1.bf16.msra.mxu0 0
    %2926 = vmatprep.subr.bf16.mxu0 0
    %2927 = vmatpush1.bf16.msra.mxu0 0
    %2928 = vmatprep.subr.bf16.mxu0 0
    %2929 = vmatpush1.bf16.msra.mxu0 0
    %2930 = vmatprep.subr.bf16.mxu0 0
    %2931 = vmatpush1.bf16.msra.mxu0 0
    %2932 = vmatprep.subr.bf16.mxu0 0
    %2933 = vmatpush1.bf16.msra.mxu0 0
    %2934 = vmatprep.subr.bf16.mxu0 0
    %2935 = vmatpush1.bf16.msra.mxu0 0
    %2936 = vmatprep.subr.bf16.mxu0 0
    %2937 = vmatpush1.bf16.msra.mxu0 0
    %2938 = vmatprep.subr.bf16.mxu0 0
    %2939 = vmatpush1.bf16.msra.mxu0 0
    %2940 = vmatprep.subr.bf16.mxu0 0
    %2941 = vmatpush1.bf16.msra.mxu0 0
    %2942 = vmatprep.subr.bf16.mxu0 0
    %2943 = vmatpush1.bf16.msra.mxu0 0
    %2944 = vmatprep.subr.bf16.mxu0 0
    %2945 = vmatpush1.bf16.msra.mxu0 0
    %2946 = vmatprep.subr.bf16.mxu0 0
    %2947 = vmatpush1.bf16.msra.mxu0 0
    %2948 = vmatprep.mubr.bf16.mxu0 0
    %2949 = vmatmul.mubr.bf16.gmra.mrb[0].mxu0 %v2905
    %v2950 = vpop.f32.mrb[0].mxu0
    %v2951 = vadd.f32 %v2847, %v2950
    %v2952 = vpop.f32.mrb[0].mxu0
    %v2953 = vadd.f32 %v2847, %v2952
    %v2954 = vpop.f32.mrb[0].mxu0
    %v2955 = vadd.f32 %v2852, %v2954
    %v2956 = vpop.f32.mrb[0].mxu0
    %v2957 = vadd.f32 %v2852, %v2956
    %2958 = vmatprep.mubr.bf16.mxu0 0
    %2959 = vmatmul.mubr.bf16.gmra.mrb[0].mxu0 %v2908
    %v2960 = vpop.f32.mrb[0].mxu0
    %v2961 = vadd.f32 %v2857, %v2960
    %v2962 = vpop.f32.mrb[0].mxu0
    %v2963 = vadd.f32 %v2857, %v2962
    %v2964 = vpop.f32.mrb[0].mxu0
    %v2965 = vadd.f32 %v2862, %v2964
    %v2966 = vpop.f32.mrb[0].mxu0
    %v2967 = vadd.f32 %v2862, %v2966
    %2968 = vmatprep.mubr.bf16.mxu0 0
    %2969 = vmatmul.mubr.bf16.gmra.mrb[0].mxu0 %v2911
    %v2970 = vpop.f32.mrb[0].mxu0
    %v2971 = vadd.f32 %v2867, %v2970
    %v2972 = vpop.f32.mrb[0].mxu0
    %v2973 = vadd.f32 %v2867, %v2972
    %v2974 = vpop.f32.mrb[0].mxu0
    %v2975 = vadd.f32 %v2872, %v2974
    %v2976 = vpop.f32.mrb[0].mxu0
    %v2977 = vadd.f32 %v2872, %v2976
    %2978 = vmatprep.mubr.bf16.mxu0 0
    %2979 = vmatmul.mubr.bf16.gmra.mrb[0].mxu0 %v2914
    %v2980 = vpop.f32.mrb[0].mxu0
    %v2981 = vadd.f32 %v2877, %v2980
    %v2982 = vpop.f32.mrb[0].mxu0
    %v2983 = vadd.f32 %v2877, %v2982
    %v2984 = vpop.f32.mrb[0].mxu0
    %v2985 = vadd.f32 %v2882, %v2984
    %v2986 = vpop.f32.mrb[0].mxu0
    %v2987 = vadd.f32 %v2882, %v2986
    %2988 = vdwg.mxu0
    %v2989 = vadd.f32 %v2951, %v2428
    %v2990 = vadd.f32 %v2953, %v2429
    %v2991 = vadd.f32 %v2955, %v2430
    %v2992 = vadd.f32 %v2957, %v2431
    %v2993 = vadd.f32 %v2961, %v2432
    %v2994 = vadd.f32 %v2963, %v2433
    %v2995 = vadd.f32 %v2965, %v2434
    %v2996 = vadd.f32 %v2967, %v2435
    %v2997 = vadd.f32 %v2971, %v2436
    %v2998 = vadd.f32 %v2973, %v2437
    %v2999 = vadd.f32 %v2975, %v2438
    %v3000 = vadd.f32 %v2977, %v2439
    %v3001 = vadd.f32 %v2981, %v2440
    %v3002 = vadd.f32 %v2983, %v2441
    %v3003 = vadd.f32 %v2985, %v2442
    %v3004 = vadd.f32 %v2987, %v2443
    %v3005 = vadd.f32 %v2989, %v2991
    %v3006 = vadd.f32 %v3005, %v2993
    %v3007 = vadd.f32 %v3006, %v2995
    %v3008 = vadd.f32 %v3007, %v2997
    %v3009 = vadd.f32 %v3008, %v2999
    %v3010 = vadd.f32 %v3009, %v3001
    %v3011 = vadd.f32 %v3010, %v3003
    %v3012 = vrot.slane %v3011, 4
    %v3013 = vadd.f32 %v3011, %v3012
    %v3014 = vrot.slane %v3013, 2
    %v3015 = vadd.f32 %v3013, %v3014
    %v3016 = vrot.slane %v3015, 1
    %v3017 = vadd.f32 %v3015, %v3016
    %v3018 = vadd.f32 %v2990, %v2992
    %v3019 = vadd.f32 %v3018, %v2994
    %v3020 = vadd.f32 %v3019, %v2996
    %v3021 = vadd.f32 %v3020, %v2998
    %v3022 = vadd.f32 %v3021, %v3000
    %v3023 = vadd.f32 %v3022, %v3002
    %v3024 = vadd.f32 %v3023, %v3004
    %v3025 = vrot.slane %v3024, 4
    %v3026 = vadd.f32 %v3024, %v3025
    %v3027 = vrot.slane %v3026, 2
    %v3028 = vadd.f32 %v3026, %v3027
    %v3029 = vrot.slane %v3028, 1
    %v3030 = vadd.f32 %v3028, %v3029
    %v3031 = vmul.f32 %v2989, %v2989
    %v3032 = vmul.f32 %v2990, %v2990
    %v3033 = vmul.f32 %v2991, %v2991
    %v3034 = vmul.f32 %v2992, %v2992
    %v3035 = vmul.f32 %v2993, %v2993
    %v3036 = vmul.f32 %v2994, %v2994
    %v3037 = vmul.f32 %v2995, %v2995
    %v3038 = vmul.f32 %v2996, %v2996
    %v3039 = vmul.f32 %v2997, %v2997
    %v3040 = vmul.f32 %v2998, %v2998
    %v3041 = vmul.f32 %v2999, %v2999
    %v3042 = vmul.f32 %v3000, %v3000
    %v3043 = vmul.f32 %v3001, %v3001
    %v3044 = vmul.f32 %v3002, %v3002
    %v3045 = vmul.f32 %v3003, %v3003
    %v3046 = vmul.f32 %v3004, %v3004
    %v3047 = vadd.f32 %v3031, %v3033
    %v3048 = vadd.f32 %v3047, %v3035
    %v3049 = vadd.f32 %v3048, %v3037
    %v3050 = vadd.f32 %v3049, %v3039
    %v3051 = vadd.f32 %v3050, %v3041
    %v3052 = vadd.f32 %v3051, %v3043
    %v3053 = vadd.f32 %v3052, %v3045
    %v3054 = vrot.slane %v3053, 4
    %v3055 = vadd.f32 %v3053, %v3054
    %v3056 = vrot.slane %v3055, 2
    %v3057 = vadd.f32 %v3055, %v3056
    %v3058 = vrot.slane %v3057, 1
    %v3059 = vadd.f32 %v3057, %v3058
    %v3060 = vadd.f32 %v3032, %v3034
    %v3061 = vadd.f32 %v3060, %v3036
    %v3062 = vadd.f32 %v3061, %v3038
    %v3063 = vadd.f32 %v3062, %v3040
    %v3064 = vadd.f32 %v3063, %v3042
    %v3065 = vadd.f32 %v3064, %v3044
    %v3066 = vadd.f32 %v3065, %v3046
    %v3067 = vrot.slane %v3066, 4
    %v3068 = vadd.f32 %v3066, %v3067
    %v3069 = vrot.slane %v3068, 2
    %v3070 = vadd.f32 %v3068, %v3069
    %v3071 = vrot.slane %v3070, 1
    %v3072 = vadd.f32 %v3070, %v3071
    %v3073 = vmul.f32 %v3017, 0.015625
    %v3074 = vmul.f32 %v3030, 0.015625
    %v3075 = vmul.f32 %v3059, 0.015625
    %v3076 = vmul.f32 %v3072, 0.015625
    %v3077 = vmul.f32 %v3073, %v3073
    %v3078 = vmul.f32 %v3074, %v3074
    %v3079 = vsub.f32 %v3075, %v3077
    %v3080 = vsub.f32 %v3076, %v3078
    %v3081 = vadd.f32 %v3079, 1e-05
    %v3082 = vadd.f32 %v3080, 1e-05
    %v3083 = vrsqrt.pop %v3081
    %v3084 = vrsqrt.pop %v3082
    %v3085 = vsub.f32 %v2989, %v3073
    %v3086 = vsub.f32 %v2990, %v3074
    %v3087 = vsub.f32 %v2991, %v3073
    %v3088 = vsub.f32 %v2992, %v3074
    %v3089 = vsub.f32 %v2993, %v3073
    %v3090 = vsub.f32 %v2994, %v3074
    %v3091 = vsub.f32 %v2995, %v3073
    %v3092 = vsub.f32 %v2996, %v3074
    %v3093 = vsub.f32 %v2997, %v3073
    %v3094 = vsub.f32 %v2998, %v3074
    %v3095 = vsub.f32 %v2999, %v3073
    %v3096 = vsub.f32 %v3000, %v3074
    %v3097 = vsub.f32 %v3001, %v3073
    %v3098 = vsub.f32 %v3002, %v3074
    %v3099 = vsub.f32 %v3003, %v3073
    %v3100 = vsub.f32 %v3004, %v3074
    %v3101 = vmul.f32 %v3085, %v3083
    %v3102 = vmul.f32 %v3086, %v3084
    %v3103 = vmul.f32 %v3087, %v3083
    %v3104 = vmul.f32 %v3088, %v3084
    %v3105 = vmul.f32 %v3089, %v3083
    %v3106 = vmul.f32 %v3090, %v3084
    %v3107 = vmul.f32 %v3091, %v3083
    %v3108 = vmul.f32 %v3092, %v3084
    %v3109 = vmul.f32 %v3093, %v3083
    %v3110 = vmul.f32 %v3094, %v3084
    %v3111 = vmul.f32 %v3095, %v3083
    %v3112 = vmul.f32 %v3096, %v3084
    %v3113 = vmul.f32 %v3097, %v3083
    %v3114 = vmul.f32 %v3098, %v3084
    %v3115 = vmul.f32 %v3099, %v3083
    %v3116 = vmul.f32 %v3100, %v3084
    %s3117 = scalar_lea.vmem %s3, 192
    %v3118 = vld [vmem:[%s3117] sm:$0xff]
    %v3119 = vld [vmem:[%s3117 + $0x8] sm:$0xff]
    %v3120 = vld [vmem:[%s3117 + $0x10] sm:$0xff]
    %v3121 = vld [vmem:[%s3117 + $0x18] sm:$0xff]
    %v3122 = vld [vmem:[%s3117 + $0x20] sm:$0xff]
    %v3123 = vld [vmem:[%s3117 + $0x28] sm:$0xff]
    %v3124 = vld [vmem:[%s3117 + $0x30] sm:$0xff]
    %v3125 = vld [vmem:[%s3117 + $0x38] sm:$0xff]
    %3127 = vset.pattern.permute.xlu0 0
    %3128 = vperm.xlu0 %3127, %v3118
    %v3129 = vpop.permute.xlu0 %3128
    %3132 = vset.pattern.permute.xlu0 0
    %3133 = vperm.xlu0 %3132, %v3119
    %v3134 = vpop.permute.xlu0 %3133
    %3137 = vset.pattern.permute.xlu0 0
    %3138 = vperm.xlu0 %3137, %v3120
    %v3139 = vpop.permute.xlu0 %3138
    %3142 = vset.pattern.permute.xlu0 0
    %3143 = vperm.xlu0 %3142, %v3121
    %v3144 = vpop.permute.xlu0 %3143
    %3147 = vset.pattern.permute.xlu0 0
    %3148 = vperm.xlu0 %3147, %v3122
    %v3149 = vpop.permute.xlu0 %3148
    %3152 = vset.pattern.permute.xlu0 0
    %3153 = vperm.xlu0 %3152, %v3123
    %v3154 = vpop.permute.xlu0 %3153
    %3157 = vset.pattern.permute.xlu0 0
    %3158 = vperm.xlu0 %3157, %v3124
    %v3159 = vpop.permute.xlu0 %3158
    %3162 = vset.pattern.permute.xlu0 0
    %3163 = vperm.xlu0 %3162, %v3125
    %v3164 = vpop.permute.xlu0 %3163
    %v3166 = vmul.f32 %v3101, %v3129
    %v3167 = vmul.f32 %v3102, %v3129
    %v3168 = vmul.f32 %v3103, %v3134
    %v3169 = vmul.f32 %v3104, %v3134
    %v3170 = vmul.f32 %v3105, %v3139
    %v3171 = vmul.f32 %v3106, %v3139
    %v3172 = vmul.f32 %v3107, %v3144
    %v3173 = vmul.f32 %v3108, %v3144
    %v3174 = vmul.f32 %v3109, %v3149
    %v3175 = vmul.f32 %v3110, %v3149
    %v3176 = vmul.f32 %v3111, %v3154
    %v3177 = vmul.f32 %v3112, %v3154
    %v3178 = vmul.f32 %v3113, %v3159
    %v3179 = vmul.f32 %v3114, %v3159
    %v3180 = vmul.f32 %v3115, %v3164
    %v3181 = vmul.f32 %v3116, %v3164
    %s3182 = scalar_lea.vmem %s4, 192
    %v3183 = vld [vmem:[%s3182] sm:$0xff]
    %v3184 = vld [vmem:[%s3182 + $0x8] sm:$0xff]
    %v3185 = vld [vmem:[%s3182 + $0x10] sm:$0xff]
    %v3186 = vld [vmem:[%s3182 + $0x18] sm:$0xff]
    %v3187 = vld [vmem:[%s3182 + $0x20] sm:$0xff]
    %v3188 = vld [vmem:[%s3182 + $0x28] sm:$0xff]
    %v3189 = vld [vmem:[%s3182 + $0x30] sm:$0xff]
    %v3190 = vld [vmem:[%s3182 + $0x38] sm:$0xff]
    %3192 = vset.pattern.permute.xlu0 0
    %3193 = vperm.xlu0 %3192, %v3183
    %v3194 = vpop.permute.xlu0 %3193
    %3197 = vset.pattern.permute.xlu0 0
    %3198 = vperm.xlu0 %3197, %v3184
    %v3199 = vpop.permute.xlu0 %3198
    %3202 = vset.pattern.permute.xlu0 0
    %3203 = vperm.xlu0 %3202, %v3185
    %v3204 = vpop.permute.xlu0 %3203
    %3207 = vset.pattern.permute.xlu0 0
    %3208 = vperm.xlu0 %3207, %v3186
    %v3209 = vpop.permute.xlu0 %3208
    %3212 = vset.pattern.permute.xlu0 0
    %3213 = vperm.xlu0 %3212, %v3187
    %v3214 = vpop.permute.xlu0 %3213
    %3217 = vset.pattern.permute.xlu0 0
    %3218 = vperm.xlu0 %3217, %v3188
    %v3219 = vpop.permute.xlu0 %3218
    %3222 = vset.pattern.permute.xlu0 0
    %3223 = vperm.xlu0 %3222, %v3189
    %v3224 = vpop.permute.xlu0 %3223
    %3227 = vset.pattern.permute.xlu0 0
    %3228 = vperm.xlu0 %3227, %v3190
    %v3229 = vpop.permute.xlu0 %3228
    %v3231 = vadd.f32 %v3166, %v3194
    %v3232 = vadd.f32 %v3167, %v3194
    %v3233 = vadd.f32 %v3168, %v3199
    %v3234 = vadd.f32 %v3169, %v3199
    %v3235 = vadd.f32 %v3170, %v3204
    %v3236 = vadd.f32 %v3171, %v3204
    %v3237 = vadd.f32 %v3172, %v3209
    %v3238 = vadd.f32 %v3173, %v3209
    %v3239 = vadd.f32 %v3174, %v3214
    %v3240 = vadd.f32 %v3175, %v3214
    %v3241 = vadd.f32 %v3176, %v3219
    %v3242 = vadd.f32 %v3177, %v3219
    %v3243 = vadd.f32 %v3178, %v3224
    %v3244 = vadd.f32 %v3179, %v3224
    %v3245 = vadd.f32 %v3180, %v3229
    %v3246 = vadd.f32 %v3181, %v3229
    %s3247 = scalar_lea.vmem %s1, 384
    %v3248 = vld [vmem:[%s3247] sm:$0xf]
    %v3249 = vld [vmem:[%s3247 + $0x4] sm:$0xf]
    %v3250 = vld [vmem:[%s3247 + $0x8] sm:$0xf]
    %v3251 = vld [vmem:[%s3247 + $0xc] sm:$0xf]
    %v3252 = vld [vmem:[%s3247 + $0x10] sm:$0xf]
    %v3253 = vld [vmem:[%s3247 + $0x14] sm:$0xf]
    %v3254 = vld [vmem:[%s3247 + $0x18] sm:$0xf]
    %v3255 = vld [vmem:[%s3247 + $0x1c] sm:$0xf]
    %v3256 = vpack.c.bf16 %v3233, %v3231
    %v3257 = vpack.c.bf16 %v3234, %v3232
    %v3258 = vpack.c.bf16 %v3237, %v3235
    %v3259 = vpack.c.bf16 %v3238, %v3236
    %v3260 = vpack.c.bf16 %v3241, %v3239
    %v3261 = vpack.c.bf16 %v3242, %v3240
    %v3262 = vpack.c.bf16 %v3245, %v3243
    %v3263 = vpack.c.bf16 %v3246, %v3244
    %s3264 = scalar_lea.vmem %s2, 768
    %v3265 = vld [vmem:[%s3264] sm:$0xff]
    %v3266 = vld [vmem:[%s3264 + $0x8] sm:$0xff]
    %v3267 = vld [vmem:[%s3264 + $0x10] sm:$0xff]
    %v3268 = vld [vmem:[%s3264 + $0x18] sm:$0xff]
    %v3269 = vld [vmem:[%s3264 + $0x20] sm:$0xff]
    %v3270 = vld [vmem:[%s3264 + $0x28] sm:$0xff]
    %v3271 = vld [vmem:[%s3264 + $0x30] sm:$0xff]
    %v3272 = vld [vmem:[%s3264 + $0x38] sm:$0xff]
    %3274 = vset.pattern.permute.xlu0 0
    %3275 = vperm.xlu0 %3274, %v3265
    %v3276 = vpop.permute.xlu0 %3275
    %3279 = vset.pattern.permute.xlu0 0
    %3280 = vperm.xlu0 %3279, %v3266
    %v3281 = vpop.permute.xlu0 %3280
    %3284 = vset.pattern.permute.xlu0 0
    %3285 = vperm.xlu0 %3284, %v3267
    %v3286 = vpop.permute.xlu0 %3285
    %3289 = vset.pattern.permute.xlu0 0
    %3290 = vperm.xlu0 %3289, %v3268
    %v3291 = vpop.permute.xlu0 %3290
    %3294 = vset.pattern.permute.xlu0 0
    %3295 = vperm.xlu0 %3294, %v3269
    %v3296 = vpop.permute.xlu0 %3295
    %3299 = vset.pattern.permute.xlu0 0
    %3300 = vperm.xlu0 %3299, %v3270
    %v3301 = vpop.permute.xlu0 %3300
    %3304 = vset.pattern.permute.xlu0 0
    %3305 = vperm.xlu0 %3304, %v3271
    %v3306 = vpop.permute.xlu0 %3305
    %3309 = vset.pattern.permute.xlu0 0
    %3310 = vperm.xlu0 %3309, %v3272
    %v3311 = vpop.permute.xlu0 %3310
    %v3321 = vunpack.c.l.b16 %v3248
    %v3322 = vunpack.c.l.b16 %v3249
    %v3323 = vunpack.c.l.b16 %v3250
    %v3324 = vunpack.c.l.b16 %v3251
    %v3325 = vunpack.c.l.b16 %v3252
    %v3326 = vunpack.c.l.b16 %v3253
    %v3327 = vunpack.c.l.b16 %v3254
    %v3328 = vunpack.c.l.b16 %v3255
    %v3329 = vpack.c.b16 %v3322, %v3321
    %v3330 = vpack.c.b16 %v3324, %v3323
    %v3331 = vpack.c.b16 %v3326, %v3325
    %v3332 = vpack.c.b16 %v3328, %v3327
    %v3334 = vsel %vm122, %v3329, 0
    %v3337 = vsel %vm122, %v3330, 0
    %v3340 = vsel %vm122, %v3331, 0
    %v3343 = vsel %vm122, %v3332, 0
    %3345 = vmatprep.subr.bf16.mxu0 %v3257
    %3346 = vmatpush1.bf16.msra.mxu0 %v3256
    %3347 = vmatprep.subr.bf16.mxu0 %v3259
    %3348 = vmatpush1.bf16.msra.mxu0 %v3258
    %3349 = vmatprep.subr.bf16.mxu0 %v3261
    %3350 = vmatpush1.bf16.msra.mxu0 %v3260
    %3351 = vmatprep.subr.bf16.mxu0 %v3263
    %3352 = vmatpush1.bf16.msra.mxu0 %v3262
    %3353 = vmatprep.subr.bf16.mxu0 0
    %3354 = vmatpush1.bf16.msra.mxu0 0
    %3355 = vmatprep.subr.bf16.mxu0 0
    %3356 = vmatpush1.bf16.msra.mxu0 0
    %3357 = vmatprep.subr.bf16.mxu0 0
    %3358 = vmatpush1.bf16.msra.mxu0 0
    %3359 = vmatprep.subr.bf16.mxu0 0
    %3360 = vmatpush1.bf16.msra.mxu0 0
    %3361 = vmatprep.subr.bf16.mxu0 0
    %3362 = vmatpush1.bf16.msra.mxu0 0
    %3363 = vmatprep.subr.bf16.mxu0 0
    %3364 = vmatpush1.bf16.msra.mxu0 0
    %3365 = vmatprep.subr.bf16.mxu0 0
    %3366 = vmatpush1.bf16.msra.mxu0 0
    %3367 = vmatprep.subr.bf16.mxu0 0
    %3368 = vmatpush1.bf16.msra.mxu0 0
    %3369 = vmatprep.subr.bf16.mxu0 0
    %3370 = vmatpush1.bf16.msra.mxu0 0
    %3371 = vmatprep.subr.bf16.mxu0 0
    %3372 = vmatpush1.bf16.msra.mxu0 0
    %3373 = vmatprep.subr.bf16.mxu0 0
    %3374 = vmatpush1.bf16.msra.mxu0 0
    %3375 = vmatprep.subr.bf16.mxu0 0
    %3376 = vmatpush1.bf16.msra.mxu0 0
    %3377 = vmatprep.mubr.bf16.mxu0 0
    %3378 = vmatmul.mubr.bf16.gmra.mrb[0].mxu0 %v3334
    %v3379 = vpop.f32.mrb[0].mxu0
    %v3380 = vadd.f32 %v3276, %v3379
    %v3381 = vpop.f32.mrb[0].mxu0
    %v3382 = vadd.f32 %v3276, %v3381
    %v3383 = vpop.f32.mrb[0].mxu0
    %v3384 = vadd.f32 %v3281, %v3383
    %v3385 = vpop.f32.mrb[0].mxu0
    %v3386 = vadd.f32 %v3281, %v3385
    %3387 = vmatprep.mubr.bf16.mxu0 0
    %3388 = vmatmul.mubr.bf16.gmra.mrb[0].mxu0 %v3337
    %v3389 = vpop.f32.mrb[0].mxu0
    %v3390 = vadd.f32 %v3286, %v3389
    %v3391 = vpop.f32.mrb[0].mxu0
    %v3392 = vadd.f32 %v3286, %v3391
    %v3393 = vpop.f32.mrb[0].mxu0
    %v3394 = vadd.f32 %v3291, %v3393
    %v3395 = vpop.f32.mrb[0].mxu0
    %v3396 = vadd.f32 %v3291, %v3395
    %3397 = vmatprep.mubr.bf16.mxu0 0
    %3398 = vmatmul.mubr.bf16.gmra.mrb[0].mxu0 %v3340
    %v3399 = vpop.f32.mrb[0].mxu0
    %v3400 = vadd.f32 %v3296, %v3399
    %v3401 = vpop.f32.mrb[0].mxu0
    %v3402 = vadd.f32 %v3296, %v3401
    %v3403 = vpop.f32.mrb[0].mxu0
    %v3404 = vadd.f32 %v3301, %v3403
    %v3405 = vpop.f32.mrb[0].mxu0
    %v3406 = vadd.f32 %v3301, %v3405
    %3407 = vmatprep.mubr.bf16.mxu0 0
    %3408 = vmatmul.mubr.bf16.gmra.mrb[0].mxu0 %v3343
    %v3409 = vpop.f32.mrb[0].mxu0
    %v3410 = vadd.f32 %v3306, %v3409
    %v3411 = vpop.f32.mrb[0].mxu0
    %v3412 = vadd.f32 %v3306, %v3411
    %v3413 = vpop.f32.mrb[0].mxu0
    %v3414 = vadd.f32 %v3311, %v3413
    %v3415 = vpop.f32.mrb[0].mxu0
    %v3416 = vadd.f32 %v3311, %v3415
    %3417 = vdwg.mxu0
    %v3418 = vmax.f32 %v3380, 0.0
    %v3419 = vmax.f32 %v3382, 0.0
    %v3420 = vmax.f32 %v3384, 0.0
    %v3421 = vmax.f32 %v3386, 0.0
    %v3422 = vmax.f32 %v3390, 0.0
    %v3423 = vmax.f32 %v3392, 0.0
    %v3424 = vmax.f32 %v3394, 0.0
    %v3425 = vmax.f32 %v3396, 0.0
    %v3426 = vmax.f32 %v3400, 0.0
    %v3427 = vmax.f32 %v3402, 0.0
    %v3428 = vmax.f32 %v3404, 0.0
    %v3429 = vmax.f32 %v3406, 0.0
    %v3430 = vmax.f32 %v3410, 0.0
    %v3431 = vmax.f32 %v3412, 0.0
    %v3432 = vmax.f32 %v3414, 0.0
    %v3433 = vmax.f32 %v3416, 0.0
    %s3434 = scalar_lea.vmem %s1, 416
    %v3435 = vld [vmem:[%s3434] sm:$0xf]
    %v3436 = vld [vmem:[%s3434 + $0x4] sm:$0xf]
    %v3437 = vld [vmem:[%s3434 + $0x8] sm:$0xf]
    %v3438 = vld [vmem:[%s3434 + $0xc] sm:$0xf]
    %v3439 = vld [vmem:[%s3434 + $0x10] sm:$0xf]
    %v3440 = vld [vmem:[%s3434 + $0x14] sm:$0xf]
    %v3441 = vld [vmem:[%s3434 + $0x18] sm:$0xf]
    %v3442 = vld [vmem:[%s3434 + $0x1c] sm:$0xf]
    %v3443 = vpack.c.bf16 %v3420, %v3418
    %v3444 = vpack.c.bf16 %v3421, %v3419
    %v3445 = vpack.c.bf16 %v3424, %v3422
    %v3446 = vpack.c.bf16 %v3425, %v3423
    %v3447 = vpack.c.bf16 %v3428, %v3426
    %v3448 = vpack.c.bf16 %v3429, %v3427
    %v3449 = vpack.c.bf16 %v3432, %v3430
    %v3450 = vpack.c.bf16 %v3433, %v3431
    %s3451 = scalar_lea.vmem %s2, 832
    %v3452 = vld [vmem:[%s3451] sm:$0xff]
    %v3453 = vld [vmem:[%s3451 + $0x8] sm:$0xff]
    %v3454 = vld [vmem:[%s3451 + $0x10] sm:$0xff]
    %v3455 = vld [vmem:[%s3451 + $0x18] sm:$0xff]
    %v3456 = vld [vmem:[%s3451 + $0x20] sm:$0xff]
    %v3457 = vld [vmem:[%s3451 + $0x28] sm:$0xff]
    %v3458 = vld [vmem:[%s3451 + $0x30] sm:$0xff]
    %v3459 = vld [vmem:[%s3451 + $0x38] sm:$0xff]
    %3461 = vset.pattern.permute.xlu0 0
    %3462 = vperm.xlu0 %3461, %v3452
    %v3463 = vpop.permute.xlu0 %3462
    %3466 = vset.pattern.permute.xlu0 0
    %3467 = vperm.xlu0 %3466, %v3453
    %v3468 = vpop.permute.xlu0 %3467
    %3471 = vset.pattern.permute.xlu0 0
    %3472 = vperm.xlu0 %3471, %v3454
    %v3473 = vpop.permute.xlu0 %3472
    %3476 = vset.pattern.permute.xlu0 0
    %3477 = vperm.xlu0 %3476, %v3455
    %v3478 = vpop.permute.xlu0 %3477
    %3481 = vset.pattern.permute.xlu0 0
    %3482 = vperm.xlu0 %3481, %v3456
    %v3483 = vpop.permute.xlu0 %3482
    %3486 = vset.pattern.permute.xlu0 0
    %3487 = vperm.xlu0 %3486, %v3457
    %v3488 = vpop.permute.xlu0 %3487
    %3491 = vset.pattern.permute.xlu0 0
    %3492 = vperm.xlu0 %3491, %v3458
    %v3493 = vpop.permute.xlu0 %3492
    %3496 = vset.pattern.permute.xlu0 0
    %3497 = vperm.xlu0 %3496, %v3459
    %v3498 = vpop.permute.xlu0 %3497
    %v3508 = vunpack.c.l.b16 %v3435
    %v3509 = vunpack.c.l.b16 %v3436
    %v3510 = vunpack.c.l.b16 %v3437
    %v3511 = vunpack.c.l.b16 %v3438
    %v3512 = vunpack.c.l.b16 %v3439
    %v3513 = vunpack.c.l.b16 %v3440
    %v3514 = vunpack.c.l.b16 %v3441
    %v3515 = vunpack.c.l.b16 %v3442
    %v3516 = vpack.c.b16 %v3509, %v3508
    %v3517 = vpack.c.b16 %v3511, %v3510
    %v3518 = vpack.c.b16 %v3513, %v3512
    %v3519 = vpack.c.b16 %v3515, %v3514
    %v3521 = vsel %vm122, %v3516, 0
    %v3524 = vsel %vm122, %v3517, 0
    %v3527 = vsel %vm122, %v3518, 0
    %v3530 = vsel %vm122, %v3519, 0
    %3532 = vmatprep.subr.bf16.mxu0 %v3444
    %3533 = vmatpush1.bf16.msra.mxu0 %v3443
    %3534 = vmatprep.subr.bf16.mxu0 %v3446
    %3535 = vmatpush1.bf16.msra.mxu0 %v3445
    %3536 = vmatprep.subr.bf16.mxu0 %v3448
    %3537 = vmatpush1.bf16.msra.mxu0 %v3447
    %3538 = vmatprep.subr.bf16.mxu0 %v3450
    %3539 = vmatpush1.bf16.msra.mxu0 %v3449
    %3540 = vmatprep.subr.bf16.mxu0 0
    %3541 = vmatpush1.bf16.msra.mxu0 0
    %3542 = vmatprep.subr.bf16.mxu0 0
    %3543 = vmatpush1.bf16.msra.mxu0 0
    %3544 = vmatprep.subr.bf16.mxu0 0
    %3545 = vmatpush1.bf16.msra.mxu0 0
    %3546 = vmatprep.subr.bf16.mxu0 0
    %3547 = vmatpush1.bf16.msra.mxu0 0
    %3548 = vmatprep.subr.bf16.mxu0 0
    %3549 = vmatpush1.bf16.msra.mxu0 0
    %3550 = vmatprep.subr.bf16.mxu0 0
    %3551 = vmatpush1.bf16.msra.mxu0 0
    %3552 = vmatprep.subr.bf16.mxu0 0
    %3553 = vmatpush1.bf16.msra.mxu0 0
    %3554 = vmatprep.subr.bf16.mxu0 0
    %3555 = vmatpush1.bf16.msra.mxu0 0
    %3556 = vmatprep.subr.bf16.mxu0 0
    %3557 = vmatpush1.bf16.msra.mxu0 0
    %3558 = vmatprep.subr.bf16.mxu0 0
    %3559 = vmatpush1.bf16.msra.mxu0 0
    %3560 = vmatprep.subr.bf16.mxu0 0
    %3561 = vmatpush1.bf16.msra.mxu0 0
    %3562 = vmatprep.subr.bf16.mxu0 0
    %3563 = vmatpush1.bf16.msra.mxu0 0
    %3564 = vmatprep.mubr.bf16.mxu0 0
    %3565 = vmatmul.mubr.bf16.gmra.mrb[0].mxu0 %v3521
    %v3566 = vpop.f32.mrb[0].mxu0
    %v3567 = vadd.f32 %v3463, %v3566
    %v3568 = vpop.f32.mrb[0].mxu0
    %v3569 = vadd.f32 %v3463, %v3568
    %v3570 = vpop.f32.mrb[0].mxu0
    %v3571 = vadd.f32 %v3468, %v3570
    %v3572 = vpop.f32.mrb[0].mxu0
    %v3573 = vadd.f32 %v3468, %v3572
    %3574 = vmatprep.mubr.bf16.mxu0 0
    %3575 = vmatmul.mubr.bf16.gmra.mrb[0].mxu0 %v3524
    %v3576 = vpop.f32.mrb[0].mxu0
    %v3577 = vadd.f32 %v3473, %v3576
    %v3578 = vpop.f32.mrb[0].mxu0
    %v3579 = vadd.f32 %v3473, %v3578
    %v3580 = vpop.f32.mrb[0].mxu0
    %v3581 = vadd.f32 %v3478, %v3580
    %v3582 = vpop.f32.mrb[0].mxu0
    %v3583 = vadd.f32 %v3478, %v3582
    %3584 = vmatprep.mubr.bf16.mxu0 0
    %3585 = vmatmul.mubr.bf16.gmra.mrb[0].mxu0 %v3527
    %v3586 = vpop.f32.mrb[0].mxu0
    %v3587 = vadd.f32 %v3483, %v3586
    %v3588 = vpop.f32.mrb[0].mxu0
    %v3589 = vadd.f32 %v3483, %v3588
    %v3590 = vpop.f32.mrb[0].mxu0
    %v3591 = vadd.f32 %v3488, %v3590
    %v3592 = vpop.f32.mrb[0].mxu0
    %v3593 = vadd.f32 %v3488, %v3592
    %3594 = vmatprep.mubr.bf16.mxu0 0
    %3595 = vmatmul.mubr.bf16.gmra.mrb[0].mxu0 %v3530
    %v3596 = vpop.f32.mrb[0].mxu0
    %v3597 = vadd.f32 %v3493, %v3596
    %v3598 = vpop.f32.mrb[0].mxu0
    %v3599 = vadd.f32 %v3493, %v3598
    %v3600 = vpop.f32.mrb[0].mxu0
    %v3601 = vadd.f32 %v3498, %v3600
    %v3602 = vpop.f32.mrb[0].mxu0
    %v3603 = vadd.f32 %v3498, %v3602
    %3604 = vdwg.mxu0
    %v3605 = vmax.f32 %v3567, 0.0
    %v3606 = vmax.f32 %v3569, 0.0
    %v3607 = vmax.f32 %v3571, 0.0
    %v3608 = vmax.f32 %v3573, 0.0
    %v3609 = vmax.f32 %v3577, 0.0
    %v3610 = vmax.f32 %v3579, 0.0
    %v3611 = vmax.f32 %v3581, 0.0
    %v3612 = vmax.f32 %v3583, 0.0
    %v3613 = vmax.f32 %v3587, 0.0
    %v3614 = vmax.f32 %v3589, 0.0
    %v3615 = vmax.f32 %v3591, 0.0
    %v3616 = vmax.f32 %v3593, 0.0
    %v3617 = vmax.f32 %v3597, 0.0
    %v3618 = vmax.f32 %v3599, 0.0
    %v3619 = vmax.f32 %v3601, 0.0
    %v3620 = vmax.f32 %v3603, 0.0
    %s3621 = scalar_lea.vmem %s1, 448
    %v3622 = vld [vmem:[%s3621] sm:$0xf]
    %v3623 = vld [vmem:[%s3621 + $0x4] sm:$0xf]
    %v3624 = vld [vmem:[%s3621 + $0x8] sm:$0xf]
    %v3625 = vld [vmem:[%s3621 + $0xc] sm:$0xf]
    %v3626 = vld [vmem:[%s3621 + $0x10] sm:$0xf]
    %v3627 = vld [vmem:[%s3621 + $0x14] sm:$0xf]
    %v3628 = vld [vmem:[%s3621 + $0x18] sm:$0xf]
    %v3629 = vld [vmem:[%s3621 + $0x1c] sm:$0xf]
    %v3630 = vpack.c.bf16 %v3607, %v3605
    %v3631 = vpack.c.bf16 %v3608, %v3606
    %v3632 = vpack.c.bf16 %v3611, %v3609
    %v3633 = vpack.c.bf16 %v3612, %v3610
    %v3634 = vpack.c.bf16 %v3615, %v3613
    %v3635 = vpack.c.bf16 %v3616, %v3614
    %v3636 = vpack.c.bf16 %v3619, %v3617
    %v3637 = vpack.c.bf16 %v3620, %v3618
    %s3638 = scalar_lea.vmem %s2, 896
    %v3639 = vld [vmem:[%s3638] sm:$0xff]
    %v3640 = vld [vmem:[%s3638 + $0x8] sm:$0xff]
    %v3641 = vld [vmem:[%s3638 + $0x10] sm:$0xff]
    %v3642 = vld [vmem:[%s3638 + $0x18] sm:$0xff]
    %v3643 = vld [vmem:[%s3638 + $0x20] sm:$0xff]
    %v3644 = vld [vmem:[%s3638 + $0x28] sm:$0xff]
    %v3645 = vld [vmem:[%s3638 + $0x30] sm:$0xff]
    %v3646 = vld [vmem:[%s3638 + $0x38] sm:$0xff]
    %3648 = vset.pattern.permute.xlu0 0
    %3649 = vperm.xlu0 %3648, %v3639
    %v3650 = vpop.permute.xlu0 %3649
    %3653 = vset.pattern.permute.xlu0 0
    %3654 = vperm.xlu0 %3653, %v3640
    %v3655 = vpop.permute.xlu0 %3654
    %3658 = vset.pattern.permute.xlu0 0
    %3659 = vperm.xlu0 %3658, %v3641
    %v3660 = vpop.permute.xlu0 %3659
    %3663 = vset.pattern.permute.xlu0 0
    %3664 = vperm.xlu0 %3663, %v3642
    %v3665 = vpop.permute.xlu0 %3664
    %3668 = vset.pattern.permute.xlu0 0
    %3669 = vperm.xlu0 %3668, %v3643
    %v3670 = vpop.permute.xlu0 %3669
    %3673 = vset.pattern.permute.xlu0 0
    %3674 = vperm.xlu0 %3673, %v3644
    %v3675 = vpop.permute.xlu0 %3674
    %3678 = vset.pattern.permute.xlu0 0
    %3679 = vperm.xlu0 %3678, %v3645
    %v3680 = vpop.permute.xlu0 %3679
    %3683 = vset.pattern.permute.xlu0 0
    %3684 = vperm.xlu0 %3683, %v3646
    %v3685 = vpop.permute.xlu0 %3684
    %v3695 = vunpack.c.l.b16 %v3622
    %v3696 = vunpack.c.l.b16 %v3623
    %v3697 = vunpack.c.l.b16 %v3624
    %v3698 = vunpack.c.l.b16 %v3625
    %v3699 = vunpack.c.l.b16 %v3626
    %v3700 = vunpack.c.l.b16 %v3627
    %v3701 = vunpack.c.l.b16 %v3628
    %v3702 = vunpack.c.l.b16 %v3629
    %v3703 = vpack.c.b16 %v3696, %v3695
    %v3704 = vpack.c.b16 %v3698, %v3697
    %v3705 = vpack.c.b16 %v3700, %v3699
    %v3706 = vpack.c.b16 %v3702, %v3701
    %v3708 = vsel %vm122, %v3703, 0
    %v3711 = vsel %vm122, %v3704, 0
    %v3714 = vsel %vm122, %v3705, 0
    %v3717 = vsel %vm122, %v3706, 0
    %3719 = vmatprep.subr.bf16.mxu0 %v3631
    %3720 = vmatpush1.bf16.msra.mxu0 %v3630
    %3721 = vmatprep.subr.bf16.mxu0 %v3633
    %3722 = vmatpush1.bf16.msra.mxu0 %v3632
    %3723 = vmatprep.subr.bf16.mxu0 %v3635
    %3724 = vmatpush1.bf16.msra.mxu0 %v3634
    %3725 = vmatprep.subr.bf16.mxu0 %v3637
    %3726 = vmatpush1.bf16.msra.mxu0 %v3636
    %3727 = vmatprep.subr.bf16.mxu0 0
    %3728 = vmatpush1.bf16.msra.mxu0 0
    %3729 = vmatprep.subr.bf16.mxu0 0
    %3730 = vmatpush1.bf16.msra.mxu0 0
    %3731 = vmatprep.subr.bf16.mxu0 0
    %3732 = vmatpush1.bf16.msra.mxu0 0
    %3733 = vmatprep.subr.bf16.mxu0 0
    %3734 = vmatpush1.bf16.msra.mxu0 0
    %3735 = vmatprep.subr.bf16.mxu0 0
    %3736 = vmatpush1.bf16.msra.mxu0 0
    %3737 = vmatprep.subr.bf16.mxu0 0
    %3738 = vmatpush1.bf16.msra.mxu0 0
    %3739 = vmatprep.subr.bf16.mxu0 0
    %3740 = vmatpush1.bf16.msra.mxu0 0
    %3741 = vmatprep.subr.bf16.mxu0 0
    %3742 = vmatpush1.bf16.msra.mxu0 0
    %3743 = vmatprep.subr.bf16.mxu0 0
    %3744 = vmatpush1.bf16.msra.mxu0 0
    %3745 = vmatprep.subr.bf16.mxu0 0
    %3746 = vmatpush1.bf16.msra.mxu0 0
    %3747 = vmatprep.subr.bf16.mxu0 0
    %3748 = vmatpush1.bf16.msra.mxu0 0
    %3749 = vmatprep.subr.bf16.mxu0 0
    %3750 = vmatpush1.bf16.msra.mxu0 0
    %3751 = vmatprep.mubr.bf16.mxu0 0
    %3752 = vmatmul.mubr.bf16.gmra.mrb[0].mxu0 %v3708
    %v3753 = vpop.f32.mrb[0].mxu0
    %v3754 = vadd.f32 %v3650, %v3753
    %v3755 = vpop.f32.mrb[0].mxu0
    %v3756 = vadd.f32 %v3650, %v3755
    %v3757 = vpop.f32.mrb[0].mxu0
    %v3758 = vadd.f32 %v3655, %v3757
    %v3759 = vpop.f32.mrb[0].mxu0
    %v3760 = vadd.f32 %v3655, %v3759
    %3761 = vmatprep.mubr.bf16.mxu0 0
    %3762 = vmatmul.mubr.bf16.gmra.mrb[0].mxu0 %v3711
    %v3763 = vpop.f32.mrb[0].mxu0
    %v3764 = vadd.f32 %v3660, %v3763
    %v3765 = vpop.f32.mrb[0].mxu0
    %v3766 = vadd.f32 %v3660, %v3765
    %v3767 = vpop.f32.mrb[0].mxu0
    %v3768 = vadd.f32 %v3665, %v3767
    %v3769 = vpop.f32.mrb[0].mxu0
    %v3770 = vadd.f32 %v3665, %v3769
    %3771 = vmatprep.mubr.bf16.mxu0 0
    %3772 = vmatmul.mubr.bf16.gmra.mrb[0].mxu0 %v3714
    %v3773 = vpop.f32.mrb[0].mxu0
    %v3774 = vadd.f32 %v3670, %v3773
    %v3775 = vpop.f32.mrb[0].mxu0
    %v3776 = vadd.f32 %v3670, %v3775
    %v3777 = vpop.f32.mrb[0].mxu0
    %v3778 = vadd.f32 %v3675, %v3777
    %v3779 = vpop.f32.mrb[0].mxu0
    %v3780 = vadd.f32 %v3675, %v3779
    %3781 = vmatprep.mubr.bf16.mxu0 0
    %3782 = vmatmul.mubr.bf16.gmra.mrb[0].mxu0 %v3717
    %v3783 = vpop.f32.mrb[0].mxu0
    %v3784 = vadd.f32 %v3680, %v3783
    %v3785 = vpop.f32.mrb[0].mxu0
    %v3786 = vadd.f32 %v3680, %v3785
    %v3787 = vpop.f32.mrb[0].mxu0
    %v3788 = vadd.f32 %v3685, %v3787
    %v3789 = vpop.f32.mrb[0].mxu0
    %v3790 = vadd.f32 %v3685, %v3789
    %3791 = vdwg.mxu0
    %v3792 = vadd.f32 %v3754, %v3231
    %v3793 = vadd.f32 %v3756, %v3232
    %v3794 = vadd.f32 %v3758, %v3233
    %v3795 = vadd.f32 %v3760, %v3234
    %v3796 = vadd.f32 %v3764, %v3235
    %v3797 = vadd.f32 %v3766, %v3236
    %v3798 = vadd.f32 %v3768, %v3237
    %v3799 = vadd.f32 %v3770, %v3238
    %v3800 = vadd.f32 %v3774, %v3239
    %v3801 = vadd.f32 %v3776, %v3240
    %v3802 = vadd.f32 %v3778, %v3241
    %v3803 = vadd.f32 %v3780, %v3242
    %v3804 = vadd.f32 %v3784, %v3243
    %v3805 = vadd.f32 %v3786, %v3244
    %v3806 = vadd.f32 %v3788, %v3245
    %v3807 = vadd.f32 %v3790, %v3246
    %v3808 = vadd.f32 %v3792, %v3794
    %v3809 = vadd.f32 %v3808, %v3796
    %v3810 = vadd.f32 %v3809, %v3798
    %v3811 = vadd.f32 %v3810, %v3800
    %v3812 = vadd.f32 %v3811, %v3802
    %v3813 = vadd.f32 %v3812, %v3804
    %v3814 = vadd.f32 %v3813, %v3806
    %v3815 = vrot.slane %v3814, 4
    %v3816 = vadd.f32 %v3814, %v3815
    %v3817 = vrot.slane %v3816, 2
    %v3818 = vadd.f32 %v3816, %v3817
    %v3819 = vrot.slane %v3818, 1
    %v3820 = vadd.f32 %v3818, %v3819
    %v3821 = vadd.f32 %v3793, %v3795
    %v3822 = vadd.f32 %v3821, %v3797
    %v3823 = vadd.f32 %v3822, %v3799
    %v3824 = vadd.f32 %v3823, %v3801
    %v3825 = vadd.f32 %v3824, %v3803
    %v3826 = vadd.f32 %v3825, %v3805
    %v3827 = vadd.f32 %v3826, %v3807
    %v3828 = vrot.slane %v3827, 4
    %v3829 = vadd.f32 %v3827, %v3828
    %v3830 = vrot.slane %v3829, 2
    %v3831 = vadd.f32 %v3829, %v3830
    %v3832 = vrot.slane %v3831, 1
    %v3833 = vadd.f32 %v3831, %v3832
    %v3834 = vmul.f32 %v3792, %v3792
    %v3835 = vmul.f32 %v3793, %v3793
    %v3836 = vmul.f32 %v3794, %v3794
    %v3837 = vmul.f32 %v3795, %v3795
    %v3838 = vmul.f32 %v3796, %v3796
    %v3839 = vmul.f32 %v3797, %v3797
    %v3840 = vmul.f32 %v3798, %v3798
    %v3841 = vmul.f32 %v3799, %v3799
    %v3842 = vmul.f32 %v3800, %v3800
    %v3843 = vmul.f32 %v3801, %v3801
    %v3844 = vmul.f32 %v3802, %v3802
    %v3845 = vmul.f32 %v3803, %v3803
    %v3846 = vmul.f32 %v3804, %v3804
    %v3847 = vmul.f32 %v3805, %v3805
    %v3848 = vmul.f32 %v3806, %v3806
    %v3849 = vmul.f32 %v3807, %v3807
    %v3850 = vadd.f32 %v3834, %v3836
    %v3851 = vadd.f32 %v3850, %v3838
    %v3852 = vadd.f32 %v3851, %v3840
    %v3853 = vadd.f32 %v3852, %v3842
    %v3854 = vadd.f32 %v3853, %v3844
    %v3855 = vadd.f32 %v3854, %v3846
    %v3856 = vadd.f32 %v3855, %v3848
    %v3857 = vrot.slane %v3856, 4
    %v3858 = vadd.f32 %v3856, %v3857
    %v3859 = vrot.slane %v3858, 2
    %v3860 = vadd.f32 %v3858, %v3859
    %v3861 = vrot.slane %v3860, 1
    %v3862 = vadd.f32 %v3860, %v3861
    %v3863 = vadd.f32 %v3835, %v3837
    %v3864 = vadd.f32 %v3863, %v3839
    %v3865 = vadd.f32 %v3864, %v3841
    %v3866 = vadd.f32 %v3865, %v3843
    %v3867 = vadd.f32 %v3866, %v3845
    %v3868 = vadd.f32 %v3867, %v3847
    %v3869 = vadd.f32 %v3868, %v3849
    %v3870 = vrot.slane %v3869, 4
    %v3871 = vadd.f32 %v3869, %v3870
    %v3872 = vrot.slane %v3871, 2
    %v3873 = vadd.f32 %v3871, %v3872
    %v3874 = vrot.slane %v3873, 1
    %v3875 = vadd.f32 %v3873, %v3874
    %v3876 = vmul.f32 %v3820, 0.015625
    %v3877 = vmul.f32 %v3833, 0.015625
    %v3878 = vmul.f32 %v3862, 0.015625
    %v3879 = vmul.f32 %v3875, 0.015625
    %v3880 = vmul.f32 %v3876, %v3876
    %v3881 = vmul.f32 %v3877, %v3877
    %v3882 = vsub.f32 %v3878, %v3880
    %v3883 = vsub.f32 %v3879, %v3881
    %v3884 = vadd.f32 %v3882, 1e-05
    %v3885 = vadd.f32 %v3883, 1e-05
    %v3886 = vrsqrt.pop %v3884
    %v3887 = vrsqrt.pop %v3885
    %v3888 = vsub.f32 %v3792, %v3876
    %v3889 = vsub.f32 %v3793, %v3877
    %v3890 = vsub.f32 %v3794, %v3876
    %v3891 = vsub.f32 %v3795, %v3877
    %v3892 = vsub.f32 %v3796, %v3876
    %v3893 = vsub.f32 %v3797, %v3877
    %v3894 = vsub.f32 %v3798, %v3876
    %v3895 = vsub.f32 %v3799, %v3877
    %v3896 = vsub.f32 %v3800, %v3876
    %v3897 = vsub.f32 %v3801, %v3877
    %v3898 = vsub.f32 %v3802, %v3876
    %v3899 = vsub.f32 %v3803, %v3877
    %v3900 = vsub.f32 %v3804, %v3876
    %v3901 = vsub.f32 %v3805, %v3877
    %v3902 = vsub.f32 %v3806, %v3876
    %v3903 = vsub.f32 %v3807, %v3877
    %v3904 = vmul.f32 %v3888, %v3886
    %v3905 = vmul.f32 %v3889, %v3887
    %v3906 = vmul.f32 %v3890, %v3886
    %v3907 = vmul.f32 %v3891, %v3887
    %v3908 = vmul.f32 %v3892, %v3886
    %v3909 = vmul.f32 %v3893, %v3887
    %v3910 = vmul.f32 %v3894, %v3886
    %v3911 = vmul.f32 %v3895, %v3887
    %v3912 = vmul.f32 %v3896, %v3886
    %v3913 = vmul.f32 %v3897, %v3887
    %v3914 = vmul.f32 %v3898, %v3886
    %v3915 = vmul.f32 %v3899, %v3887
    %v3916 = vmul.f32 %v3900, %v3886
    %v3917 = vmul.f32 %v3901, %v3887
    %v3918 = vmul.f32 %v3902, %v3886
    %v3919 = vmul.f32 %v3903, %v3887
    %s3920 = scalar_lea.vmem %s3, 256
    %v3921 = vld [vmem:[%s3920] sm:$0xff]
    %v3922 = vld [vmem:[%s3920 + $0x8] sm:$0xff]
    %v3923 = vld [vmem:[%s3920 + $0x10] sm:$0xff]
    %v3924 = vld [vmem:[%s3920 + $0x18] sm:$0xff]
    %v3925 = vld [vmem:[%s3920 + $0x20] sm:$0xff]
    %v3926 = vld [vmem:[%s3920 + $0x28] sm:$0xff]
    %v3927 = vld [vmem:[%s3920 + $0x30] sm:$0xff]
    %v3928 = vld [vmem:[%s3920 + $0x38] sm:$0xff]
    %3930 = vset.pattern.permute.xlu0 0
    %3931 = vperm.xlu0 %3930, %v3921
    %v3932 = vpop.permute.xlu0 %3931
    %3935 = vset.pattern.permute.xlu0 0
    %3936 = vperm.xlu0 %3935, %v3922
    %v3937 = vpop.permute.xlu0 %3936
    %3940 = vset.pattern.permute.xlu0 0
    %3941 = vperm.xlu0 %3940, %v3923
    %v3942 = vpop.permute.xlu0 %3941
    %3945 = vset.pattern.permute.xlu0 0
    %3946 = vperm.xlu0 %3945, %v3924
    %v3947 = vpop.permute.xlu0 %3946
    %3950 = vset.pattern.permute.xlu0 0
    %3951 = vperm.xlu0 %3950, %v3925
    %v3952 = vpop.permute.xlu0 %3951
    %3955 = vset.pattern.permute.xlu0 0
    %3956 = vperm.xlu0 %3955, %v3926
    %v3957 = vpop.permute.xlu0 %3956
    %3960 = vset.pattern.permute.xlu0 0
    %3961 = vperm.xlu0 %3960, %v3927
    %v3962 = vpop.permute.xlu0 %3961
    %3965 = vset.pattern.permute.xlu0 0
    %3966 = vperm.xlu0 %3965, %v3928
    %v3967 = vpop.permute.xlu0 %3966
    %v3969 = vmul.f32 %v3904, %v3932
    %v3970 = vmul.f32 %v3905, %v3932
    %v3971 = vmul.f32 %v3906, %v3937
    %v3972 = vmul.f32 %v3907, %v3937
    %v3973 = vmul.f32 %v3908, %v3942
    %v3974 = vmul.f32 %v3909, %v3942
    %v3975 = vmul.f32 %v3910, %v3947
    %v3976 = vmul.f32 %v3911, %v3947
    %v3977 = vmul.f32 %v3912, %v3952
    %v3978 = vmul.f32 %v3913, %v3952
    %v3979 = vmul.f32 %v3914, %v3957
    %v3980 = vmul.f32 %v3915, %v3957
    %v3981 = vmul.f32 %v3916, %v3962
    %v3982 = vmul.f32 %v3917, %v3962
    %v3983 = vmul.f32 %v3918, %v3967
    %v3984 = vmul.f32 %v3919, %v3967
    %s3985 = scalar_lea.vmem %s4, 256
    %v3986 = vld [vmem:[%s3985] sm:$0xff]
    %v3987 = vld [vmem:[%s3985 + $0x8] sm:$0xff]
    %v3988 = vld [vmem:[%s3985 + $0x10] sm:$0xff]
    %v3989 = vld [vmem:[%s3985 + $0x18] sm:$0xff]
    %v3990 = vld [vmem:[%s3985 + $0x20] sm:$0xff]
    %v3991 = vld [vmem:[%s3985 + $0x28] sm:$0xff]
    %v3992 = vld [vmem:[%s3985 + $0x30] sm:$0xff]
    %v3993 = vld [vmem:[%s3985 + $0x38] sm:$0xff]
    %3995 = vset.pattern.permute.xlu0 0
    %3996 = vperm.xlu0 %3995, %v3986
    %v3997 = vpop.permute.xlu0 %3996
    %4000 = vset.pattern.permute.xlu0 0
    %4001 = vperm.xlu0 %4000, %v3987
    %v4002 = vpop.permute.xlu0 %4001
    %4005 = vset.pattern.permute.xlu0 0
    %4006 = vperm.xlu0 %4005, %v3988
    %v4007 = vpop.permute.xlu0 %4006
    %4010 = vset.pattern.permute.xlu0 0
    %4011 = vperm.xlu0 %4010, %v3989
    %v4012 = vpop.permute.xlu0 %4011
    %4015 = vset.pattern.permute.xlu0 0
    %4016 = vperm.xlu0 %4015, %v3990
    %v4017 = vpop.permute.xlu0 %4016
    %4020 = vset.pattern.permute.xlu0 0
    %4021 = vperm.xlu0 %4020, %v3991
    %v4022 = vpop.permute.xlu0 %4021
    %4025 = vset.pattern.permute.xlu0 0
    %4026 = vperm.xlu0 %4025, %v3992
    %v4027 = vpop.permute.xlu0 %4026
    %4030 = vset.pattern.permute.xlu0 0
    %4031 = vperm.xlu0 %4030, %v3993
    %v4032 = vpop.permute.xlu0 %4031
    %v4034 = vadd.f32 %v3969, %v3997
    %v4035 = vadd.f32 %v3970, %v3997
    %v4036 = vadd.f32 %v3971, %v4002
    %v4037 = vadd.f32 %v3972, %v4002
    %v4038 = vadd.f32 %v3973, %v4007
    %v4039 = vadd.f32 %v3974, %v4007
    %v4040 = vadd.f32 %v3975, %v4012
    %v4041 = vadd.f32 %v3976, %v4012
    %v4042 = vadd.f32 %v3977, %v4017
    %v4043 = vadd.f32 %v3978, %v4017
    %v4044 = vadd.f32 %v3979, %v4022
    %v4045 = vadd.f32 %v3980, %v4022
    %v4046 = vadd.f32 %v3981, %v4027
    %v4047 = vadd.f32 %v3982, %v4027
    %v4048 = vadd.f32 %v3983, %v4032
    %v4049 = vadd.f32 %v3984, %v4032
    %s4050 = scalar_lea.vmem %s1, 480
    %v4051 = vld [vmem:[%s4050] sm:$0xf]
    %v4052 = vld [vmem:[%s4050 + $0x4] sm:$0xf]
    %v4053 = vld [vmem:[%s4050 + $0x8] sm:$0xf]
    %v4054 = vld [vmem:[%s4050 + $0xc] sm:$0xf]
    %v4055 = vld [vmem:[%s4050 + $0x10] sm:$0xf]
    %v4056 = vld [vmem:[%s4050 + $0x14] sm:$0xf]
    %v4057 = vld [vmem:[%s4050 + $0x18] sm:$0xf]
    %v4058 = vld [vmem:[%s4050 + $0x1c] sm:$0xf]
    %v4059 = vpack.c.bf16 %v4036, %v4034
    %v4060 = vpack.c.bf16 %v4037, %v4035
    %v4061 = vpack.c.bf16 %v4040, %v4038
    %v4062 = vpack.c.bf16 %v4041, %v4039
    %v4063 = vpack.c.bf16 %v4044, %v4042
    %v4064 = vpack.c.bf16 %v4045, %v4043
    %v4065 = vpack.c.bf16 %v4048, %v4046
    %v4066 = vpack.c.bf16 %v4049, %v4047
    %s4067 = scalar_lea.vmem %s2, 960
    %v4068 = vld [vmem:[%s4067] sm:$0xff]
    %v4069 = vld [vmem:[%s4067 + $0x8] sm:$0xff]
    %v4070 = vld [vmem:[%s4067 + $0x10] sm:$0xff]
    %v4071 = vld [vmem:[%s4067 + $0x18] sm:$0xff]
    %v4072 = vld [vmem:[%s4067 + $0x20] sm:$0xff]
    %v4073 = vld [vmem:[%s4067 + $0x28] sm:$0xff]
    %v4074 = vld [vmem:[%s4067 + $0x30] sm:$0xff]
    %v4075 = vld [vmem:[%s4067 + $0x38] sm:$0xff]
    %4077 = vset.pattern.permute.xlu0 0
    %4078 = vperm.xlu0 %4077, %v4068
    %v4079 = vpop.permute.xlu0 %4078
    %4082 = vset.pattern.permute.xlu0 0
    %4083 = vperm.xlu0 %4082, %v4069
    %v4084 = vpop.permute.xlu0 %4083
    %4087 = vset.pattern.permute.xlu0 0
    %4088 = vperm.xlu0 %4087, %v4070
    %v4089 = vpop.permute.xlu0 %4088
    %4092 = vset.pattern.permute.xlu0 0
    %4093 = vperm.xlu0 %4092, %v4071
    %v4094 = vpop.permute.xlu0 %4093
    %4097 = vset.pattern.permute.xlu0 0
    %4098 = vperm.xlu0 %4097, %v4072
    %v4099 = vpop.permute.xlu0 %4098
    %4102 = vset.pattern.permute.xlu0 0
    %4103 = vperm.xlu0 %4102, %v4073
    %v4104 = vpop.permute.xlu0 %4103
    %4107 = vset.pattern.permute.xlu0 0
    %4108 = vperm.xlu0 %4107, %v4074
    %v4109 = vpop.permute.xlu0 %4108
    %4112 = vset.pattern.permute.xlu0 0
    %4113 = vperm.xlu0 %4112, %v4075
    %v4114 = vpop.permute.xlu0 %4113
    %v4124 = vunpack.c.l.b16 %v4051
    %v4125 = vunpack.c.l.b16 %v4052
    %v4126 = vunpack.c.l.b16 %v4053
    %v4127 = vunpack.c.l.b16 %v4054
    %v4128 = vunpack.c.l.b16 %v4055
    %v4129 = vunpack.c.l.b16 %v4056
    %v4130 = vunpack.c.l.b16 %v4057
    %v4131 = vunpack.c.l.b16 %v4058
    %v4132 = vpack.c.b16 %v4125, %v4124
    %v4133 = vpack.c.b16 %v4127, %v4126
    %v4134 = vpack.c.b16 %v4129, %v4128
    %v4135 = vpack.c.b16 %v4131, %v4130
    %v4137 = vsel %vm122, %v4132, 0
    %v4140 = vsel %vm122, %v4133, 0
    %v4143 = vsel %vm122, %v4134, 0
    %v4146 = vsel %vm122, %v4135, 0
    %4148 = vmatprep.subr.bf16.mxu0 %v4060
    %4149 = vmatpush1.bf16.msra.mxu0 %v4059
    %4150 = vmatprep.subr.bf16.mxu0 %v4062
    %4151 = vmatpush1.bf16.msra.mxu0 %v4061
    %4152 = vmatprep.subr.bf16.mxu0 %v4064
    %4153 = vmatpush1.bf16.msra.mxu0 %v4063
    %4154 = vmatprep.subr.bf16.mxu0 %v4066
    %4155 = vmatpush1.bf16.msra.mxu0 %v4065
    %4156 = vmatprep.subr.bf16.mxu0 0
    %4157 = vmatpush1.bf16.msra.mxu0 0
    %4158 = vmatprep.subr.bf16.mxu0 0
    %4159 = vmatpush1.bf16.msra.mxu0 0
    %4160 = vmatprep.subr.bf16.mxu0 0
    %4161 = vmatpush1.bf16.msra.mxu0 0
    %4162 = vmatprep.subr.bf16.mxu0 0
    %4163 = vmatpush1.bf16.msra.mxu0 0
    %4164 = vmatprep.subr.bf16.mxu0 0
    %4165 = vmatpush1.bf16.msra.mxu0 0
    %4166 = vmatprep.subr.bf16.mxu0 0
    %4167 = vmatpush1.bf16.msra.mxu0 0
    %4168 = vmatprep.subr.bf16.mxu0 0
    %4169 = vmatpush1.bf16.msra.mxu0 0
    %4170 = vmatprep.subr.bf16.mxu0 0
    %4171 = vmatpush1.bf16.msra.mxu0 0
    %4172 = vmatprep.subr.bf16.mxu0 0
    %4173 = vmatpush1.bf16.msra.mxu0 0
    %4174 = vmatprep.subr.bf16.mxu0 0
    %4175 = vmatpush1.bf16.msra.mxu0 0
    %4176 = vmatprep.subr.bf16.mxu0 0
    %4177 = vmatpush1.bf16.msra.mxu0 0
    %4178 = vmatprep.subr.bf16.mxu0 0
    %4179 = vmatpush1.bf16.msra.mxu0 0
    %4180 = vmatprep.mubr.bf16.mxu0 0
    %4181 = vmatmul.mubr.bf16.gmra.mrb[0].mxu0 %v4137
    %v4182 = vpop.f32.mrb[0].mxu0
    %v4183 = vadd.f32 %v4079, %v4182
    %v4184 = vpop.f32.mrb[0].mxu0
    %v4185 = vadd.f32 %v4079, %v4184
    %v4186 = vpop.f32.mrb[0].mxu0
    %v4187 = vadd.f32 %v4084, %v4186
    %v4188 = vpop.f32.mrb[0].mxu0
    %v4189 = vadd.f32 %v4084, %v4188
    %4190 = vmatprep.mubr.bf16.mxu0 0
    %4191 = vmatmul.mubr.bf16.gmra.mrb[0].mxu0 %v4140
    %v4192 = vpop.f32.mrb[0].mxu0
    %v4193 = vadd.f32 %v4089, %v4192
    %v4194 = vpop.f32.mrb[0].mxu0
    %v4195 = vadd.f32 %v4089, %v4194
    %v4196 = vpop.f32.mrb[0].mxu0
    %v4197 = vadd.f32 %v4094, %v4196
    %v4198 = vpop.f32.mrb[0].mxu0
    %v4199 = vadd.f32 %v4094, %v4198
    %4200 = vmatprep.mubr.bf16.mxu0 0
    %4201 = vmatmul.mubr.bf16.gmra.mrb[0].mxu0 %v4143
    %v4202 = vpop.f32.mrb[0].mxu0
    %v4203 = vadd.f32 %v4099, %v4202
    %v4204 = vpop.f32.mrb[0].mxu0
    %v4205 = vadd.f32 %v4099, %v4204
    %v4206 = vpop.f32.mrb[0].mxu0
    %v4207 = vadd.f32 %v4104, %v4206
    %v4208 = vpop.f32.mrb[0].mxu0
    %v4209 = vadd.f32 %v4104, %v4208
    %4210 = vmatprep.mubr.bf16.mxu0 0
    %4211 = vmatmul.mubr.bf16.gmra.mrb[0].mxu0 %v4146
    %v4212 = vpop.f32.mrb[0].mxu0
    %v4213 = vadd.f32 %v4109, %v4212
    %v4214 = vpop.f32.mrb[0].mxu0
    %v4215 = vadd.f32 %v4109, %v4214
    %v4216 = vpop.f32.mrb[0].mxu0
    %v4217 = vadd.f32 %v4114, %v4216
    %v4218 = vpop.f32.mrb[0].mxu0
    %v4219 = vadd.f32 %v4114, %v4218
    %4220 = vdwg.mxu0
    %v4221 = vmax.f32 %v4183, 0.0
    %v4222 = vmax.f32 %v4185, 0.0
    %v4223 = vmax.f32 %v4187, 0.0
    %v4224 = vmax.f32 %v4189, 0.0
    %v4225 = vmax.f32 %v4193, 0.0
    %v4226 = vmax.f32 %v4195, 0.0
    %v4227 = vmax.f32 %v4197, 0.0
    %v4228 = vmax.f32 %v4199, 0.0
    %v4229 = vmax.f32 %v4203, 0.0
    %v4230 = vmax.f32 %v4205, 0.0
    %v4231 = vmax.f32 %v4207, 0.0
    %v4232 = vmax.f32 %v4209, 0.0
    %v4233 = vmax.f32 %v4213, 0.0
    %v4234 = vmax.f32 %v4215, 0.0
    %v4235 = vmax.f32 %v4217, 0.0
    %v4236 = vmax.f32 %v4219, 0.0
    %s4237 = scalar_lea.vmem %s1, 512
    %v4238 = vld [vmem:[%s4237] sm:$0xf]
    %v4239 = vld [vmem:[%s4237 + $0x4] sm:$0xf]
    %v4240 = vld [vmem:[%s4237 + $0x8] sm:$0xf]
    %v4241 = vld [vmem:[%s4237 + $0xc] sm:$0xf]
    %v4242 = vld [vmem:[%s4237 + $0x10] sm:$0xf]
    %v4243 = vld [vmem:[%s4237 + $0x14] sm:$0xf]
    %v4244 = vld [vmem:[%s4237 + $0x18] sm:$0xf]
    %v4245 = vld [vmem:[%s4237 + $0x1c] sm:$0xf]
    %v4246 = vpack.c.bf16 %v4223, %v4221
    %v4247 = vpack.c.bf16 %v4224, %v4222
    %v4248 = vpack.c.bf16 %v4227, %v4225
    %v4249 = vpack.c.bf16 %v4228, %v4226
    %v4250 = vpack.c.bf16 %v4231, %v4229
    %v4251 = vpack.c.bf16 %v4232, %v4230
    %v4252 = vpack.c.bf16 %v4235, %v4233
    %v4253 = vpack.c.bf16 %v4236, %v4234
    %s4254 = scalar_lea.vmem %s2, 1024
    %v4255 = vld [vmem:[%s4254] sm:$0xff]
    %v4256 = vld [vmem:[%s4254 + $0x8] sm:$0xff]
    %v4257 = vld [vmem:[%s4254 + $0x10] sm:$0xff]
    %v4258 = vld [vmem:[%s4254 + $0x18] sm:$0xff]
    %v4259 = vld [vmem:[%s4254 + $0x20] sm:$0xff]
    %v4260 = vld [vmem:[%s4254 + $0x28] sm:$0xff]
    %v4261 = vld [vmem:[%s4254 + $0x30] sm:$0xff]
    %v4262 = vld [vmem:[%s4254 + $0x38] sm:$0xff]
    %4264 = vset.pattern.permute.xlu0 0
    %4265 = vperm.xlu0 %4264, %v4255
    %v4266 = vpop.permute.xlu0 %4265
    %4269 = vset.pattern.permute.xlu0 0
    %4270 = vperm.xlu0 %4269, %v4256
    %v4271 = vpop.permute.xlu0 %4270
    %4274 = vset.pattern.permute.xlu0 0
    %4275 = vperm.xlu0 %4274, %v4257
    %v4276 = vpop.permute.xlu0 %4275
    %4279 = vset.pattern.permute.xlu0 0
    %4280 = vperm.xlu0 %4279, %v4258
    %v4281 = vpop.permute.xlu0 %4280
    %4284 = vset.pattern.permute.xlu0 0
    %4285 = vperm.xlu0 %4284, %v4259
    %v4286 = vpop.permute.xlu0 %4285
    %4289 = vset.pattern.permute.xlu0 0
    %4290 = vperm.xlu0 %4289, %v4260
    %v4291 = vpop.permute.xlu0 %4290
    %4294 = vset.pattern.permute.xlu0 0
    %4295 = vperm.xlu0 %4294, %v4261
    %v4296 = vpop.permute.xlu0 %4295
    %4299 = vset.pattern.permute.xlu0 0
    %4300 = vperm.xlu0 %4299, %v4262
    %v4301 = vpop.permute.xlu0 %4300
    %v4311 = vunpack.c.l.b16 %v4238
    %v4312 = vunpack.c.l.b16 %v4239
    %v4313 = vunpack.c.l.b16 %v4240
    %v4314 = vunpack.c.l.b16 %v4241
    %v4315 = vunpack.c.l.b16 %v4242
    %v4316 = vunpack.c.l.b16 %v4243
    %v4317 = vunpack.c.l.b16 %v4244
    %v4318 = vunpack.c.l.b16 %v4245
    %v4319 = vpack.c.b16 %v4312, %v4311
    %v4320 = vpack.c.b16 %v4314, %v4313
    %v4321 = vpack.c.b16 %v4316, %v4315
    %v4322 = vpack.c.b16 %v4318, %v4317
    %v4324 = vsel %vm122, %v4319, 0
    %v4327 = vsel %vm122, %v4320, 0
    %v4330 = vsel %vm122, %v4321, 0
    %v4333 = vsel %vm122, %v4322, 0
    %4335 = vmatprep.subr.bf16.mxu0 %v4247
    %4336 = vmatpush1.bf16.msra.mxu0 %v4246
    %4337 = vmatprep.subr.bf16.mxu0 %v4249
    %4338 = vmatpush1.bf16.msra.mxu0 %v4248
    %4339 = vmatprep.subr.bf16.mxu0 %v4251
    %4340 = vmatpush1.bf16.msra.mxu0 %v4250
    %4341 = vmatprep.subr.bf16.mxu0 %v4253
    %4342 = vmatpush1.bf16.msra.mxu0 %v4252
    %4343 = vmatprep.subr.bf16.mxu0 0
    %4344 = vmatpush1.bf16.msra.mxu0 0
    %4345 = vmatprep.subr.bf16.mxu0 0
    %4346 = vmatpush1.bf16.msra.mxu0 0
    %4347 = vmatprep.subr.bf16.mxu0 0
    %4348 = vmatpush1.bf16.msra.mxu0 0
    %4349 = vmatprep.subr.bf16.mxu0 0
    %4350 = vmatpush1.bf16.msra.mxu0 0
    %4351 = vmatprep.subr.bf16.mxu0 0
    %4352 = vmatpush1.bf16.msra.mxu0 0
    %4353 = vmatprep.subr.bf16.mxu0 0
    %4354 = vmatpush1.bf16.msra.mxu0 0
    %4355 = vmatprep.subr.bf16.mxu0 0
    %4356 = vmatpush1.bf16.msra.mxu0 0
    %4357 = vmatprep.subr.bf16.mxu0 0
    %4358 = vmatpush1.bf16.msra.mxu0 0
    %4359 = vmatprep.subr.bf16.mxu0 0
    %4360 = vmatpush1.bf16.msra.mxu0 0
    %4361 = vmatprep.subr.bf16.mxu0 0
    %4362 = vmatpush1.bf16.msra.mxu0 0
    %4363 = vmatprep.subr.bf16.mxu0 0
    %4364 = vmatpush1.bf16.msra.mxu0 0
    %4365 = vmatprep.subr.bf16.mxu0 0
    %4366 = vmatpush1.bf16.msra.mxu0 0
    %4367 = vmatprep.mubr.bf16.mxu0 0
    %4368 = vmatmul.mubr.bf16.gmra.mrb[0].mxu0 %v4324
    %v4369 = vpop.f32.mrb[0].mxu0
    %v4370 = vadd.f32 %v4266, %v4369
    %v4371 = vpop.f32.mrb[0].mxu0
    %v4372 = vadd.f32 %v4266, %v4371
    %v4373 = vpop.f32.mrb[0].mxu0
    %v4374 = vadd.f32 %v4271, %v4373
    %v4375 = vpop.f32.mrb[0].mxu0
    %v4376 = vadd.f32 %v4271, %v4375
    %4377 = vmatprep.mubr.bf16.mxu0 0
    %4378 = vmatmul.mubr.bf16.gmra.mrb[0].mxu0 %v4327
    %v4379 = vpop.f32.mrb[0].mxu0
    %v4380 = vadd.f32 %v4276, %v4379
    %v4381 = vpop.f32.mrb[0].mxu0
    %v4382 = vadd.f32 %v4276, %v4381
    %v4383 = vpop.f32.mrb[0].mxu0
    %v4384 = vadd.f32 %v4281, %v4383
    %v4385 = vpop.f32.mrb[0].mxu0
    %v4386 = vadd.f32 %v4281, %v4385
    %4387 = vmatprep.mubr.bf16.mxu0 0
    %4388 = vmatmul.mubr.bf16.gmra.mrb[0].mxu0 %v4330
    %v4389 = vpop.f32.mrb[0].mxu0
    %v4390 = vadd.f32 %v4286, %v4389
    %v4391 = vpop.f32.mrb[0].mxu0
    %v4392 = vadd.f32 %v4286, %v4391
    %v4393 = vpop.f32.mrb[0].mxu0
    %v4394 = vadd.f32 %v4291, %v4393
    %v4395 = vpop.f32.mrb[0].mxu0
    %v4396 = vadd.f32 %v4291, %v4395
    %4397 = vmatprep.mubr.bf16.mxu0 0
    %4398 = vmatmul.mubr.bf16.gmra.mrb[0].mxu0 %v4333
    %v4399 = vpop.f32.mrb[0].mxu0
    %v4400 = vadd.f32 %v4296, %v4399
    %v4401 = vpop.f32.mrb[0].mxu0
    %v4402 = vadd.f32 %v4296, %v4401
    %v4403 = vpop.f32.mrb[0].mxu0
    %v4404 = vadd.f32 %v4301, %v4403
    %v4405 = vpop.f32.mrb[0].mxu0
    %v4406 = vadd.f32 %v4301, %v4405
    %4407 = vdwg.mxu0
    %v4408 = vmax.f32 %v4370, 0.0
    %v4409 = vmax.f32 %v4372, 0.0
    %v4410 = vmax.f32 %v4374, 0.0
    %v4411 = vmax.f32 %v4376, 0.0
    %v4412 = vmax.f32 %v4380, 0.0
    %v4413 = vmax.f32 %v4382, 0.0
    %v4414 = vmax.f32 %v4384, 0.0
    %v4415 = vmax.f32 %v4386, 0.0
    %v4416 = vmax.f32 %v4390, 0.0
    %v4417 = vmax.f32 %v4392, 0.0
    %v4418 = vmax.f32 %v4394, 0.0
    %v4419 = vmax.f32 %v4396, 0.0
    %v4420 = vmax.f32 %v4400, 0.0
    %v4421 = vmax.f32 %v4402, 0.0
    %v4422 = vmax.f32 %v4404, 0.0
    %v4423 = vmax.f32 %v4406, 0.0
    %s4424 = scalar_lea.vmem %s1, 544
    %v4425 = vld [vmem:[%s4424] sm:$0xf]
    %v4426 = vld [vmem:[%s4424 + $0x4] sm:$0xf]
    %v4427 = vld [vmem:[%s4424 + $0x8] sm:$0xf]
    %v4428 = vld [vmem:[%s4424 + $0xc] sm:$0xf]
    %v4429 = vld [vmem:[%s4424 + $0x10] sm:$0xf]
    %v4430 = vld [vmem:[%s4424 + $0x14] sm:$0xf]
    %v4431 = vld [vmem:[%s4424 + $0x18] sm:$0xf]
    %v4432 = vld [vmem:[%s4424 + $0x1c] sm:$0xf]
    %v4433 = vpack.c.bf16 %v4410, %v4408
    %v4434 = vpack.c.bf16 %v4411, %v4409
    %v4435 = vpack.c.bf16 %v4414, %v4412
    %v4436 = vpack.c.bf16 %v4415, %v4413
    %v4437 = vpack.c.bf16 %v4418, %v4416
    %v4438 = vpack.c.bf16 %v4419, %v4417
    %v4439 = vpack.c.bf16 %v4422, %v4420
    %v4440 = vpack.c.bf16 %v4423, %v4421
    %s4441 = scalar_lea.vmem %s2, 1088
    %v4442 = vld [vmem:[%s4441] sm:$0xff]
    %v4443 = vld [vmem:[%s4441 + $0x8] sm:$0xff]
    %v4444 = vld [vmem:[%s4441 + $0x10] sm:$0xff]
    %v4445 = vld [vmem:[%s4441 + $0x18] sm:$0xff]
    %v4446 = vld [vmem:[%s4441 + $0x20] sm:$0xff]
    %v4447 = vld [vmem:[%s4441 + $0x28] sm:$0xff]
    %v4448 = vld [vmem:[%s4441 + $0x30] sm:$0xff]
    %v4449 = vld [vmem:[%s4441 + $0x38] sm:$0xff]
    %4451 = vset.pattern.permute.xlu0 0
    %4452 = vperm.xlu0 %4451, %v4442
    %v4453 = vpop.permute.xlu0 %4452
    %4456 = vset.pattern.permute.xlu0 0
    %4457 = vperm.xlu0 %4456, %v4443
    %v4458 = vpop.permute.xlu0 %4457
    %4461 = vset.pattern.permute.xlu0 0
    %4462 = vperm.xlu0 %4461, %v4444
    %v4463 = vpop.permute.xlu0 %4462
    %4466 = vset.pattern.permute.xlu0 0
    %4467 = vperm.xlu0 %4466, %v4445
    %v4468 = vpop.permute.xlu0 %4467
    %4471 = vset.pattern.permute.xlu0 0
    %4472 = vperm.xlu0 %4471, %v4446
    %v4473 = vpop.permute.xlu0 %4472
    %4476 = vset.pattern.permute.xlu0 0
    %4477 = vperm.xlu0 %4476, %v4447
    %v4478 = vpop.permute.xlu0 %4477
    %4481 = vset.pattern.permute.xlu0 0
    %4482 = vperm.xlu0 %4481, %v4448
    %v4483 = vpop.permute.xlu0 %4482
    %4486 = vset.pattern.permute.xlu0 0
    %4487 = vperm.xlu0 %4486, %v4449
    %v4488 = vpop.permute.xlu0 %4487
    %v4498 = vunpack.c.l.b16 %v4425
    %v4499 = vunpack.c.l.b16 %v4426
    %v4500 = vunpack.c.l.b16 %v4427
    %v4501 = vunpack.c.l.b16 %v4428
    %v4502 = vunpack.c.l.b16 %v4429
    %v4503 = vunpack.c.l.b16 %v4430
    %v4504 = vunpack.c.l.b16 %v4431
    %v4505 = vunpack.c.l.b16 %v4432
    %v4506 = vpack.c.b16 %v4499, %v4498
    %v4507 = vpack.c.b16 %v4501, %v4500
    %v4508 = vpack.c.b16 %v4503, %v4502
    %v4509 = vpack.c.b16 %v4505, %v4504
    %v4511 = vsel %vm122, %v4506, 0
    %v4514 = vsel %vm122, %v4507, 0
    %v4517 = vsel %vm122, %v4508, 0
    %v4520 = vsel %vm122, %v4509, 0
    %4522 = vmatprep.subr.bf16.mxu0 %v4434
    %4523 = vmatpush1.bf16.msra.mxu0 %v4433
    %4524 = vmatprep.subr.bf16.mxu0 %v4436
    %4525 = vmatpush1.bf16.msra.mxu0 %v4435
    %4526 = vmatprep.subr.bf16.mxu0 %v4438
    %4527 = vmatpush1.bf16.msra.mxu0 %v4437
    %4528 = vmatprep.subr.bf16.mxu0 %v4440
    %4529 = vmatpush1.bf16.msra.mxu0 %v4439
    %4530 = vmatprep.subr.bf16.mxu0 0
    %4531 = vmatpush1.bf16.msra.mxu0 0
    %4532 = vmatprep.subr.bf16.mxu0 0
    %4533 = vmatpush1.bf16.msra.mxu0 0
    %4534 = vmatprep.subr.bf16.mxu0 0
    %4535 = vmatpush1.bf16.msra.mxu0 0
    %4536 = vmatprep.subr.bf16.mxu0 0
    %4537 = vmatpush1.bf16.msra.mxu0 0
    %4538 = vmatprep.subr.bf16.mxu0 0
    %4539 = vmatpush1.bf16.msra.mxu0 0
    %4540 = vmatprep.subr.bf16.mxu0 0
    %4541 = vmatpush1.bf16.msra.mxu0 0
    %4542 = vmatprep.subr.bf16.mxu0 0
    %4543 = vmatpush1.bf16.msra.mxu0 0
    %4544 = vmatprep.subr.bf16.mxu0 0
    %4545 = vmatpush1.bf16.msra.mxu0 0
    %4546 = vmatprep.subr.bf16.mxu0 0
    %4547 = vmatpush1.bf16.msra.mxu0 0
    %4548 = vmatprep.subr.bf16.mxu0 0
    %4549 = vmatpush1.bf16.msra.mxu0 0
    %4550 = vmatprep.subr.bf16.mxu0 0
    %4551 = vmatpush1.bf16.msra.mxu0 0
    %4552 = vmatprep.subr.bf16.mxu0 0
    %4553 = vmatpush1.bf16.msra.mxu0 0
    %4554 = vmatprep.mubr.bf16.mxu0 0
    %4555 = vmatmul.mubr.bf16.gmra.mrb[0].mxu0 %v4511
    %v4556 = vpop.f32.mrb[0].mxu0
    %v4557 = vadd.f32 %v4453, %v4556
    %v4558 = vpop.f32.mrb[0].mxu0
    %v4559 = vadd.f32 %v4453, %v4558
    %v4560 = vpop.f32.mrb[0].mxu0
    %v4561 = vadd.f32 %v4458, %v4560
    %v4562 = vpop.f32.mrb[0].mxu0
    %v4563 = vadd.f32 %v4458, %v4562
    %4564 = vmatprep.mubr.bf16.mxu0 0
    %4565 = vmatmul.mubr.bf16.gmra.mrb[0].mxu0 %v4514
    %v4566 = vpop.f32.mrb[0].mxu0
    %v4567 = vadd.f32 %v4463, %v4566
    %v4568 = vpop.f32.mrb[0].mxu0
    %v4569 = vadd.f32 %v4463, %v4568
    %v4570 = vpop.f32.mrb[0].mxu0
    %v4571 = vadd.f32 %v4468, %v4570
    %v4572 = vpop.f32.mrb[0].mxu0
    %v4573 = vadd.f32 %v4468, %v4572
    %4574 = vmatprep.mubr.bf16.mxu0 0
    %4575 = vmatmul.mubr.bf16.gmra.mrb[0].mxu0 %v4517
    %v4576 = vpop.f32.mrb[0].mxu0
    %v4577 = vadd.f32 %v4473, %v4576
    %v4578 = vpop.f32.mrb[0].mxu0
    %v4579 = vadd.f32 %v4473, %v4578
    %v4580 = vpop.f32.mrb[0].mxu0
    %v4581 = vadd.f32 %v4478, %v4580
    %v4582 = vpop.f32.mrb[0].mxu0
    %v4583 = vadd.f32 %v4478, %v4582
    %4584 = vmatprep.mubr.bf16.mxu0 0
    %4585 = vmatmul.mubr.bf16.gmra.mrb[0].mxu0 %v4520
    %v4586 = vpop.f32.mrb[0].mxu0
    %v4587 = vadd.f32 %v4483, %v4586
    %v4588 = vpop.f32.mrb[0].mxu0
    %v4589 = vadd.f32 %v4483, %v4588
    %v4590 = vpop.f32.mrb[0].mxu0
    %v4591 = vadd.f32 %v4488, %v4590
    %v4592 = vpop.f32.mrb[0].mxu0
    %v4593 = vadd.f32 %v4488, %v4592
    %4594 = vdwg.mxu0
    %v4595 = vadd.f32 %v4557, %v4034
    %v4596 = vadd.f32 %v4559, %v4035
    %v4597 = vadd.f32 %v4561, %v4036
    %v4598 = vadd.f32 %v4563, %v4037
    %v4599 = vadd.f32 %v4567, %v4038
    %v4600 = vadd.f32 %v4569, %v4039
    %v4601 = vadd.f32 %v4571, %v4040
    %v4602 = vadd.f32 %v4573, %v4041
    %v4603 = vadd.f32 %v4577, %v4042
    %v4604 = vadd.f32 %v4579, %v4043
    %v4605 = vadd.f32 %v4581, %v4044
    %v4606 = vadd.f32 %v4583, %v4045
    %v4607 = vadd.f32 %v4587, %v4046
    %v4608 = vadd.f32 %v4589, %v4047
    %v4609 = vadd.f32 %v4591, %v4048
    %v4610 = vadd.f32 %v4593, %v4049
    %4611 = vst [vmem:[#allocation2] sm:$0xff] %v4595
    %4612 = vst [vmem:[#allocation2 + $0x8] sm:$0xff] %v4596
    %4613 = vst [vmem:[#allocation2 + $0x10] sm:$0xff] %v4597
    %4614 = vst [vmem:[#allocation2 + $0x18] sm:$0xff] %v4598
    %4615 = vst [vmem:[#allocation2 + $0x20] sm:$0xff] %v4599
    %4616 = vst [vmem:[#allocation2 + $0x28] sm:$0xff] %v4600
    %4617 = vst [vmem:[#allocation2 + $0x30] sm:$0xff] %v4601
    %4618 = vst [vmem:[#allocation2 + $0x38] sm:$0xff] %v4602
    %4619 = vst [vmem:[#allocation2 + $0x40] sm:$0xff] %v4603
    %4620 = vst [vmem:[#allocation2 + $0x48] sm:$0xff] %v4604
    %4621 = vst [vmem:[#allocation2 + $0x50] sm:$0xff] %v4605
    %4622 = vst [vmem:[#allocation2 + $0x58] sm:$0xff] %v4606
    %4623 = vst [vmem:[#allocation2 + $0x60] sm:$0xff] %v4607
    %4624 = vst [vmem:[#allocation2 + $0x68] sm:$0xff] %v4608
    %4625 = vst [vmem:[#allocation2 + $0x70] sm:$0xff] %v4609
    %4626 = vst [vmem:[#allocation2 + $0x78] sm:$0xff] %v4610
    // Predicated region
    $region22: #{bignet_forward.1} parent=1 // pred_check
      _
    $region23: #{bignet_forward.1} parent=1 // pred_check_branch
      %4628 = sbr.rel (0) target = $region25
    $region24: #{bignet_forward.1} parent=1 // pred_region
      %s4630 = ssub.s32 2048, 2048
      %4631 = vsyncadd [#allocation3], %s4630
      %s4632 = sshll.u32 [#allocation2], 4
      %s4633 = int_to_ptr.vmem [resolvable:$true] %s4632
      %4638 = dma.vmem_to_hbm [thread:$0]  %s4633, 2048, %s5, [#allocation3], 256, 256, 16
    $region25: #{bignet_forward.1} parent=1 // pred_fallthru
      _
    // Predicated region
    $region26: #{bignet_forward.1} parent=1 // pred_check
      _
    $region27: #{bignet_forward.1} parent=1 // pred_check_branch
      %4640 = sbr.rel (0) target = $region29
    $region28: #{bignet_forward.1} parent=1 // pred_region
      %4641 = dma.done [#allocation3], 2048
    $region29: #{bignet_forward.1} parent=1 // pred_fallthru
      _
    %4642 = vsyncpa [#allocation3], 1

</llo_original>
